<compile_context>
chip_gen: v7x
topology: tpu7x:2x2x1
jax: 0.10.0
libtpu: 0.0.40
codegen_flags: <defaults>
</compile_context>

<pallas_src>
import functools

import jax
import jax.numpy as jnp
import numpy as np
from jax.experimental import pallas as pl
from jax.experimental.pallas import tpu as pltpu

_LANE_PAD = 128  # aligned zero padding on each side of the frame (lane axis)


# ----------------------------------------------------------------------------
# Fused Pallas kernel (one sample per grid step)
# ----------------------------------------------------------------------------
def spade_block_kernel(*refs, H, W, Pp, fin, nhidden, learned_shortcut, eps):
    if learned_shortcut:
        (mask_ref, x_ref, seg_ref,
         w_sh, b_sh, w_gb0, b_gb0, w_gbs, b_gbs,
         w_0, b_0, w_s, out_ref) = refs
    else:
        (mask_ref, x_ref, seg_ref,
         w_sh, b_sh, w_gb0, b_gb0,
         w_0, b_0, out_ref) = refs

    R_pad = x_ref.shape[2]

    mask = mask_ref[...]          # (1, R_pad) f32; 1 on interior pixels, 0 elsewhere
    x = x_ref[0]                  # (fin, R_pad) f32, zero border ring + zero tail
    seg = seg_ref[0]              # (lc_pad, R_pad) f32, zero border ring + zero tail

    # ---- InstanceNorm2d (affine=False), f32, biased variance ---------------
    cnt = jnp.float32(H * W)
    mean = jnp.sum(x, axis=1, keepdims=True) / cnt          # padding is zero
    var = jnp.sum(x * x, axis=1, keepdims=True) / cnt - mean * mean
    var = jnp.maximum(var, 0.0)                              # guard cancellation
    normalized = (x - mean) * jax.lax.rsqrt(var + eps)       # (fin, R_pad)

    # tap offsets in flattened frame coordinates (dh outer, dw inner)
    offs = [(dh - 1) * Pp + (dw - 1) for dh in range(3) for dw in range(3)]

    def im2col(frame):
        """(cin, R_pad) f32 frame -> (9*cin, R_pad) bf16 im2col buffer (VMEM only)."""
        cin = frame.shape[0]
        zp = jnp.zeros((cin, _LANE_PAD), jnp.float32)
        fe = jnp.concatenate([zp, frame, zp], axis=1)        # aligned lane concat
        cols = jnp.concatenate(
            [fe[:, _LANE_PAD + off:_LANE_PAD + off + R_pad] for off in offs],
            axis=0)                                          # aligned sublane concat
        return cols.astype(jnp.bfloat16)                     # single cast per conv

    def conv(cols, w_ref, b_ref):
        # one MXU matmul per conv: (cout, 9*cin) @ (9*cin, R_pad) -> (cout, R_pad)
        return jnp.dot(w_ref[...], cols,
                       preferred_element_type=jnp.float32) + b_ref[...]

    # mlp_shared for both SPADE layers in ONE matmul (cout rows stacked)
    actv = jnp.maximum(conv(im2col(seg), w_sh, b_sh), 0.0) * mask

    def modulate(a, w_gb, b_gb, leaky):
        gb = conv(im2col(a), w_gb, b_gb)                     # gamma rows then beta rows
        h = normalized * (1.0 + gb[:fin]) + gb[fin:]         # SPADE modulation (f32)
        if leaky:
            h = jnp.where(h >= 0.0, h, 0.2 * h)              # F.leaky_relu(., 0.2)
        return h * mask                                      # re-zero pad ring

    if learned_shortcut:
        # shortcut branch first -> write out_ref, free its intermediates early
        hs = modulate(actv[nhidden:], w_gbs, b_gbs, leaky=False)
        out_ref[0] = jnp.dot(w_s[...], hs.astype(jnp.bfloat16),
                             preferred_element_type=jnp.float32)  # 1x1 conv, no bias
        h0 = modulate(actv[:nhidden], w_gb0, b_gb0, leaky=True)
    else:
        out_ref[0] = x                                       # identity (fin == fout)
        h0 = modulate(actv, w_gb0, b_gb0, leaky=True)

    # main branch: conv_0(leaky_relu(SPADE_0(x, seg))) accumulated into out
    out_ref[0] = out_ref[0] + conv(im2col(h0), w_0, b_0)


# ----------------------------------------------------------------------------
# Glue: nearest resize, frame building, weight packing
# ----------------------------------------------------------------------------
def _round_up(v, m):
    return ((v + m - 1) // m) * m


def nearest_resize_nchw(seg, H, W):
    # Matches F.interpolate(mode="nearest"): src = floor(dst * in / out).
    N, C, h, w = seg.shape
    if (h, w) == (H, W):
        return seg
    rows = (jnp.arange(H) * h // H).astype(jnp.int32)
    cols = (jnp.arange(W) * w // W).astype(jnp.int32)
    return seg[:, :, rows][:, :, :, cols]


def _pack_conv3x3(w, cin_pad=None):
    # (3,3,cin,cout) HWIO f32 -> (cout, 9*cin[_pad]) bf16, tap-major / channel-minor.
    kh, kw, cin, cout = w.shape
    wk = jnp.transpose(w, (3, 0, 1, 2)).reshape(cout, kh * kw, cin)
    if cin_pad is not None and cin_pad > cin:
        wk = jnp.pad(wk, ((0, 0), (0, 0), (0, cin_pad - cin)))
    return wk.reshape(cout, -1).astype(jnp.bfloat16)


def spade_resnet_block_forward(x_nchw, seg_nchw, params):
    """NCHW in / NCHW out (PyTorch convention); internal layout (C, R_pad)."""
    fin, fout = params["fin"], params["fout"]
    fmiddle = params["fmiddle"]
    label_nc = params["label_nc"]
    nhidden = params["nhidden"]
    ls = params["learned_shortcut"]
    ref = params["ref"]

    x = x_nchw.astype(jnp.float32)
    N, _, H, W = x.shape
    seg = nearest_resize_nchw(seg_nchw.astype(jnp.float32), H, W)

    Pp, Qp = W + 2, H + 2
    R = Qp * Pp
    R_pad = _round_up(R, 128)                 # lane-dense frames & output
    lc_pad = _round_up(label_nc, 8)           # sublane-aligned seg channels

    def make_frame(a, c_pad):
        n_, c, _, _ = a.shape
        f = jnp.pad(a, ((0, 0), (0, c_pad - c), (1, 1), (1, 1)))
        f = f.reshape(n_, c_pad, R)
        return jnp.pad(f, ((0, 0), (0, 0), (0, R_pad - R)))

    x_f = make_frame(x, fin)                  # (N, fin, R_pad)
    seg_f = make_frame(seg, lc_pad)           # (N, lc_pad, R_pad)

    # interior mask (lane-dense, resident, loaded once)
    q = jnp.arange(R_pad) // Pp
    p = jnp.arange(R_pad) % Pp
    mask = (((q >= 1) & (q <= H) & (p >= 1) & (p <= W))
            .astype(jnp.float32).reshape(1, R_pad))

    # ---- pack weights (stack cout where inputs are shared) ------------------
    n0 = ref["norm_0"]
    if ls:
        ns = ref["norm_s"]
        w_sh = jnp.concatenate([_pack_conv3x3(n0["w_sh"], lc_pad),
                                _pack_conv3x3(ns["w_sh"], lc_pad)], axis=0)
        b_sh = jnp.concatenate([n0["b_sh"], ns["b_sh"]]).reshape(-1, 1).astype(jnp.float32)
    else:
        w_sh = _pack_conv3x3(n0["w_sh"], lc_pad)
        b_sh = n0["b_sh"].reshape(-1, 1).astype(jnp.float32)

    def pack_gb(pr):
        w = jnp.concatenate([_pack_conv3x3(pr["w_g"]), _pack_conv3x3(pr["w_b"])], axis=0)
        b = jnp.concatenate([pr["b_g"], pr["b_b"]]).reshape(-1, 1).astype(jnp.float32)
        return w, b

    w_gb0, b_gb0 = pack_gb(n0)
    w_0 = _pack_conv3x3(ref["w_0"])
    b_0 = ref["b_0"].reshape(-1, 1).astype(jnp.float32)

    operands = [mask, x_f, seg_f, w_sh, b_sh, w_gb0, b_gb0]
    if ls:
        w_gbs, b_gbs = pack_gb(ns)
        w_s = jnp.transpose(ref["w_s"]).astype(jnp.bfloat16)   # (fout, fin)
        operands += [w_gbs, b_gbs, w_0, b_0, w_s]
    else:
        operands += [w_0, b_0]

    def resident_spec(a):
        nd = a.ndim
        return pl.BlockSpec(a.shape, lambda n, _nd=nd: (0,) * _nd)

    in_specs = [resident_spec(mask),
                pl.BlockSpec((1, fin, R_pad), lambda n: (n, 0, 0)),
                pl.BlockSpec((1, lc_pad, R_pad), lambda n: (n, 0, 0))]
    in_specs += [resident_spec(a) for a in operands[3:]]

    # advisory cost estimate so XLA schedules neighbors around the kernel
    nb = 2 if ls else 1
    flops = 2 * N * R_pad * (nb * 9 * lc_pad * nhidden
                             + nb * 9 * nhidden * 2 * fin
                             + 9 * fin * fmiddle
                             + (fin * fout if ls else 0))
    bytes_accessed = sum(int(a.size) * a.dtype.itemsize for a in operands)
    bytes_accessed += N * fout * R_pad * 4
    cost = pl.CostEstimate(flops=int(flops), transcendentals=int(N * fin),
                           bytes_accessed=int(bytes_accessed))

    kernel = functools.partial(
        spade_block_kernel, H=H, W=W, Pp=Pp, fin=fin, nhidden=nhidden,
        learned_shortcut=ls, eps=1e-5)

    out_f = pl.pallas_call(
        kernel,
        out_shape=jax.ShapeDtypeStruct((N, fout, R_pad), jnp.float32),
        grid=(N,),
        in_specs=in_specs,
        out_specs=pl.BlockSpec((1, fout, R_pad), lambda n: (n, 0, 0)),
        compiler_params=pltpu.CompilerParams(
            dimension_semantics=("parallel",)),
        cost_estimate=cost,
    )(*operands)

    # (N, fout, R_pad) -> NCHW interior
    out = out_f[:, :, :R].reshape(N, fout, Qp, Pp)[:, :, 1:H + 1, 1:W + 1]
    return out


# ----------------------------------------------------------------------------
# Parameter init (synthetic weights, PyTorch-equivalent shapes)
# ----------------------------------------------------------------------------
def init_conv3x3(key, cin, cout):
    k1, k2 = jax.random.split(key)
    w = jax.random.normal(k1, (3, 3, cin, cout), jnp.float32) / np.sqrt(9 * cin)
    b = 0.01 * jax.random.normal(k2, (cout,), jnp.float32)
    return w, b


def init_spade_params(key, norm_nc, label_nc, nhidden):
    k1, k2, k3 = jax.random.split(key, 3)
    w_sh, b_sh = init_conv3x3(k1, label_nc, nhidden)
    w_g, b_g = init_conv3x3(k2, nhidden, norm_nc)
    w_b, b_b = init_conv3x3(k3, nhidden, norm_nc)
    return dict(w_sh=w_sh, b_sh=b_sh, w_g=w_g, b_g=b_g, w_b=w_b, b_b=b_b)


def init_block_params(key, fin, fout, label_nc, nhidden):
    fmiddle = min(fin, fout)
    learned_shortcut = fin != fout
    assert fmiddle == fout, "this block variant requires fout <= fin"
    keys = jax.random.split(key, 4)
    w_0, b_0 = init_conv3x3(keys[0], fin, fmiddle)
    ref = dict(norm_0=init_spade_params(keys[1], fin, label_nc, nhidden),
               w_0=w_0, b_0=b_0)
    if learned_shortcut:
        ref["w_s"] = jax.random.normal(keys[2], (fin, fout), jnp.float32) / np.sqrt(fin)
        ref["norm_s"] = init_spade_params(keys[3], fin, label_nc, nhidden)
    return dict(fin=fin, fout=fout, fmiddle=fmiddle, label_nc=label_nc,
                nhidden=nhidden, learned_shortcut=learned_shortcut, ref=ref)


# ----------------------------------------------------------------------------
# Pure-JAX f32 reference (mirrors the PyTorch module) for a tolerance check
# ----------------------------------------------------------------------------
def _conv3x3_ref(x, w, b):
    y = jax.lax.conv_general_dilated(
        x, w, window_strides=(1, 1), padding=((1, 1), (1, 1)),
        dimension_numbers=("NHWC", "HWIO", "NHWC"),
        precision=jax.lax.Precision.HIGHEST)
    return y + b[None, None, None, :]


def _instance_norm_ref(x, eps=1e-5):
    mean = jnp.mean(x, axis=(1, 2), keepdims=True)
    var = jnp.mean((x - mean) ** 2, axis=(1, 2), keepdims=True)
    return (x - mean) * jax.lax.rsqrt(var + eps)


def _spade_ref(x, seg, p):
    normalized = _instance_norm_ref(x)
    actv = jax.nn.relu(_conv3x3_ref(seg, p["w_sh"], p["b_sh"]))
    gamma = _conv3x3_ref(actv, p["w_g"], p["b_g"])
    beta = _conv3x3_ref(actv, p["w_b"], p["b_b"])
    return normalized * (1.0 + gamma) + beta


def reference_forward(x_nchw, seg_nchw, params):
    x = jnp.transpose(x_nchw, (0, 2, 3, 1)).astype(jnp.float32)
    _, H, W, _ = x.shape
    seg = nearest_resize_nchw(seg_nchw.astype(jnp.float32), H, W)
    seg = jnp.transpose(seg, (0, 2, 3, 1))
    ref = params["ref"]
    h0 = jax.nn.leaky_relu(_spade_ref(x, seg, ref["norm_0"]), 0.2)
    dx = _conv3x3_ref(h0, ref["w_0"], ref["b_0"])
    if params["learned_shortcut"]:
        hs = _spade_ref(x, seg, ref["norm_s"])
        x_s = jnp.einsum("nhwc,co->nhwo", hs, ref["w_s"],
                         precision=jax.lax.Precision.HIGHEST)
    else:
        x_s = x
    return jnp.transpose(x_s + dx, (0, 3, 1, 2))


# ----------------------------------------------------------------------------
if __name__ == "__main__":
    # Small shapes: batch=2, fin=8, fout=4 (learned shortcut), spatial=16x16,
    # label_nc=3, nhidden=32.
    N, fin, fout, H, W = 2, 8, 4, 16, 16
    label_nc, nhidden = 3, 32

    key = jax.random.PRNGKey(0)
    kx, kseg, kparams = jax.random.split(key, 3)
    x = jax.random.normal(kx, (N, fin, H, W), jnp.float32)
    seg = jax.random.normal(kseg, (N, label_nc, H, W), jnp.float32)

    params = init_block_params(kparams, fin, fout, label_nc, nhidden)

    out = spade_resnet_block_forward(x, seg, params)
    out = jax.block_until_ready(out)
    assert out.shape == (N, fout, H, W)
    assert bool(jnp.all(jnp.isfinite(out)))

    # correctness check against an f32 pure-JAX reference (bf16 MXU tolerance)
    ref_out = jax.block_until_ready(reference_forward(x, seg, params))
    np.testing.assert_allclose(np.asarray(out), np.asarray(ref_out),
                               rtol=0.1, atol=0.25)
    print("KERNEL_OK")
</pallas_src>

<mosaic_0001>
module attributes {stable_mosaic.version = 11 : i64} {
  func.func @spade_block_kernel(%arg0: i32, %arg1: memref<1x384xf32, #tpu.memory_space<vmem>>, %arg2: memref<1x8x384xf32, #tpu.memory_space<vmem>>, %arg3: memref<1x8x384xf32, #tpu.memory_space<vmem>>, %arg4: memref<64x72xbf16, #tpu.memory_space<vmem>>, %arg5: memref<64x1xf32, #tpu.memory_space<vmem>>, %arg6: memref<16x288xbf16, #tpu.memory_space<vmem>>, %arg7: memref<16x1xf32, #tpu.memory_space<vmem>>, %arg8: memref<16x288xbf16, #tpu.memory_space<vmem>>, %arg9: memref<16x1xf32, #tpu.memory_space<vmem>>, %arg10: memref<4x72xbf16, #tpu.memory_space<vmem>>, %arg11: memref<4x1xf32, #tpu.memory_space<vmem>>, %arg12: memref<4x8xbf16, #tpu.memory_space<vmem>>, %arg13: memref<1x4x384xf32, #tpu.memory_space<vmem>>) attributes {dimension_semantics = [#tpu.dimension_semantics<parallel>], iteration_bounds = array<i64: 2>, scalar_prefetch = 0 : i64, scratch_operands = 0 : i64, tpu.core_type = #tpu.core_type<tc>, window_params = [{pipeline_mode = #tpu.pipeline_mode<synchronous>, transform_indices = @transform_0, window_bounds = array<i64: 1, 384>}, {transform_indices = @transform_1, window_bounds = array<i64: 1, 8, 384>}, {transform_indices = @transform_2, window_bounds = array<i64: 1, 8, 384>}, {pipeline_mode = #tpu.pipeline_mode<synchronous>, transform_indices = @transform_3, window_bounds = array<i64: 64, 72>}, {pipeline_mode = #tpu.pipeline_mode<synchronous>, transform_indices = @transform_4, window_bounds = array<i64: 64, 1>}, {pipeline_mode = #tpu.pipeline_mode<synchronous>, transform_indices = @transform_5, window_bounds = array<i64: 16, 288>}, {pipeline_mode = #tpu.pipeline_mode<synchronous>, transform_indices = @transform_6, window_bounds = array<i64: 16, 1>}, {pipeline_mode = #tpu.pipeline_mode<synchronous>, transform_indices = @transform_7, window_bounds = array<i64: 16, 288>}, {pipeline_mode = #tpu.pipeline_mode<synchronous>, transform_indices = @transform_8, window_bounds = array<i64: 16, 1>}, {pipeline_mode = #tpu.pipeline_mode<synchronous>, transform_indices = @transform_9, window_bounds = array<i64: 4, 72>}, {pipeline_mode = #tpu.pipeline_mode<synchronous>, transform_indices = @transform_10, window_bounds = array<i64: 4, 1>}, {pipeline_mode = #tpu.pipeline_mode<synchronous>, transform_indices = @transform_11, window_bounds = array<i64: 4, 8>}, {transform_indices = @transform_12, window_bounds = array<i64: 1, 4, 384>}]} {
    %c0 = arith.constant 0 : index
    %c0_0 = arith.constant 0 : index
    %0 = vector.load %arg1[%c0, %c0_0] : memref<1x384xf32, #tpu.memory_space<vmem>>, vector<1x384xf32>
    %c0_1 = arith.constant 0 : index
    %c0_2 = arith.constant 0 : index
    %c0_3 = arith.constant 0 : index
    %1 = vector.load %arg2[%c0_1, %c0_2, %c0_3] : memref<1x8x384xf32, #tpu.memory_space<vmem>>, vector<1x8x384xf32>
    %2 = vector.shape_cast %1 : vector<1x8x384xf32> to vector<8x384xf32>
    %c0_4 = arith.constant 0 : index
    %c0_5 = arith.constant 0 : index
    %c0_6 = arith.constant 0 : index
    %3 = vector.load %arg3[%c0_4, %c0_5, %c0_6] : memref<1x8x384xf32, #tpu.memory_space<vmem>>, vector<1x8x384xf32>
    %4 = vector.shape_cast %3 : vector<1x8x384xf32> to vector<8x384xf32>
    %cst = arith.constant dense<0.000000e+00> : vector<8xf32>
    %5 = vector.multi_reduction <add>, %2, %cst [1] : vector<8x384xf32> to vector<8xf32>
    %6 = vector.shape_cast %5 : vector<8xf32> to vector<8x1xf32>
    %cst_7 = arith.constant 2.560000e+02 : f32
    %7 = vector.broadcast %cst_7 : f32 to vector<8x1xf32>
    %8 = arith.divf %6, %7 : vector<8x1xf32>
    %9 = arith.mulf %2, %2 : vector<8x384xf32>
    %cst_8 = arith.constant dense<0.000000e+00> : vector<8xf32>
    %10 = vector.multi_reduction <add>, %9, %cst_8 [1] : vector<8x384xf32> to vector<8xf32>
    %11 = vector.shape_cast %10 : vector<8xf32> to vector<8x1xf32>
    %cst_9 = arith.constant 2.560000e+02 : f32
    %12 = vector.broadcast %cst_9 : f32 to vector<8x1xf32>
    %13 = arith.divf %11, %12 : vector<8x1xf32>
    %14 = arith.mulf %8, %8 : vector<8x1xf32>
    %15 = arith.subf %13, %14 : vector<8x1xf32>
    %cst_10 = arith.constant 0.000000e+00 : f32
    %16 = vector.broadcast %cst_10 : f32 to vector<8x1xf32>
    %17 = arith.maximumf %15, %16 : vector<8x1xf32>
    %18 = vector.broadcast %8 : vector<8x1xf32> to vector<8x384xf32>
    %19 = arith.subf %2, %18 : vector<8x384xf32>
    %cst_11 = arith.constant 9.99999974E-6 : f32
    %20 = vector.broadcast %cst_11 : f32 to vector<8x1xf32>
    %21 = arith.addf %17, %20 : vector<8x1xf32>
    %22 = math.rsqrt %21 : vector<8x1xf32>
    %23 = vector.broadcast %22 : vector<8x1xf32> to vector<8x384xf32>
    %24 = arith.mulf %19, %23 : vector<8x384xf32>
    %cst_12 = arith.constant 0.000000e+00 : f32
    %25 = vector.broadcast %cst_12 : f32 to vector<8x128xf32>
    %26 = tpu.concatenate %25, %4, %25 in 1 : vector<8x128xf32>, vector<8x384xf32>, vector<8x128xf32> -> vector<8x640xf32>
    %27 = vector.extract_strided_slice %26 {offsets = [0, 109], sizes = [8, 384], strides = [1, 1]} : vector<8x640xf32> to vector<8x384xf32>
    %28 = vector.extract_strided_slice %26 {offsets = [0, 110], sizes = [8, 384], strides = [1, 1]} : vector<8x640xf32> to vector<8x384xf32>
    %29 = vector.extract_strided_slice %26 {offsets = [0, 111], sizes = [8, 384], strides = [1, 1]} : vector<8x640xf32> to vector<8x384xf32>
    %30 = vector.extract_strided_slice %26 {offsets = [0, 127], sizes = [8, 384], strides = [1, 1]} : vector<8x640xf32> to vector<8x384xf32>
    %31 = vector.extract_strided_slice %26 {offsets = [0, 128], sizes = [8, 384], strides = [1, 1]} : vector<8x640xf32> to vector<8x384xf32>
    %32 = vector.extract_strided_slice %26 {offsets = [0, 129], sizes = [8, 384], strides = [1, 1]} : vector<8x640xf32> to vector<8x384xf32>
    %33 = vector.extract_strided_slice %26 {offsets = [0, 145], sizes = [8, 384], strides = [1, 1]} : vector<8x640xf32> to vector<8x384xf32>
    %34 = vector.extract_strided_slice %26 {offsets = [0, 146], sizes = [8, 384], strides = [1, 1]} : vector<8x640xf32> to vector<8x384xf32>
    %35 = vector.extract_strided_slice %26 {offsets = [0, 147], sizes = [8, 384], strides = [1, 1]} : vector<8x640xf32> to vector<8x384xf32>
    %36 = tpu.concatenate %27, %28, %29, %30, %31, %32, %33, %34, %35 in 0 : vector<8x384xf32>, vector<8x384xf32>, vector<8x384xf32>, vector<8x384xf32>, vector<8x384xf32>, vector<8x384xf32>, vector<8x384xf32>, vector<8x384xf32>, vector<8x384xf32> -> vector<72x384xf32>
    %37 = arith.truncf %36 : vector<72x384xf32> to vector<72x384xbf16>
    %c0_13 = arith.constant 0 : index
    %c0_14 = arith.constant 0 : index
    %38 = vector.load %arg4[%c0_13, %c0_14] : memref<64x72xbf16, #tpu.memory_space<vmem>>, vector<64x72xbf16>
    %cst_15 = arith.constant dense<0.000000e+00> : vector<64x384xf32>
    %39 = tpu.matmul %38, %37, %cst_15 {dimension_numbers = #tpu.dot_dimension_numbers<[1], [0], [0], [1], [0, 0, 1, 1], [], []>} : vector<64x72xbf16>, vector<72x384xbf16>, vector<64x384xf32> -> vector<64x384xf32>
    %c0_16 = arith.constant 0 : index
    %c0_17 = arith.constant 0 : index
    %40 = vector.load %arg5[%c0_16, %c0_17] : memref<64x1xf32, #tpu.memory_space<vmem>>, vector<64x1xf32>
    %41 = vector.broadcast %40 : vector<64x1xf32> to vector<64x384xf32>
    %42 = arith.addf %39, %41 : vector<64x384xf32>
    %cst_18 = arith.constant 0.000000e+00 : f32
    %43 = vector.broadcast %cst_18 : f32 to vector<64x384xf32>
    %44 = arith.maximumf %42, %43 : vector<64x384xf32>
    %45 = vector.broadcast %0 : vector<1x384xf32> to vector<64x384xf32>
    %46 = arith.mulf %44, %45 : vector<64x384xf32>
    %47 = vector.extract_strided_slice %46 {offsets = [32, 0], sizes = [32, 384], strides = [1, 1]} : vector<64x384xf32> to vector<32x384xf32>
    %cst_19 = arith.constant 0.000000e+00 : f32
    %48 = vector.broadcast %cst_19 : f32 to vector<32x128xf32>
    %49 = tpu.concatenate %48, %47, %48 in 1 : vector<32x128xf32>, vector<32x384xf32>, vector<32x128xf32> -> vector<32x640xf32>
    %50 = vector.extract_strided_slice %49 {offsets = [0, 109], sizes = [32, 384], strides = [1, 1]} : vector<32x640xf32> to vector<32x384xf32>
    %51 = vector.extract_strided_slice %49 {offsets = [0, 110], sizes = [32, 384], strides = [1, 1]} : vector<32x640xf32> to vector<32x384xf32>
    %52 = vector.extract_strided_slice %49 {offsets = [0, 111], sizes = [32, 384], strides = [1, 1]} : vector<32x640xf32> to vector<32x384xf32>
    %53 = vector.extract_strided_slice %49 {offsets = [0, 127], sizes = [32, 384], strides = [1, 1]} : vector<32x640xf32> to vector<32x384xf32>
    %54 = vector.extract_strided_slice %49 {offsets = [0, 128], sizes = [32, 384], strides = [1, 1]} : vector<32x640xf32> to vector<32x384xf32>
    %55 = vector.extract_strided_slice %49 {offsets = [0, 129], sizes = [32, 384], strides = [1, 1]} : vector<32x640xf32> to vector<32x384xf32>
    %56 = vector.extract_strided_slice %49 {offsets = [0, 145], sizes = [32, 384], strides = [1, 1]} : vector<32x640xf32> to vector<32x384xf32>
    %57 = vector.extract_strided_slice %49 {offsets = [0, 146], sizes = [32, 384], strides = [1, 1]} : vector<32x640xf32> to vector<32x384xf32>
    %58 = vector.extract_strided_slice %49 {offsets = [0, 147], sizes = [32, 384], strides = [1, 1]} : vector<32x640xf32> to vector<32x384xf32>
    %59 = tpu.concatenate %50, %51, %52, %53, %54, %55, %56, %57, %58 in 0 : vector<32x384xf32>, vector<32x384xf32>, vector<32x384xf32>, vector<32x384xf32>, vector<32x384xf32>, vector<32x384xf32>, vector<32x384xf32>, vector<32x384xf32>, vector<32x384xf32> -> vector<288x384xf32>
    %60 = arith.truncf %59 : vector<288x384xf32> to vector<288x384xbf16>
    %c0_20 = arith.constant 0 : index
    %c0_21 = arith.constant 0 : index
    %61 = vector.load %arg8[%c0_20, %c0_21] : memref<16x288xbf16, #tpu.memory_space<vmem>>, vector<16x288xbf16>
    %cst_22 = arith.constant dense<0.000000e+00> : vector<16x384xf32>
    %62 = tpu.matmul %61, %60, %cst_22 {dimension_numbers = #tpu.dot_dimension_numbers<[1], [0], [0], [1], [0, 0, 1, 1], [], []>} : vector<16x288xbf16>, vector<288x384xbf16>, vector<16x384xf32> -> vector<16x384xf32>
    %c0_23 = arith.constant 0 : index
    %c0_24 = arith.constant 0 : index
    %63 = vector.load %arg9[%c0_23, %c0_24] : memref<16x1xf32, #tpu.memory_space<vmem>>, vector<16x1xf32>
    %64 = vector.broadcast %63 : vector<16x1xf32> to vector<16x384xf32>
    %65 = arith.addf %62, %64 : vector<16x384xf32>
    %66 = vector.extract_strided_slice %65 {offsets = [0, 0], sizes = [8, 384], strides = [1, 1]} : vector<16x384xf32> to vector<8x384xf32>
    %cst_25 = arith.constant 1.000000e+00 : f32
    %67 = vector.broadcast %cst_25 : f32 to vector<8x384xf32>
    %68 = arith.addf %67, %66 : vector<8x384xf32>
    %69 = arith.mulf %24, %68 : vector<8x384xf32>
    %70 = vector.extract_strided_slice %65 {offsets = [8, 0], sizes = [8, 384], strides = [1, 1]} : vector<16x384xf32> to vector<8x384xf32>
    %71 = arith.addf %69, %70 : vector<8x384xf32>
    %72 = vector.broadcast %0 : vector<1x384xf32> to vector<8x384xf32>
    %73 = arith.mulf %71, %72 : vector<8x384xf32>
    %c0_26 = arith.constant 0 : index
    %c0_27 = arith.constant 0 : index
    %74 = vector.load %arg12[%c0_26, %c0_27] : memref<4x8xbf16, #tpu.memory_space<vmem>>, vector<4x8xbf16>
    %75 = arith.truncf %73 : vector<8x384xf32> to vector<8x384xbf16>
    %cst_28 = arith.constant dense<0.000000e+00> : vector<4x384xf32>
    %76 = tpu.matmul %74, %75, %cst_28 {dimension_numbers = #tpu.dot_dimension_numbers<[1], [0], [0], [1], [0, 0, 1, 1], [], []>} : vector<4x8xbf16>, vector<8x384xbf16>, vector<4x384xf32> -> vector<4x384xf32>
    %c0_29 = arith.constant 0 : index
    %c0_30 = arith.constant 0 : index
    %c0_31 = arith.constant 0 : index
    %77 = vector.load %arg13[%c0_29, %c0_30, %c0_31] : memref<1x4x384xf32, #tpu.memory_space<vmem>>, vector<1x4x384xf32>
    %78 = vector.shape_cast %77 : vector<1x4x384xf32> to vector<4x384xf32>
    %79 = vector.shape_cast %76 : vector<4x384xf32> to vector<1x4x384xf32>
    tpu.vector_store %arg13[%c0_29, %c0_30, %c0_31], %79 {strides = array<i32>} : memref<1x4x384xf32, #tpu.memory_space<vmem>>, vector<1x4x384xf32>,
    %80 = vector.extract_strided_slice %46 {offsets = [0, 0], sizes = [32, 384], strides = [1, 1]} : vector<64x384xf32> to vector<32x384xf32>
    %cst_32 = arith.constant 0.000000e+00 : f32
    %81 = vector.broadcast %cst_32 : f32 to vector<32x128xf32>
    %82 = tpu.concatenate %81, %80, %81 in 1 : vector<32x128xf32>, vector<32x384xf32>, vector<32x128xf32> -> vector<32x640xf32>
    %83 = vector.extract_strided_slice %82 {offsets = [0, 109], sizes = [32, 384], strides = [1, 1]} : vector<32x640xf32> to vector<32x384xf32>
    %84 = vector.extract_strided_slice %82 {offsets = [0, 110], sizes = [32, 384], strides = [1, 1]} : vector<32x640xf32> to vector<32x384xf32>
    %85 = vector.extract_strided_slice %82 {offsets = [0, 111], sizes = [32, 384], strides = [1, 1]} : vector<32x640xf32> to vector<32x384xf32>
    %86 = vector.extract_strided_slice %82 {offsets = [0, 127], sizes = [32, 384], strides = [1, 1]} : vector<32x640xf32> to vector<32x384xf32>
    %87 = vector.extract_strided_slice %82 {offsets = [0, 128], sizes = [32, 384], strides = [1, 1]} : vector<32x640xf32> to vector<32x384xf32>
    %88 = vector.extract_strided_slice %82 {offsets = [0, 129], sizes = [32, 384], strides = [1, 1]} : vector<32x640xf32> to vector<32x384xf32>
    %89 = vector.extract_strided_slice %82 {offsets = [0, 145], sizes = [32, 384], strides = [1, 1]} : vector<32x640xf32> to vector<32x384xf32>
    %90 = vector.extract_strided_slice %82 {offsets = [0, 146], sizes = [32, 384], strides = [1, 1]} : vector<32x640xf32> to vector<32x384xf32>
    %91 = vector.extract_strided_slice %82 {offsets = [0, 147], sizes = [32, 384], strides = [1, 1]} : vector<32x640xf32> to vector<32x384xf32>
    %92 = tpu.concatenate %83, %84, %85, %86, %87, %88, %89, %90, %91 in 0 : vector<32x384xf32>, vector<32x384xf32>, vector<32x384xf32>, vector<32x384xf32>, vector<32x384xf32>, vector<32x384xf32>, vector<32x384xf32>, vector<32x384xf32>, vector<32x384xf32> -> vector<288x384xf32>
    %93 = arith.truncf %92 : vector<288x384xf32> to vector<288x384xbf16>
    %c0_33 = arith.constant 0 : index
    %c0_34 = arith.constant 0 : index
    %94 = vector.load %arg6[%c0_33, %c0_34] : memref<16x288xbf16, #tpu.memory_space<vmem>>, vector<16x288xbf16>
    %cst_35 = arith.constant dense<0.000000e+00> : vector<16x384xf32>
    %95 = tpu.matmul %94, %93, %cst_35 {dimension_numbers = #tpu.dot_dimension_numbers<[1], [0], [0], [1], [0, 0, 1, 1], [], []>} : vector<16x288xbf16>, vector<288x384xbf16>, vector<16x384xf32> -> vector<16x384xf32>
    %c0_36 = arith.constant 0 : index
    %c0_37 = arith.constant 0 : index
    %96 = vector.load %arg7[%c0_36, %c0_37] : memref<16x1xf32, #tpu.memory_space<vmem>>, vector<16x1xf32>
    %97 = vector.broadcast %96 : vector<16x1xf32> to vector<16x384xf32>
    %98 = arith.addf %95, %97 : vector<16x384xf32>
    %99 = vector.extract_strided_slice %98 {offsets = [0, 0], sizes = [8, 384], strides = [1, 1]} : vector<16x384xf32> to vector<8x384xf32>
    %cst_38 = arith.constant 1.000000e+00 : f32
    %100 = vector.broadcast %cst_38 : f32 to vector<8x384xf32>
    %101 = arith.addf %100, %99 : vector<8x384xf32>
    %102 = arith.mulf %24, %101 : vector<8x384xf32>
    %103 = vector.extract_strided_slice %98 {offsets = [8, 0], sizes = [8, 384], strides = [1, 1]} : vector<16x384xf32> to vector<8x384xf32>
    %104 = arith.addf %102, %103 : vector<8x384xf32>
    %cst_39 = arith.constant 0.000000e+00 : f32
    %105 = vector.broadcast %cst_39 : f32 to vector<8x384xf32>
    %106 = arith.cmpf oge, %104, %105 : vector<8x384xf32>
    %cst_40 = arith.constant 2.000000e-01 : f32
    %107 = vector.broadcast %cst_40 : f32 to vector<8x384xf32>
    %108 = arith.mulf %107, %104 : vector<8x384xf32>
    %109 = arith.select %106, %104, %108 : vector<8x384xi1>, vector<8x384xf32>
    %110 = vector.broadcast %0 : vector<1x384xf32> to vector<8x384xf32>
    %111 = arith.mulf %109, %110 : vector<8x384xf32>
    %c0_41 = arith.constant 0 : index
    %c0_42 = arith.constant 0 : index
    %c0_43 = arith.constant 0 : index
    %112 = vector.load %arg13[%c0_41, %c0_42, %c0_43] : memref<1x4x384xf32, #tpu.memory_space<vmem>>, vector<1x4x384xf32>
    %113 = vector.shape_cast %112 : vector<1x4x384xf32> to vector<4x384xf32>
    %cst_44 = arith.constant 0.000000e+00 : f32
    %114 = vector.broadcast %cst_44 : f32 to vector<8x128xf32>
    %115 = tpu.concatenate %114, %111, %114 in 1 : vector<8x128xf32>, vector<8x384xf32>, vector<8x128xf32> -> vector<8x640xf32>
    %116 = vector.extract_strided_slice %115 {offsets = [0, 109], sizes = [8, 384], strides = [1, 1]} : vector<8x640xf32> to vector<8x384xf32>
    %117 = vector.extract_strided_slice %115 {offsets = [0, 110], sizes = [8, 384], strides = [1, 1]} : vector<8x640xf32> to vector<8x384xf32>
    %118 = vector.extract_strided_slice %115 {offsets = [0, 111], sizes = [8, 384], strides = [1, 1]} : vector<8x640xf32> to vector<8x384xf32>
    %119 = vector.extract_strided_slice %115 {offsets = [0, 127], sizes = [8, 384], strides = [1, 1]} : vector<8x640xf32> to vector<8x384xf32>
    %120 = vector.extract_strided_slice %115 {offsets = [0, 128], sizes = [8, 384], strides = [1, 1]} : vector<8x640xf32> to vector<8x384xf32>
    %121 = vector.extract_strided_slice %115 {offsets = [0, 129], sizes = [8, 384], strides = [1, 1]} : vector<8x640xf32> to vector<8x384xf32>
    %122 = vector.extract_strided_slice %115 {offsets = [0, 145], sizes = [8, 384], strides = [1, 1]} : vector<8x640xf32> to vector<8x384xf32>
    %123 = vector.extract_strided_slice %115 {offsets = [0, 146], sizes = [8, 384], strides = [1, 1]} : vector<8x640xf32> to vector<8x384xf32>
    %124 = vector.extract_strided_slice %115 {offsets = [0, 147], sizes = [8, 384], strides = [1, 1]} : vector<8x640xf32> to vector<8x384xf32>
    %125 = tpu.concatenate %116, %117, %118, %119, %120, %121, %122, %123, %124 in 0 : vector<8x384xf32>, vector<8x384xf32>, vector<8x384xf32>, vector<8x384xf32>, vector<8x384xf32>, vector<8x384xf32>, vector<8x384xf32>, vector<8x384xf32>, vector<8x384xf32> -> vector<72x384xf32>
    %126 = arith.truncf %125 : vector<72x384xf32> to vector<72x384xbf16>
    %c0_45 = arith.constant 0 : index
    %c0_46 = arith.constant 0 : index
    %127 = vector.load %arg10[%c0_45, %c0_46] : memref<4x72xbf16, #tpu.memory_space<vmem>>, vector<4x72xbf16>
    %cst_47 = arith.constant dense<0.000000e+00> : vector<4x384xf32>
    %128 = tpu.matmul %127, %126, %cst_47 {dimension_numbers = #tpu.dot_dimension_numbers<[1], [0], [0], [1], [0, 0, 1, 1], [], []>} : vector<4x72xbf16>, vector<72x384xbf16>, vector<4x384xf32> -> vector<4x384xf32>
    %c0_48 = arith.constant 0 : index
    %c0_49 = arith.constant 0 : index
    %129 = vector.load %arg11[%c0_48, %c0_49] : memref<4x1xf32, #tpu.memory_space<vmem>>, vector<4x1xf32>
    %130 = vector.broadcast %129 : vector<4x1xf32> to vector<4x384xf32>
    %131 = arith.addf %128, %130 : vector<4x384xf32>
    %132 = arith.addf %113, %131 : vector<4x384xf32>
    %c0_50 = arith.constant 0 : index
    %c0_51 = arith.constant 0 : index
    %c0_52 = arith.constant 0 : index
    %133 = vector.load %arg13[%c0_50, %c0_51, %c0_52] : memref<1x4x384xf32, #tpu.memory_space<vmem>>, vector<1x4x384xf32>
    %134 = vector.shape_cast %133 : vector<1x4x384xf32> to vector<4x384xf32>
    %135 = vector.shape_cast %132 : vector<4x384xf32> to vector<1x4x384xf32>
    tpu.vector_store %arg13[%c0_50, %c0_51, %c0_52], %135 {strides = array<i32>} : memref<1x4x384xf32, #tpu.memory_space<vmem>>, vector<1x4x384xf32>,
    return
  }
  func.func @transform_0(%arg0: i32) -> (i32, i32) {
    %c0_i32 = arith.constant 0 : i32
    %c0_i32_0 = arith.constant 0 : i32
    %c0_i32_1 = arith.constant 0 : i32
    return %c0_i32, %c0_i32_0 : i32, i32
  }
  func.func @transform_1(%arg0: i32) -> (i32, i32, i32) {
    %c0_i32 = arith.constant 0 : i32
    %c0_i32_0 = arith.constant 0 : i32
    %c0_i32_1 = arith.constant 0 : i32
    return %arg0, %c0_i32, %c0_i32_0 : i32, i32, i32
  }
  func.func @transform_2(%arg0: i32) -> (i32, i32, i32) {
    %c0_i32 = arith.constant 0 : i32
    %c0_i32_0 = arith.constant 0 : i32
    %c0_i32_1 = arith.constant 0 : i32
    return %arg0, %c0_i32, %c0_i32_0 : i32, i32, i32
  }
  func.func @transform_3(%arg0: i32) -> (i32, i32) {
    %c0_i32 = arith.constant 0 : i32
    %c0_i32_0 = arith.constant 0 : i32
    %c0_i32_1 = arith.constant 0 : i32
    return %c0_i32, %c0_i32_0 : i32, i32
  }
  func.func @transform_4(%arg0: i32) -> (i32, i32) {
    %c0_i32 = arith.constant 0 : i32
    %c0_i32_0 = arith.constant 0 : i32
    %c0_i32_1 = arith.constant 0 : i32
    return %c0_i32, %c0_i32_0 : i32, i32
  }
  func.func @transform_5(%arg0: i32) -> (i32, i32) {
    %c0_i32 = arith.constant 0 : i32
    %c0_i32_0 = arith.constant 0 : i32
    %c0_i32_1 = arith.constant 0 : i32
    return %c0_i32, %c0_i32_0 : i32, i32
  }
  func.func @transform_6(%arg0: i32) -> (i32, i32) {
    %c0_i32 = arith.constant 0 : i32
    %c0_i32_0 = arith.constant 0 : i32
    %c0_i32_1 = arith.constant 0 : i32
    return %c0_i32, %c0_i32_0 : i32, i32
  }
  func.func @transform_7(%arg0: i32) -> (i32, i32) {
    %c0_i32 = arith.constant 0 : i32
    %c0_i32_0 = arith.constant 0 : i32
    %c0_i32_1 = arith.constant 0 : i32
    return %c0_i32, %c0_i32_0 : i32, i32
  }
  func.func @transform_8(%arg0: i32) -> (i32, i32) {
    %c0_i32 = arith.constant 0 : i32
    %c0_i32_0 = arith.constant 0 : i32
    %c0_i32_1 = arith.constant 0 : i32
    return %c0_i32, %c0_i32_0 : i32, i32
  }
  func.func @transform_9(%arg0: i32) -> (i32, i32) {
    %c0_i32 = arith.constant 0 : i32
    %c0_i32_0 = arith.constant 0 : i32
    %c0_i32_1 = arith.constant 0 : i32
    return %c0_i32, %c0_i32_0 : i32, i32
  }
  func.func @transform_10(%arg0: i32) -> (i32, i32) {
    %c0_i32 = arith.constant 0 : i32
    %c0_i32_0 = arith.constant 0 : i32
    %c0_i32_1 = arith.constant 0 : i32
    return %c0_i32, %c0_i32_0 : i32, i32
  }
  func.func @transform_11(%arg0: i32) -> (i32, i32) {
    %c0_i32 = arith.constant 0 : i32
    %c0_i32_0 = arith.constant 0 : i32
    %c0_i32_1 = arith.constant 0 : i32
    return %c0_i32, %c0_i32_0 : i32, i32
  }
  func.func @transform_12(%arg0: i32) -> (i32, i32, i32) {
    %c0_i32 = arith.constant 0 : i32
    %c0_i32_0 = arith.constant 0 : i32
    %c0_i32_1 = arith.constant 0 : i32
    return %arg0, %c0_i32, %c0_i32_0 : i32, i32, i32
  }
}

</mosaic_0001>

<llo_original>
// kernel: tpu_custom_call.1
$region0: #{tpu_custom_call.1}
  #allocation0 [shape = 'u32[]', space=smem, size = 0x4, offset = 0x4, fixed_abs, tag = 'smem constant byte address 0x4 - core index']
  #allocation1 [shape = 'u32[144,128]{1,0:T(1,128)}', space=vmem, size = 0x12000, scoped, tag = 'internal scratch']
  %s0 = inlined_call_operand.hbm [shape: f32[1,384], index: 0, kind: input, shape index: {}]
  %s1 = inlined_call_operand.vmem [shape: f32[2,8,384], index: 1, kind: input, shape index: {}]
  %s2 = inlined_call_operand.vmem [shape: f32[2,8,384], index: 2, kind: input, shape index: {}]
  %s3 = inlined_call_operand.hbm [shape: bf16[64,72], index: 3, kind: input, shape index: {}]
  %s4 = inlined_call_operand.vmem [shape: f32[64,1], index: 4, kind: input, shape index: {}]
  %s5 = inlined_call_operand.vmem [shape: bf16[16,288], index: 5, kind: input, shape index: {}]
  %s6 = inlined_call_operand.vmem [shape: f32[16,1], index: 6, kind: input, shape index: {}]
  %s7 = inlined_call_operand.hbm [shape: bf16[16,288], index: 7, kind: input, shape index: {}]
  %s8 = inlined_call_operand.vmem [shape: f32[16,1], index: 8, kind: input, shape index: {}]
  %s9 = inlined_call_operand.vmem [shape: bf16[4,72], index: 9, kind: input, shape index: {}]
  %s10 = inlined_call_operand.vmem [shape: f32[4,1], index: 10, kind: input, shape index: {}]
  %s11 = inlined_call_operand.vmem [shape: bf16[4,8], index: 11, kind: input, shape index: {}]
  %s12 = inlined_call_operand.hbm [shape: f32[2,4,384], index: 12, kind: output, shape index: {}]
  %s13 = sld [smem:[#allocation0]]
  $region93: #{tpu_custom_call.1} parent=0
    _
  %s15 = ssub.s32 1, %s13
  %s16 = scalar_select 0, %s15, %s13
  $region1: #{tpu_custom_call.1} parent=0
    #allocation2 [shape = 'u8[1536]{0}', space=vmem, size = 0x800, scoped, tag = 'input window, operand 0, single buffered']
    #allocation3 [shape = 's32[2]{0}', space=sflag, size = 0x8, scoped, tag = 'scoped memory for tpu_custom_call.1']
    #allocation4 [shape = 's32[2]{0}', space=sflag, size = 0x8, scoped, tag = 'scoped memory for tpu_custom_call.1']
    #allocation5 [shape = 'u8[16384]{0}', space=vmem, size = 0x4000, scoped, tag = 'input window, operand 3, single buffered']
    #allocation6 [shape = 's32[1]{0}', space=sflag, size = 0x4, scoped, tag = 'scoped memory for tpu_custom_call.1']
    #allocation7 [shape = 'u8[12288]{0}', space=vmem, size = 0x3000, scoped, tag = 'input window, operand 7, single buffered']
    #allocation8 [shape = 'u8[12288]{0}', space=vmem, size = 0x3000, scoped, tag = 'output window, operand 0']
    %17 = vsyncpa [#allocation3], 0
    %18 = vsyncpa [#allocation6], 0
    %19 = vsyncpa [#allocation4], 0
    %s20 = scalar_lea.sflag [#allocation4], 1
    %21 = vsyncpa %s20, 0
    loop: start=0, step=1, limit=4
    $region2: #{tpu_custom_call.1} parent=1 // loop_pre_header
      _
    $region3: #{tpu_custom_call.1} parent=1 // loop_header
      %s23 = sphi 0, %s27
      %p24 = scmp.ge.s32.totalorder %s23, 4
      %s31 = sphi 0, %s31
      %s33 = sphi 0, %s31
      %s34 = sphi 0, %s33
      %s48 = sphi 0, %s34
      %s54 = sphi 0, %s56
      %s57 = sphi 0, %s54
      %s58 = sphi 0, %s57
      %s74 = sphi 0, %s58
      %s80 = sphi 0, %s82
      %s83 = sphi 0, %s80
      %s84 = sphi 0, %s83
      %s100 = sphi 0, %s84
      %s104 = sphi 0, %s104
      %s106 = sphi 0, %s104
      %s107 = sphi 0, %s106
      %s121 = sphi 0, %s107
      %s125 = sphi 0, %s125
      %s127 = sphi 0, %s125
      %s128 = sphi 0, %s127
      %s142 = sphi 0, %s128
      %s146 = sphi 0, %s146
      %s148 = sphi 0, %s146
      %s149 = sphi 0, %s148
      %s163 = sphi 0, %s149
      %s167 = sphi 0, %s167
      %s169 = sphi 0, %s167
      %s170 = sphi 0, %s169
      %s184 = sphi 0, %s170
      %s188 = sphi 0, %s188
      %s190 = sphi 0, %s188
      %s191 = sphi 0, %s190
      %s205 = sphi 0, %s191
      %s209 = sphi 0, %s209
      %s211 = sphi 0, %s209
      %s212 = sphi 0, %s211
      %s226 = sphi 0, %s212
      %s230 = sphi 0, %s230
      %s232 = sphi 0, %s230
      %s233 = sphi 0, %s232
      %s247 = sphi 0, %s233
      %s251 = sphi 0, %s251
      %s253 = sphi 0, %s251
      %s254 = sphi 0, %s253
      %s268 = sphi 0, %s254
      %s272 = sphi 0, %s272
      %s274 = sphi 0, %s272
      %s275 = sphi 0, %s274
      %s289 = sphi 0, %s275
      %s295 = sphi 0, %s297
      %s298 = sphi 0, %s295
      %s299 = sphi 0, %s298
      %s315 = sphi 0, %s299
    $region4: #{tpu_custom_call.1} parent=1 // loop_header_branch
      %26 = sbr.rel (%p24) target = $region8
    $region5: #{tpu_custom_call.1} parent=1 // loop_body
      %s28 = ssub.s32 %s23, 1
      %s29 = ssub.s32 %s23, 2
      %s30 = sadd.s32 %s23, 1
      %s32 = sadd.s32 %s31, 1
      %p35 = scmp.eq.s32.totalorder %s23, 1
      %p36 = scmp.ne.s32.totalorder %s31, %s33
      %p37 = scmp.eq.s32.totalorder %s23, 0
      %p38 = por %p36, %p37
      %p39 = scmp.ne.s32.totalorder %s31, %s33
      %p40 = scmp.eq.s32.totalorder %s28, 1
      %p41 = por %p39, %p40
      %p42 = scmp.ne.s32.totalorder %s33, %s34
      %p43 = scmp.eq.s32.totalorder %s28, 0
      %p44 = por %p42, %p43
      %p45 = scmp.ne.s32.totalorder %s33, %s34
      %p46 = scmp.eq.s32.totalorder %s29, 1
      %p47 = por %p45, %p46
      %p49 = scmp.ne.s32.totalorder %s34, %s48
      %p50 = scmp.eq.s32.totalorder %s29, 0
      %p51 = por %p49, %p50
      %s52 = ssub.s32 %s23, %s30
      %p53 = scmp.eq.s32.totalorder %s52, 0
      %s55 = sadd.s32 %s54, 1
      %s56 = scalar_select %p53, %s54, %s55
      %p59 = pneg %p53
      %p60 = scmp.eq.s32.totalorder %s23, 1
      %p61 = por %p59, %p60
      %p62 = scmp.ne.s32.totalorder %s54, %s57
      %p63 = scmp.eq.s32.totalorder %s23, 0
      %p64 = por %p62, %p63
      %p65 = scmp.ne.s32.totalorder %s54, %s57
      %p66 = scmp.eq.s32.totalorder %s28, 1
      %p67 = por %p65, %p66
      %p68 = scmp.ne.s32.totalorder %s57, %s58
      %p69 = scmp.eq.s32.totalorder %s28, 0
      %p70 = por %p68, %p69
      %p71 = scmp.ne.s32.totalorder %s57, %s58
      %p72 = scmp.eq.s32.totalorder %s29, 1
      %p73 = por %p71, %p72
      %p75 = scmp.ne.s32.totalorder %s58, %s74
      %p76 = scmp.eq.s32.totalorder %s29, 0
      %p77 = por %p75, %p76
      %s78 = ssub.s32 %s23, %s30
      %p79 = scmp.eq.s32.totalorder %s78, 0
      %s81 = sadd.s32 %s80, 1
      %s82 = scalar_select %p79, %s80, %s81
      %p85 = pneg %p79
      %p86 = scmp.eq.s32.totalorder %s23, 1
      %p87 = por %p85, %p86
      %p88 = scmp.ne.s32.totalorder %s80, %s83
      %p89 = scmp.eq.s32.totalorder %s23, 0
      %p90 = por %p88, %p89
      %p91 = scmp.ne.s32.totalorder %s80, %s83
      %p92 = scmp.eq.s32.totalorder %s28, 1
      %p93 = por %p91, %p92
      %p94 = scmp.ne.s32.totalorder %s83, %s84
      %p95 = scmp.eq.s32.totalorder %s28, 0
      %p96 = por %p94, %p95
      %p97 = scmp.ne.s32.totalorder %s83, %s84
      %p98 = scmp.eq.s32.totalorder %s29, 1
      %p99 = por %p97, %p98
      %p101 = scmp.ne.s32.totalorder %s84, %s100
      %p102 = scmp.eq.s32.totalorder %s29, 0
      %p103 = por %p101, %p102
      %s105 = sadd.s32 %s104, 1
      %p108 = scmp.eq.s32.totalorder %s23, 1
      %p109 = scmp.ne.s32.totalorder %s104, %s106
      %p110 = scmp.eq.s32.totalorder %s23, 0
      %p111 = por %p109, %p110
      %p112 = scmp.ne.s32.totalorder %s104, %s106
      %p113 = scmp.eq.s32.totalorder %s28, 1
      %p114 = por %p112, %p113
      %p115 = scmp.ne.s32.totalorder %s106, %s107
      %p116 = scmp.eq.s32.totalorder %s28, 0
      %p117 = por %p115, %p116
      %p118 = scmp.ne.s32.totalorder %s106, %s107
      %p119 = scmp.eq.s32.totalorder %s29, 1
      %p120 = por %p118, %p119
      %p122 = scmp.ne.s32.totalorder %s107, %s121
      %p123 = scmp.eq.s32.totalorder %s29, 0
      %p124 = por %p122, %p123
      %s126 = sadd.s32 %s125, 1
      %p129 = scmp.eq.s32.totalorder %s23, 1
      %p130 = scmp.ne.s32.totalorder %s125, %s127
      %p131 = scmp.eq.s32.totalorder %s23, 0
      %p132 = por %p130, %p131
      %p133 = scmp.ne.s32.totalorder %s125, %s127
      %p134 = scmp.eq.s32.totalorder %s28, 1
      %p135 = por %p133, %p134
      %p136 = scmp.ne.s32.totalorder %s127, %s128
      %p137 = scmp.eq.s32.totalorder %s28, 0
      %p138 = por %p136, %p137
      %p139 = scmp.ne.s32.totalorder %s127, %s128
      %p140 = scmp.eq.s32.totalorder %s29, 1
      %p141 = por %p139, %p140
      %p143 = scmp.ne.s32.totalorder %s128, %s142
      %p144 = scmp.eq.s32.totalorder %s29, 0
      %p145 = por %p143, %p144
      %s147 = sadd.s32 %s146, 1
      %p150 = scmp.eq.s32.totalorder %s23, 1
      %p151 = scmp.ne.s32.totalorder %s146, %s148
      %p152 = scmp.eq.s32.totalorder %s23, 0
      %p153 = por %p151, %p152
      %p154 = scmp.ne.s32.totalorder %s146, %s148
      %p155 = scmp.eq.s32.totalorder %s28, 1
      %p156 = por %p154, %p155
      %p157 = scmp.ne.s32.totalorder %s148, %s149
      %p158 = scmp.eq.s32.totalorder %s28, 0
      %p159 = por %p157, %p158
      %p160 = scmp.ne.s32.totalorder %s148, %s149
      %p161 = scmp.eq.s32.totalorder %s29, 1
      %p162 = por %p160, %p161
      %p164 = scmp.ne.s32.totalorder %s149, %s163
      %p165 = scmp.eq.s32.totalorder %s29, 0
      %p166 = por %p164, %p165
      %s168 = sadd.s32 %s167, 1
      %p171 = scmp.eq.s32.totalorder %s23, 1
      %p172 = scmp.ne.s32.totalorder %s167, %s169
      %p173 = scmp.eq.s32.totalorder %s23, 0
      %p174 = por %p172, %p173
      %p175 = scmp.ne.s32.totalorder %s167, %s169
      %p176 = scmp.eq.s32.totalorder %s28, 1
      %p177 = por %p175, %p176
      %p178 = scmp.ne.s32.totalorder %s169, %s170
      %p179 = scmp.eq.s32.totalorder %s28, 0
      %p180 = por %p178, %p179
      %p181 = scmp.ne.s32.totalorder %s169, %s170
      %p182 = scmp.eq.s32.totalorder %s29, 1
      %p183 = por %p181, %p182
      %p185 = scmp.ne.s32.totalorder %s170, %s184
      %p186 = scmp.eq.s32.totalorder %s29, 0
      %p187 = por %p185, %p186
      %s189 = sadd.s32 %s188, 1
      %p192 = scmp.eq.s32.totalorder %s23, 1
      %p193 = scmp.ne.s32.totalorder %s188, %s190
      %p194 = scmp.eq.s32.totalorder %s23, 0
      %p195 = por %p193, %p194
      %p196 = scmp.ne.s32.totalorder %s188, %s190
      %p197 = scmp.eq.s32.totalorder %s28, 1
      %p198 = por %p196, %p197
      %p199 = scmp.ne.s32.totalorder %s190, %s191
      %p200 = scmp.eq.s32.totalorder %s28, 0
      %p201 = por %p199, %p200
      %p202 = scmp.ne.s32.totalorder %s190, %s191
      %p203 = scmp.eq.s32.totalorder %s29, 1
      %p204 = por %p202, %p203
      %p206 = scmp.ne.s32.totalorder %s191, %s205
      %p207 = scmp.eq.s32.totalorder %s29, 0
      %p208 = por %p206, %p207
      %s210 = sadd.s32 %s209, 1
      %p213 = scmp.eq.s32.totalorder %s23, 1
      %p214 = scmp.ne.s32.totalorder %s209, %s211
      %p215 = scmp.eq.s32.totalorder %s23, 0
      %p216 = por %p214, %p215
      %p217 = scmp.ne.s32.totalorder %s209, %s211
      %p218 = scmp.eq.s32.totalorder %s28, 1
      %p219 = por %p217, %p218
      %p220 = scmp.ne.s32.totalorder %s211, %s212
      %p221 = scmp.eq.s32.totalorder %s28, 0
      %p222 = por %p220, %p221
      %p223 = scmp.ne.s32.totalorder %s211, %s212
      %p224 = scmp.eq.s32.totalorder %s29, 1
      %p225 = por %p223, %p224
      %p227 = scmp.ne.s32.totalorder %s212, %s226
      %p228 = scmp.eq.s32.totalorder %s29, 0
      %p229 = por %p227, %p228
      %s231 = sadd.s32 %s230, 1
      %p234 = scmp.eq.s32.totalorder %s23, 1
      %p235 = scmp.ne.s32.totalorder %s230, %s232
      %p236 = scmp.eq.s32.totalorder %s23, 0
      %p237 = por %p235, %p236
      %p238 = scmp.ne.s32.totalorder %s230, %s232
      %p239 = scmp.eq.s32.totalorder %s28, 1
      %p240 = por %p238, %p239
      %p241 = scmp.ne.s32.totalorder %s232, %s233
      %p242 = scmp.eq.s32.totalorder %s28, 0
      %p243 = por %p241, %p242
      %p244 = scmp.ne.s32.totalorder %s232, %s233
      %p245 = scmp.eq.s32.totalorder %s29, 1
      %p246 = por %p244, %p245
      %p248 = scmp.ne.s32.totalorder %s233, %s247
      %p249 = scmp.eq.s32.totalorder %s29, 0
      %p250 = por %p248, %p249
      %s252 = sadd.s32 %s251, 1
      %p255 = scmp.eq.s32.totalorder %s23, 1
      %p256 = scmp.ne.s32.totalorder %s251, %s253
      %p257 = scmp.eq.s32.totalorder %s23, 0
      %p258 = por %p256, %p257
      %p259 = scmp.ne.s32.totalorder %s251, %s253
      %p260 = scmp.eq.s32.totalorder %s28, 1
      %p261 = por %p259, %p260
      %p262 = scmp.ne.s32.totalorder %s253, %s254
      %p263 = scmp.eq.s32.totalorder %s28, 0
      %p264 = por %p262, %p263
      %p265 = scmp.ne.s32.totalorder %s253, %s254
      %p266 = scmp.eq.s32.totalorder %s29, 1
      %p267 = por %p265, %p266
      %p269 = scmp.ne.s32.totalorder %s254, %s268
      %p270 = scmp.eq.s32.totalorder %s29, 0
      %p271 = por %p269, %p270
      %s273 = sadd.s32 %s272, 1
      %p276 = scmp.eq.s32.totalorder %s23, 1
      %p277 = scmp.ne.s32.totalorder %s272, %s274
      %p278 = scmp.eq.s32.totalorder %s23, 0
      %p279 = por %p277, %p278
      %p280 = scmp.ne.s32.totalorder %s272, %s274
      %p281 = scmp.eq.s32.totalorder %s28, 1
      %p282 = por %p280, %p281
      %p283 = scmp.ne.s32.totalorder %s274, %s275
      %p284 = scmp.eq.s32.totalorder %s28, 0
      %p285 = por %p283, %p284
      %p286 = scmp.ne.s32.totalorder %s274, %s275
      %p287 = scmp.eq.s32.totalorder %s29, 1
      %p288 = por %p286, %p287
      %p290 = scmp.ne.s32.totalorder %s275, %s289
      %p291 = scmp.eq.s32.totalorder %s29, 0
      %p292 = por %p290, %p291
      %s293 = ssub.s32 %s23, %s30
      %p294 = scmp.eq.s32.totalorder %s293, 0
      %s296 = sadd.s32 %s295, 1
      %s297 = scalar_select %p294, %s295, %s296
      %p300 = pneg %p294
      %p301 = scmp.eq.s32.totalorder %s23, 1
      %p302 = por %p300, %p301
      %p303 = scmp.ne.s32.totalorder %s295, %s298
      %p304 = scmp.eq.s32.totalorder %s23, 0
      %p305 = por %p303, %p304
      %p306 = scmp.ne.s32.totalorder %s295, %s298
      %p307 = scmp.eq.s32.totalorder %s28, 1
      %p308 = por %p306, %p307
      %p309 = scmp.ne.s32.totalorder %s298, %s299
      %p310 = scmp.eq.s32.totalorder %s28, 0
      %p311 = por %p309, %p310
      %p312 = scmp.ne.s32.totalorder %s298, %s299
      %p313 = scmp.eq.s32.totalorder %s29, 1
      %p314 = por %p312, %p313
      %p316 = scmp.ne.s32.totalorder %s299, %s315
      %p317 = scmp.eq.s32.totalorder %s29, 0
      %p318 = por %p316, %p317
      %p319 = scmp.le.s32.totalorder 1, %s23
      %p320 = scmp.lt.s32.totalorder %s23, 3
      %p321 = pnand %p319, %p320
      %p322 = pneg %p321
      // Predicated region
      $region9: #{tpu_custom_call.1} parent=5 // pred_check
        _
      $region10: #{tpu_custom_call.1} parent=5 // pred_check_branch
        %324 = sbr.rel (%p321) target = $region12
      $region11: #{tpu_custom_call.1} parent=5 // pred_region
        %s325 = ssub.s32 %s23, 1
        // Predicated region
        $region13: #{tpu_custom_call.1} parent=11 // pred_check
          %p326 = pneg %p44
        $region14: #{tpu_custom_call.1} parent=11 // pred_check_branch
          %328 = sbr.rel (%p326) target = $region16
        $region15: #{tpu_custom_call.1} parent=11 // pred_region
          %s330 = ssub.s32 48, 48
          %331 = vsyncadd [#allocation3], %s330
          %s333 = sshll.u32 [#allocation2], 4
          %s334 = int_to_ptr.vmem [resolvable:$true] %s333
          %336 = dma.hbm_to_vmem [thread:$0]  %s0, 48, %s334, [#allocation3]
        $region16: #{tpu_custom_call.1} parent=11 // pred_fallthru
          _
        // Predicated region
        $region17: #{tpu_custom_call.1} parent=11 // pred_check
          %p337 = pneg %p117
        $region18: #{tpu_custom_call.1} parent=11 // pred_check_branch
          %339 = sbr.rel (%p337) target = $region20
        $region19: #{tpu_custom_call.1} parent=11 // pred_region
          %s341 = ssub.s32 512, 512
          %342 = vsyncadd [#allocation6], %s341
          %s343 = sshll.u32 [#allocation5], 4
          %s344 = int_to_ptr.vmem [resolvable:$true] %s343
          %349 = dma.hbm_to_vmem [thread:$0]  %s3, 512, %s344, [#allocation6], 64, 64, 4
        $region20: #{tpu_custom_call.1} parent=11 // pred_fallthru
          _
        // Predicated region
        $region21: #{tpu_custom_call.1} parent=11 // pred_check
          %p350 = pneg %p138
        $region22: #{tpu_custom_call.1} parent=11 // pred_check_branch
          %352 = sbr.rel (%p350) target = $region24
        $region23: #{tpu_custom_call.1} parent=11 // pred_region
          _
        $region24: #{tpu_custom_call.1} parent=11 // pred_fallthru
          _
        // Predicated region
        $region25: #{tpu_custom_call.1} parent=11 // pred_check
          %p353 = pneg %p159
        $region26: #{tpu_custom_call.1} parent=11 // pred_check_branch
          %355 = sbr.rel (%p353) target = $region28
        $region27: #{tpu_custom_call.1} parent=11 // pred_region
          _
        $region28: #{tpu_custom_call.1} parent=11 // pred_fallthru
          _
        // Predicated region
        $region29: #{tpu_custom_call.1} parent=11 // pred_check
          %p356 = pneg %p180
        $region30: #{tpu_custom_call.1} parent=11 // pred_check_branch
          %358 = sbr.rel (%p356) target = $region32
        $region31: #{tpu_custom_call.1} parent=11 // pred_region
          _
        $region32: #{tpu_custom_call.1} parent=11 // pred_fallthru
          _
        // Predicated region
        $region33: #{tpu_custom_call.1} parent=11 // pred_check
          %p359 = pneg %p201
        $region34: #{tpu_custom_call.1} parent=11 // pred_check_branch
          %361 = sbr.rel (%p359) target = $region36
        $region35: #{tpu_custom_call.1} parent=11 // pred_region
          %s363 = ssub.s32 384, 384
          %364 = vsyncadd [#allocation6], %s363
          %s365 = sshll.u32 [#allocation7], 4
          %s366 = int_to_ptr.vmem [resolvable:$true] %s365
          %371 = dma.hbm_to_vmem [thread:$0]  %s7, 384, %s366, [#allocation6], 192, 192, 12
        $region36: #{tpu_custom_call.1} parent=11 // pred_fallthru
          _
        // Predicated region
        $region37: #{tpu_custom_call.1} parent=11 // pred_check
          %p372 = pneg %p222
        $region38: #{tpu_custom_call.1} parent=11 // pred_check_branch
          %374 = sbr.rel (%p372) target = $region40
        $region39: #{tpu_custom_call.1} parent=11 // pred_region
          _
        $region40: #{tpu_custom_call.1} parent=11 // pred_fallthru
          _
        // Predicated region
        $region41: #{tpu_custom_call.1} parent=11 // pred_check
          %p375 = pneg %p243
        $region42: #{tpu_custom_call.1} parent=11 // pred_check_branch
          %377 = sbr.rel (%p375) target = $region44
        $region43: #{tpu_custom_call.1} parent=11 // pred_region
          _
        $region44: #{tpu_custom_call.1} parent=11 // pred_fallthru
          _
        // Predicated region
        $region45: #{tpu_custom_call.1} parent=11 // pred_check
          %p378 = pneg %p264
        $region46: #{tpu_custom_call.1} parent=11 // pred_check_branch
          %380 = sbr.rel (%p378) target = $region48
        $region47: #{tpu_custom_call.1} parent=11 // pred_region
          _
        $region48: #{tpu_custom_call.1} parent=11 // pred_fallthru
          _
        // Predicated region
        $region49: #{tpu_custom_call.1} parent=11 // pred_check
          %p381 = pneg %p285
        $region50: #{tpu_custom_call.1} parent=11 // pred_check_branch
          %383 = sbr.rel (%p381) target = $region52
        $region51: #{tpu_custom_call.1} parent=11 // pred_region
          _
        $region52: #{tpu_custom_call.1} parent=11 // pred_fallthru
          _
      $region12: #{tpu_custom_call.1} parent=5 // pred_fallthru
        _
      %p384 = scmp.lt.s32.totalorder %s23, 2
      // Predicated region
      $region53: #{tpu_custom_call.1} parent=5 // pred_check
        %p385 = pneg %p384
      $region54: #{tpu_custom_call.1} parent=5 // pred_check_branch
        %387 = sbr.rel (%p385) target = $region56
      $region55: #{tpu_custom_call.1} parent=5 // pred_region
        // Predicated region
        $region57: #{tpu_custom_call.1} parent=55 // pred_check
          %p388 = pneg %p64
        $region58: #{tpu_custom_call.1} parent=55 // pred_check_branch
          %390 = sbr.rel (%p388) target = $region60
        $region59: #{tpu_custom_call.1} parent=55 // pred_region
          %p391 = scmp.lt.s32.totalorder %s23, 1
          %s392 = scalar_select %p391, %s23, 1
          %s393 = smul.addr %s392, 3
          %s394 = smul.addr %s393, 8
          %s395 = scalar_lea.vmem %s1, %s394
        $region60: #{tpu_custom_call.1} parent=55 // pred_fallthru
          _
        // Predicated region
        $region61: #{tpu_custom_call.1} parent=55 // pred_check
          %p396 = pneg %p90
        $region62: #{tpu_custom_call.1} parent=55 // pred_check_branch
          %398 = sbr.rel (%p396) target = $region64
        $region63: #{tpu_custom_call.1} parent=55 // pred_region
          %p399 = scmp.lt.s32.totalorder %s23, 1
          %s400 = scalar_select %p399, %s23, 1
          %s401 = smul.addr %s400, 3
          %s402 = smul.addr %s401, 8
          %s403 = scalar_lea.vmem %s2, %s402
        $region64: #{tpu_custom_call.1} parent=55 // pred_fallthru
          _
      $region56: #{tpu_custom_call.1} parent=5 // pred_fallthru
        _
      %p404 = scmp.le.s32.totalorder 1, %s23
      %p405 = scmp.lt.s32.totalorder %s23, 3
      %p406 = pnand %p404, %p405
      %p407 = pneg %p406
      // Predicated region
      $region65: #{tpu_custom_call.1} parent=5 // pred_check
        _
      $region66: #{tpu_custom_call.1} parent=5 // pred_check_branch
        %409 = sbr.rel (%p406) target = $region68
      $region67: #{tpu_custom_call.1} parent=5 // pred_region
        %s410 = ssub.s32 %s23, 1
        // Predicated region
        $region69: #{tpu_custom_call.1} parent=67 // pred_check
          %p411 = pneg %p44
        $region70: #{tpu_custom_call.1} parent=67 // pred_check_branch
          %413 = sbr.rel (%p411) target = $region72
        $region71: #{tpu_custom_call.1} parent=67 // pred_region
          %414 = dma.done [#allocation3], 48
        $region72: #{tpu_custom_call.1} parent=67 // pred_fallthru
          _
        // Predicated region
        $region73: #{tpu_custom_call.1} parent=67 // pred_check
          %p415 = pneg %p117
        $region74: #{tpu_custom_call.1} parent=67 // pred_check_branch
          %417 = sbr.rel (%p415) target = $region76
        $region75: #{tpu_custom_call.1} parent=67 // pred_region
          %418 = dma.done [#allocation6], 512
        $region76: #{tpu_custom_call.1} parent=67 // pred_fallthru
          _
        // Predicated region
        $region77: #{tpu_custom_call.1} parent=67 // pred_check
          %p419 = pneg %p201
        $region78: #{tpu_custom_call.1} parent=67 // pred_check_branch
          %421 = sbr.rel (%p419) target = $region80
        $region79: #{tpu_custom_call.1} parent=67 // pred_region
          %422 = dma.done [#allocation6], 384
        $region80: #{tpu_custom_call.1} parent=67 // pred_fallthru
          _
        %p423 = pneg %p44
        %p424 = pneg %p41
        %p425 = scmp.lt.s32.totalorder %s28, 1
        %s426 = scalar_select %p425, %s28, 1
        %s427 = smul.addr %s426, 3
        %s428 = smul.addr %s427, 8
        %s429 = scalar_lea.vmem %s1, %s428
        %p430 = pneg %p70
        %p431 = pneg %p67
        %p432 = scmp.lt.s32.totalorder %s28, 1
        %s433 = scalar_select %p432, %s28, 1
        %s434 = smul.addr %s433, 3
        %s435 = smul.addr %s434, 8
        %s436 = scalar_lea.vmem %s2, %s435
        %p437 = pneg %p96
        %p438 = pneg %p93
        %p439 = pneg %p117
        %p440 = pneg %p114
        %p441 = pneg %p138
        %p442 = pneg %p135
        %p443 = pneg %p159
        %p444 = pneg %p156
        %p445 = pneg %p180
        %p446 = pneg %p177
        %p447 = pneg %p201
        %p448 = pneg %p198
        %p449 = pneg %p222
        %p450 = pneg %p219
        %p451 = pneg %p243
        %p452 = pneg %p240
        %p453 = pneg %p264
        %p454 = pneg %p261
        %p455 = pneg %p285
        %p456 = pneg %p282
        %p457 = pneg %p311
        %p458 = pneg %p308
        %s459 = sand.u32 %s298, 1
        %s460 = scalar_lea.sflag [#allocation4], %s459
        %s461 = sand.u32 %s298, 1
        %s462 = smul.addr %s461, 12
        %s463 = scalar_lea.vmem [#allocation8], %s462
        %p464 = scmp.lt.s32.totalorder %s28, 1
        %s465 = scalar_select %p464, %s28, 1
        %s466 = smul.addr %s465, 3
        %s467 = smul.addr %s466, 8
        %s468 = scalar_lea.vmem %s1, %s467
        %p469 = scmp.lt.s32.totalorder %s28, 1
        %s470 = scalar_select %p469, %s28, 1
        %s471 = smul.addr %s470, 3
        %s472 = smul.addr %s471, 8
        %s473 = scalar_lea.vmem %s2, %s472
        %v475 = vld [vmem:[#allocation2] sm:$0x7]
        %v476 = vld [vmem:[%s468] sm:$0xff]
        %v477 = vld [vmem:[%s468 + $0x8] sm:$0xff]
        %v478 = vld [vmem:[%s468 + $0x10] sm:$0xff]
        %v479 = vld [vmem:[%s473] sm:$0xff]
        %v480 = vld [vmem:[%s473 + $0x8] sm:$0xff]
        %v481 = vld [vmem:[%s473 + $0x10] sm:$0xff]
        %v482 = vadd.f32 %v476, %v477
        %v483 = vadd.f32 %v482, %v478
        %484 = vadd.xlane.f32.xlu0 %v483
        %v485 = vpop.xlane.xlu0 %484
        %v486 = vrcp.pop 256.0
        %v487 = vmul.f32 %v485, %v486
        %v488 = vmul.f32 %v476, %v476
        %v489 = vmul.f32 %v477, %v477
        %v490 = vmul.f32 %v478, %v478
        %v491 = vadd.f32 %v488, %v489
        %v492 = vadd.f32 %v491, %v490
        %493 = vadd.xlane.f32.xlu0 %v492
        %v494 = vpop.xlane.xlu0 %493
        %v495 = vmul.f32 %v494, %v486
        %v496 = vmul.f32 %v487, %v487
        %v497 = vsub.f32 %v495, %v496
        %v498 = vmax.f32 %v497, 0.0
        %v499 = vsub.f32 %v476, %v487
        %v500 = vsub.f32 %v477, %v487
        %v501 = vsub.f32 %v478, %v487
        %v502 = vadd.f32 %v498, 1e-05
        %v503 = vrsqrt.pop %v502
        %v504 = vmul.f32 %v499, %v503
        %v505 = vmul.f32 %v500, %v503
        %v506 = vmul.f32 %v501, %v503
        %511 = vrot.lane.b32.xlu0 0.0, 127
        %v512 = vpop.permute.xlu0 %511
        %513 = vrot.lane.b32.xlu0 %v479, 127
        %v514 = vpop.permute.xlu0 %513
        %515 = vrot.lane.b32.xlu0 %v480, 127
        %v516 = vpop.permute.xlu0 %515
        %517 = vrot.lane.b32.xlu0 %v481, 127
        %v518 = vpop.permute.xlu0 %517
        %vm519 = vcmask 1039360
        %v520 = vsel %vm519, %v512, %v514
        %v521 = vsel %vm519, %v514, %v516
        %v522 = vsel %vm519, %v516, %v518
        %527 = vrot.lane.b32.xlu0 0.0, 126
        %v528 = vpop.permute.xlu0 %527
        %529 = vrot.lane.b32.xlu0 %v479, 126
        %v530 = vpop.permute.xlu0 %529
        %531 = vrot.lane.b32.xlu0 %v480, 126
        %v532 = vpop.permute.xlu0 %531
        %533 = vrot.lane.b32.xlu0 %v481, 126
        %v534 = vpop.permute.xlu0 %533
        %vm535 = vcmask 1031168
        %v536 = vsel %vm535, %v528, %v530
        %v537 = vsel %vm535, %v530, %v532
        %v538 = vsel %vm535, %v532, %v534
        %543 = vrot.lane.b32.xlu0 0.0, 110
        %v544 = vpop.permute.xlu0 %543
        %545 = vrot.lane.b32.xlu0 %v479, 110
        %v546 = vpop.permute.xlu0 %545
        %547 = vrot.lane.b32.xlu0 %v480, 110
        %v548 = vpop.permute.xlu0 %547
        %549 = vrot.lane.b32.xlu0 %v481, 110
        %v550 = vpop.permute.xlu0 %549
        %vm551 = vcmask 900096
        %v552 = vsel %vm551, %v544, %v546
        %v553 = vsel %vm551, %v546, %v548
        %v554 = vsel %vm551, %v548, %v550
        %559 = vrot.lane.b32.xlu0 %v479, 109
        %v560 = vpop.permute.xlu0 %559
        %561 = vrot.lane.b32.xlu0 %v480, 109
        %v562 = vpop.permute.xlu0 %561
        %563 = vrot.lane.b32.xlu0 %v481, 109
        %v564 = vpop.permute.xlu0 %563
        %vm565 = vcmask 891904
        %v566 = vsel %vm565, %v560, %v562
        %v567 = vsel %vm565, %v562, %v564
        %572 = vrot.lane.b32.xlu0 %v479, 108
        %v573 = vpop.permute.xlu0 %572
        %574 = vrot.lane.b32.xlu0 %v480, 108
        %v575 = vpop.permute.xlu0 %574
        %576 = vrot.lane.b32.xlu0 %v481, 108
        %v577 = vpop.permute.xlu0 %576
        %578 = vrot.lane.b32.xlu0 0.0, 108
        %v579 = vpop.permute.xlu0 %578
        %vm580 = vcmask 883712
        %v581 = vsel %vm580, %v573, %v575
        %v582 = vsel %vm580, %v575, %v577
        %v583 = vsel %vm580, %v577, %v579
        %588 = vrot.lane.b32.xlu0 %v479, 92
        %v589 = vpop.permute.xlu0 %588
        %590 = vrot.lane.b32.xlu0 %v480, 92
        %v591 = vpop.permute.xlu0 %590
        %592 = vrot.lane.b32.xlu0 %v481, 92
        %v593 = vpop.permute.xlu0 %592
        %594 = vrot.lane.b32.xlu0 0.0, 92
        %v595 = vpop.permute.xlu0 %594
        %vm596 = vcmask 752640
        %v597 = vsel %vm596, %v589, %v591
        %v598 = vsel %vm596, %v591, %v593
        %v599 = vsel %vm596, %v593, %v595
        %604 = vrot.lane.b32.xlu0 %v479, 91
        %v605 = vpop.permute.xlu0 %604
        %606 = vrot.lane.b32.xlu0 %v480, 91
        %v607 = vpop.permute.xlu0 %606
        %608 = vrot.lane.b32.xlu0 %v481, 91
        %v609 = vpop.permute.xlu0 %608
        %610 = vrot.lane.b32.xlu0 0.0, 91
        %v611 = vpop.permute.xlu0 %610
        %vm612 = vcmask 744448
        %v613 = vsel %vm612, %v605, %v607
        %v614 = vsel %vm612, %v607, %v609
        %v615 = vsel %vm612, %v609, %v611
        %620 = vrot.lane.b32.xlu0 %v479, 90
        %v621 = vpop.permute.xlu0 %620
        %622 = vrot.lane.b32.xlu0 %v480, 90
        %v623 = vpop.permute.xlu0 %622
        %624 = vrot.lane.b32.xlu0 %v481, 90
        %v625 = vpop.permute.xlu0 %624
        %626 = vrot.lane.b32.xlu0 0.0, 90
        %v627 = vpop.permute.xlu0 %626
        %vm628 = vcmask 736256
        %v629 = vsel %vm628, %v621, %v623
        %v630 = vsel %vm628, %v623, %v625
        %v631 = vsel %vm628, %v625, %v627
        %v636 = vpack.c.bf16 %v520, 0.0
        %v637 = vpack.c.bf16 %v521, %v479
        %v638 = vpack.c.bf16 %v522, %v480
        %v639 = vpack.c.bf16 %v518, %v481
        %v640 = vpack.c.bf16 %v552, %v536
        %v641 = vpack.c.bf16 %v553, %v537
        %v642 = vpack.c.bf16 %v554, %v538
        %v643 = vpack.c.bf16 %v550, %v534
        %v644 = vpack.c.bf16 %v573, %v560
        %v645 = vpack.c.bf16 %v581, %v566
        %v646 = vpack.c.bf16 %v582, %v567
        %v647 = vpack.c.bf16 %v583, %v564
        %v648 = vpack.c.bf16 %v605, %v589
        %v649 = vpack.c.bf16 %v613, %v597
        %v650 = vpack.c.bf16 %v614, %v598
        %v651 = vpack.c.bf16 %v615, %v599
        %v652 = vpack.c.bf16 %v621, %v621
        %v653 = vpack.c.bf16 %v629, %v629
        %v654 = vpack.c.bf16 %v630, %v630
        %v655 = vpack.c.bf16 %v631, %v631
        %v656 = vld [vmem:[#allocation5] sm:$0xf]
        %v657 = vld [vmem:[#allocation5 + $0x4] sm:$0xf]
        %v658 = vld [vmem:[#allocation5 + $0x8] sm:$0xf]
        %v659 = vld [vmem:[#allocation5 + $0xc] sm:$0xf]
        %v660 = vld [vmem:[#allocation5 + $0x10] sm:$0xf]
        %v661 = vld [vmem:[#allocation5 + $0x14] sm:$0xf]
        %v662 = vld [vmem:[#allocation5 + $0x18] sm:$0xf]
        %v663 = vld [vmem:[#allocation5 + $0x1c] sm:$0xf]
        %v664 = vld [vmem:[%s4] sm:$0xff]
        %v665 = vld [vmem:[%s4 + $0x8] sm:$0xff]
        %v666 = vld [vmem:[%s4 + $0x10] sm:$0xff]
        %v667 = vld [vmem:[%s4 + $0x18] sm:$0xff]
        %v668 = vld [vmem:[%s4 + $0x20] sm:$0xff]
        %v669 = vld [vmem:[%s4 + $0x28] sm:$0xff]
        %v670 = vld [vmem:[%s4 + $0x30] sm:$0xff]
        %v671 = vld [vmem:[%s4 + $0x38] sm:$0xff]
        %673 = vset.pattern.permute.xlu0 0
        %674 = vperm.xlu0 %673, %v664
        %v675 = vpop.permute.xlu0 %674
        %678 = vset.pattern.permute.xlu0 0
        %679 = vperm.xlu0 %678, %v665
        %v680 = vpop.permute.xlu0 %679
        %683 = vset.pattern.permute.xlu0 0
        %684 = vperm.xlu0 %683, %v666
        %v685 = vpop.permute.xlu0 %684
        %688 = vset.pattern.permute.xlu0 0
        %689 = vperm.xlu0 %688, %v667
        %v690 = vpop.permute.xlu0 %689
        %693 = vset.pattern.permute.xlu0 0
        %694 = vperm.xlu0 %693, %v668
        %v695 = vpop.permute.xlu0 %694
        %698 = vset.pattern.permute.xlu0 0
        %699 = vperm.xlu0 %698, %v669
        %v700 = vpop.permute.xlu0 %699
        %703 = vset.pattern.permute.xlu0 0
        %704 = vperm.xlu0 %703, %v670
        %v705 = vpop.permute.xlu0 %704
        %708 = vset.pattern.permute.xlu0 0
        %709 = vperm.xlu0 %708, %v671
        %v710 = vpop.permute.xlu0 %709
        %v720 = vunpack.c.l.b16 %v656
        %v721 = vunpack.c.l.b16 %v657
        %v722 = vunpack.c.l.b16 %v658
        %v723 = vunpack.c.l.b16 %v659
        %v724 = vunpack.c.l.b16 %v660
        %v725 = vunpack.c.l.b16 %v661
        %v726 = vunpack.c.l.b16 %v662
        %v727 = vunpack.c.l.b16 %v663
        %v728 = vpack.c.b16 %v721, %v720
        %v729 = vpack.c.b16 %v723, %v722
        %v730 = vpack.c.b16 %v725, %v724
        %v731 = vpack.c.b16 %v727, %v726
        %752 = vrot.lane.b32.xlu0 %v636, 19
        %v753 = vpop.permute.xlu0 %752
        %754 = vrot.lane.b32.xlu0 %v637, 19
        %v755 = vpop.permute.xlu0 %754
        %756 = vrot.lane.b32.xlu0 %v638, 19
        %v757 = vpop.permute.xlu0 %756
        %758 = vrot.lane.b32.xlu0 %v639, 19
        %v759 = vpop.permute.xlu0 %758
        %760 = vrot.lane.b32.xlu0 %v640, 19
        %v761 = vpop.permute.xlu0 %760
        %762 = vrot.lane.b32.xlu0 %v641, 19
        %v763 = vpop.permute.xlu0 %762
        %764 = vrot.lane.b32.xlu0 %v642, 19
        %v765 = vpop.permute.xlu0 %764
        %766 = vrot.lane.b32.xlu0 %v643, 19
        %v767 = vpop.permute.xlu0 %766
        %768 = vrot.lane.b32.xlu0 %v644, 19
        %v769 = vpop.permute.xlu0 %768
        %770 = vrot.lane.b32.xlu0 %v645, 19
        %v771 = vpop.permute.xlu0 %770
        %772 = vrot.lane.b32.xlu0 %v646, 19
        %v773 = vpop.permute.xlu0 %772
        %774 = vrot.lane.b32.xlu0 %v647, 19
        %v775 = vpop.permute.xlu0 %774
        %776 = vrot.lane.b32.xlu0 %v648, 19
        %v777 = vpop.permute.xlu0 %776
        %778 = vrot.lane.b32.xlu0 %v649, 19
        %v779 = vpop.permute.xlu0 %778
        %780 = vrot.lane.b32.xlu0 %v650, 19
        %v781 = vpop.permute.xlu0 %780
        %782 = vrot.lane.b32.xlu0 %v651, 19
        %v783 = vpop.permute.xlu0 %782
        %784 = vrot.lane.b32.xlu0 %v652, 19
        %v785 = vpop.permute.xlu0 %784
        %786 = vrot.lane.b32.xlu0 %v653, 19
        %v787 = vpop.permute.xlu0 %786
        %788 = vrot.lane.b32.xlu0 %v654, 19
        %v789 = vpop.permute.xlu0 %788
        %790 = vrot.lane.b32.xlu0 %v655, 19
        %v791 = vpop.permute.xlu0 %790
        %vm792 = vcmask 154624
        %v793 = vsel %vm792, %v753, %v755
        %v794 = vsel %vm792, %v755, %v757
        %v795 = vsel %vm792, %v757, %v759
        %v796 = vsel %vm792, %v761, %v763
        %v797 = vsel %vm792, %v763, %v765
        %v798 = vsel %vm792, %v765, %v767
        %v799 = vsel %vm792, %v769, %v771
        %v800 = vsel %vm792, %v771, %v773
        %v801 = vsel %vm792, %v773, %v775
        %v802 = vsel %vm792, %v777, %v779
        %v803 = vsel %vm792, %v779, %v781
        %v804 = vsel %vm792, %v781, %v783
        %v805 = vsel %vm792, %v785, %v787
        %v806 = vsel %vm792, %v787, %v789
        %v807 = vsel %vm792, %v789, %v791
        %vm820 = vcmask 588800
        %v822 = vsel %vm820, %v728, 0
        %v825 = vsel %vm820, %v729, 0
        %v828 = vsel %vm820, %v730, 0
        %v831 = vsel %vm820, %v731, 0
        %vm833 = vcmask 1043456
        %v835 = vsel %vm833, %v805, 0
        %v838 = vsel %vm833, %v806, 0
        %v841 = vsel %vm833, %v807, 0
        %843 = vmatprep.subr.bf16.mxu0 %v794
        %844 = vmatpush1.bf16.msra.mxu0 %v793
        %845 = vmatprep.subr.bf16.mxu0 %v797
        %846 = vmatpush1.bf16.msra.mxu0 %v796
        %847 = vmatprep.subr.bf16.mxu0 %v800
        %848 = vmatpush1.bf16.msra.mxu0 %v799
        %849 = vmatprep.subr.bf16.mxu0 %v803
        %850 = vmatpush1.bf16.msra.mxu0 %v802
        %851 = vmatprep.subr.bf16.mxu0 %v838
        %852 = vmatpush1.bf16.msra.mxu0 %v835
        %853 = vmatprep.subr.bf16.mxu0 0
        %854 = vmatpush1.bf16.msra.mxu0 0
        %855 = vmatprep.subr.bf16.mxu0 0
        %856 = vmatpush1.bf16.msra.mxu0 0
        %857 = vmatprep.subr.bf16.mxu0 0
        %858 = vmatpush1.bf16.msra.mxu0 0
        %859 = vmatprep.subr.bf16.mxu0 0
        %860 = vmatpush1.bf16.msra.mxu0 0
        %861 = vmatprep.subr.bf16.mxu0 0
        %862 = vmatpush1.bf16.msra.mxu0 0
        %863 = vmatprep.subr.bf16.mxu0 0
        %864 = vmatpush1.bf16.msra.mxu0 0
        %865 = vmatprep.subr.bf16.mxu0 0
        %866 = vmatpush1.bf16.msra.mxu0 0
        %867 = vmatprep.subr.bf16.mxu0 0
        %868 = vmatpush1.bf16.msra.mxu0 0
        %869 = vmatprep.subr.bf16.mxu0 0
        %870 = vmatpush1.bf16.msra.mxu0 0
        %871 = vmatprep.subr.bf16.mxu0 0
        %872 = vmatpush1.bf16.msra.mxu0 0
        %873 = vmatprep.subr.bf16.mxu0 0
        %874 = vmatpush1.bf16.msra.mxu0 0
        %875 = vmatprep.mubr.bf16.mxu0 0
        %876 = vmatmul.mubr.bf16.gmra.mrb[0].mxu0 %v822
        %v877 = vpop.f32.mrb[0].mxu0
        %v878 = vadd.f32 %v675, %v877
        %v879 = vpop.f32.mrb[0].mxu0
        %v880 = vadd.f32 %v675, %v879
        %v881 = vpop.f32.mrb[0].mxu0
        %v882 = vadd.f32 %v680, %v881
        %v883 = vpop.f32.mrb[0].mxu0
        %v884 = vadd.f32 %v680, %v883
        %885 = vmatprep.mubr.bf16.mxu0 0
        %886 = vmatmul.mubr.bf16.gmra.mrb[0].mxu0 %v825
        %v887 = vpop.f32.mrb[0].mxu0
        %v888 = vadd.f32 %v685, %v887
        %v889 = vpop.f32.mrb[0].mxu0
        %v890 = vadd.f32 %v685, %v889
        %v891 = vpop.f32.mrb[0].mxu0
        %v892 = vadd.f32 %v690, %v891
        %v893 = vpop.f32.mrb[0].mxu0
        %v894 = vadd.f32 %v690, %v893
        %895 = vmatprep.mubr.bf16.mxu0 0
        %896 = vmatmul.mubr.bf16.gmra.mrb[0].mxu0 %v828
        %v897 = vpop.f32.mrb[0].mxu0
        %v898 = vadd.f32 %v695, %v897
        %v899 = vpop.f32.mrb[0].mxu0
        %v900 = vadd.f32 %v695, %v899
        %v901 = vpop.f32.mrb[0].mxu0
        %v902 = vadd.f32 %v700, %v901
        %v903 = vpop.f32.mrb[0].mxu0
        %v904 = vadd.f32 %v700, %v903
        %905 = vmatprep.mubr.bf16.mxu0 0
        %906 = vmatmul.mubr.bf16.gmra.mrb[0].mxu0 %v831
        %v907 = vpop.f32.mrb[0].mxu0
        %v908 = vadd.f32 %v705, %v907
        %v909 = vpop.f32.mrb[0].mxu0
        %v910 = vadd.f32 %v705, %v909
        %v911 = vpop.f32.mrb[0].mxu0
        %v912 = vadd.f32 %v710, %v911
        %v913 = vpop.f32.mrb[0].mxu0
        %v914 = vadd.f32 %v710, %v913
        %915 = vdwg.mxu0
        %916 = vmatprep.subr.bf16.mxu0 0
        %917 = vmatpush1.bf16.msra.mxu0 %v795
        %918 = vmatprep.subr.bf16.mxu0 0
        %919 = vmatpush1.bf16.msra.mxu0 %v798
        %920 = vmatprep.subr.bf16.mxu0 0
        %921 = vmatpush1.bf16.msra.mxu0 %v801
        %922 = vmatprep.subr.bf16.mxu0 0
        %923 = vmatpush1.bf16.msra.mxu0 %v804
        %924 = vmatprep.subr.bf16.mxu0 0
        %925 = vmatpush1.bf16.msra.mxu0 %v841
        %926 = vmatprep.subr.bf16.mxu0 0
        %927 = vmatpush1.bf16.msra.mxu0 0
        %928 = vmatprep.subr.bf16.mxu0 0
        %929 = vmatpush1.bf16.msra.mxu0 0
        %930 = vmatprep.subr.bf16.mxu0 0
        %931 = vmatpush1.bf16.msra.mxu0 0
        %932 = vmatprep.subr.bf16.mxu0 0
        %933 = vmatpush1.bf16.msra.mxu0 0
        %934 = vmatprep.subr.bf16.mxu0 0
        %935 = vmatpush1.bf16.msra.mxu0 0
        %936 = vmatprep.subr.bf16.mxu0 0
        %937 = vmatpush1.bf16.msra.mxu0 0
        %938 = vmatprep.subr.bf16.mxu0 0
        %939 = vmatpush1.bf16.msra.mxu0 0
        %940 = vmatprep.subr.bf16.mxu0 0
        %941 = vmatpush1.bf16.msra.mxu0 0
        %942 = vmatprep.subr.bf16.mxu0 0
        %943 = vmatpush1.bf16.msra.mxu0 0
        %944 = vmatprep.subr.bf16.mxu0 0
        %945 = vmatpush1.bf16.msra.mxu0 0
        %946 = vmatprep.subr.bf16.mxu0 0
        %947 = vmatpush1.bf16.msra.mxu0 0
        %948 = vmatprep.mubr.bf16.mxu0 0
        %949 = vmatmul.mubr.bf16.gmra.mrb[0].mxu0 %v822
        %v950 = vpop.f32.mrb[0].mxu0
        %v951 = vadd.f32 %v675, %v950
        %v952 = vpop.f32.mrb[0].mxu0
        %v953 = vpop.f32.mrb[0].mxu0
        %v954 = vadd.f32 %v680, %v953
        %v955 = vpop.f32.mrb[0].mxu0
        %956 = vmatprep.mubr.bf16.mxu0 0
        %957 = vmatmul.mubr.bf16.gmra.mrb[0].mxu0 %v825
        %v958 = vpop.f32.mrb[0].mxu0
        %v959 = vadd.f32 %v685, %v958
        %v960 = vpop.f32.mrb[0].mxu0
        %v961 = vpop.f32.mrb[0].mxu0
        %v962 = vadd.f32 %v690, %v961
        %v963 = vpop.f32.mrb[0].mxu0
        %964 = vmatprep.mubr.bf16.mxu0 0
        %965 = vmatmul.mubr.bf16.gmra.mrb[0].mxu0 %v828
        %v966 = vpop.f32.mrb[0].mxu0
        %v967 = vadd.f32 %v695, %v966
        %v968 = vpop.f32.mrb[0].mxu0
        %v969 = vpop.f32.mrb[0].mxu0
        %v970 = vadd.f32 %v700, %v969
        %v971 = vpop.f32.mrb[0].mxu0
        %972 = vmatprep.mubr.bf16.mxu0 0
        %973 = vmatmul.mubr.bf16.gmra.mrb[0].mxu0 %v831
        %v974 = vpop.f32.mrb[0].mxu0
        %v975 = vadd.f32 %v705, %v974
        %v976 = vpop.f32.mrb[0].mxu0
        %v977 = vpop.f32.mrb[0].mxu0
        %v978 = vadd.f32 %v710, %v977
        %v979 = vpop.f32.mrb[0].mxu0
        %980 = vdwg.mxu0
        %v981 = vmax.f32 %v878, 0.0
        %v982 = vmax.f32 %v880, 0.0
        %v983 = vmax.f32 %v951, 0.0
        %v984 = vmax.f32 %v882, 0.0
        %v985 = vmax.f32 %v884, 0.0
        %v986 = vmax.f32 %v954, 0.0
        %v987 = vmax.f32 %v888, 0.0
        %v988 = vmax.f32 %v890, 0.0
        %v989 = vmax.f32 %v959, 0.0
        %v990 = vmax.f32 %v892, 0.0
        %v991 = vmax.f32 %v894, 0.0
        %v992 = vmax.f32 %v962, 0.0
        %v993 = vmax.f32 %v898, 0.0
        %v994 = vmax.f32 %v900, 0.0
        %v995 = vmax.f32 %v967, 0.0
        %v996 = vmax.f32 %v902, 0.0
        %v997 = vmax.f32 %v904, 0.0
        %v998 = vmax.f32 %v970, 0.0
        %v999 = vmax.f32 %v908, 0.0
        %v1000 = vmax.f32 %v910, 0.0
        %v1001 = vmax.f32 %v975, 0.0
        %v1002 = vmax.f32 %v912, 0.0
        %v1003 = vmax.f32 %v914, 0.0
        %v1004 = vmax.f32 %v978, 0.0
        %v1006 = vlaneseq
        %v1007 = vshrl.u32 %v1006, 7
        %v1008 = vsub.s32 0, %v1007
        %v1009 = vrot.slane %v475, %v1008
        %v1010 = vlaneseq
        %v1011 = vshrl.u32 %v1010, 7
        %v1012 = vsub.s32 1, %v1011
        %v1013 = vrot.slane %v475, %v1012
        %v1014 = vlaneseq
        %v1015 = vshrl.u32 %v1014, 7
        %v1016 = vsub.s32 2, %v1015
        %v1017 = vrot.slane %v475, %v1016
        %v1021 = vmul.f32 %v981, %v1009
        %v1022 = vmul.f32 %v982, %v1013
        %v1023 = vmul.f32 %v983, %v1017
        %v1024 = vmul.f32 %v984, %v1009
        %v1025 = vmul.f32 %v985, %v1013
        %v1026 = vmul.f32 %v986, %v1017
        %v1027 = vmul.f32 %v987, %v1009
        %v1028 = vmul.f32 %v988, %v1013
        %v1029 = vmul.f32 %v989, %v1017
        %v1030 = vmul.f32 %v990, %v1009
        %v1031 = vmul.f32 %v991, %v1013
        %v1032 = vmul.f32 %v992, %v1017
        %v1033 = vmul.f32 %v993, %v1009
        %v1034 = vmul.f32 %v994, %v1013
        %v1035 = vmul.f32 %v995, %v1017
        %v1036 = vmul.f32 %v996, %v1009
        %v1037 = vmul.f32 %v997, %v1013
        %v1038 = vmul.f32 %v998, %v1017
        %v1039 = vmul.f32 %v999, %v1009
        %v1040 = vmul.f32 %v1000, %v1013
        %v1041 = vmul.f32 %v1001, %v1017
        %v1042 = vmul.f32 %v1002, %v1009
        %v1043 = vmul.f32 %v1003, %v1013
        %v1044 = vmul.f32 %v1004, %v1017
        %1057 = vrot.lane.b32.xlu0 %v1033, 127
        %v1058 = vpop.permute.xlu0 %1057
        %1059 = vrot.lane.b32.xlu0 %v1034, 127
        %v1060 = vpop.permute.xlu0 %1059
        %1061 = vrot.lane.b32.xlu0 %v1035, 127
        %v1062 = vpop.permute.xlu0 %1061
        %1063 = vrot.lane.b32.xlu0 %v1036, 127
        %v1064 = vpop.permute.xlu0 %1063
        %1065 = vrot.lane.b32.xlu0 %v1037, 127
        %v1066 = vpop.permute.xlu0 %1065
        %1067 = vrot.lane.b32.xlu0 %v1038, 127
        %v1068 = vpop.permute.xlu0 %1067
        %1069 = vrot.lane.b32.xlu0 %v1039, 127
        %v1070 = vpop.permute.xlu0 %1069
        %1071 = vrot.lane.b32.xlu0 %v1040, 127
        %v1072 = vpop.permute.xlu0 %1071
        %1073 = vrot.lane.b32.xlu0 %v1041, 127
        %v1074 = vpop.permute.xlu0 %1073
        %1075 = vrot.lane.b32.xlu0 %v1042, 127
        %v1076 = vpop.permute.xlu0 %1075
        %1077 = vrot.lane.b32.xlu0 %v1043, 127
        %v1078 = vpop.permute.xlu0 %1077
        %1079 = vrot.lane.b32.xlu0 %v1044, 127
        %v1080 = vpop.permute.xlu0 %1079
        %v1081 = vsel %vm519, %v512, %v1058
        %v1082 = vsel %vm519, %v1058, %v1060
        %v1083 = vsel %vm519, %v1060, %v1062
        %v1084 = vsel %vm519, %v512, %v1064
        %v1085 = vsel %vm519, %v1064, %v1066
        %v1086 = vsel %vm519, %v1066, %v1068
        %v1087 = vsel %vm519, %v512, %v1070
        %v1088 = vsel %vm519, %v1070, %v1072
        %v1089 = vsel %vm519, %v1072, %v1074
        %v1090 = vsel %vm519, %v512, %v1076
        %v1091 = vsel %vm519, %v1076, %v1078
        %v1092 = vsel %vm519, %v1078, %v1080
        %1109 = vrot.lane.b32.xlu0 %v1033, 126
        %v1110 = vpop.permute.xlu0 %1109
        %1111 = vrot.lane.b32.xlu0 %v1034, 126
        %v1112 = vpop.permute.xlu0 %1111
        %1113 = vrot.lane.b32.xlu0 %v1035, 126
        %v1114 = vpop.permute.xlu0 %1113
        %1115 = vrot.lane.b32.xlu0 %v1036, 126
        %v1116 = vpop.permute.xlu0 %1115
        %1117 = vrot.lane.b32.xlu0 %v1037, 126
        %v1118 = vpop.permute.xlu0 %1117
        %1119 = vrot.lane.b32.xlu0 %v1038, 126
        %v1120 = vpop.permute.xlu0 %1119
        %1121 = vrot.lane.b32.xlu0 %v1039, 126
        %v1122 = vpop.permute.xlu0 %1121
        %1123 = vrot.lane.b32.xlu0 %v1040, 126
        %v1124 = vpop.permute.xlu0 %1123
        %1125 = vrot.lane.b32.xlu0 %v1041, 126
        %v1126 = vpop.permute.xlu0 %1125
        %1127 = vrot.lane.b32.xlu0 %v1042, 126
        %v1128 = vpop.permute.xlu0 %1127
        %1129 = vrot.lane.b32.xlu0 %v1043, 126
        %v1130 = vpop.permute.xlu0 %1129
        %1131 = vrot.lane.b32.xlu0 %v1044, 126
        %v1132 = vpop.permute.xlu0 %1131
        %v1133 = vsel %vm535, %v528, %v1110
        %v1134 = vsel %vm535, %v1110, %v1112
        %v1135 = vsel %vm535, %v1112, %v1114
        %v1136 = vsel %vm535, %v528, %v1116
        %v1137 = vsel %vm535, %v1116, %v1118
        %v1138 = vsel %vm535, %v1118, %v1120
        %v1139 = vsel %vm535, %v528, %v1122
        %v1140 = vsel %vm535, %v1122, %v1124
        %v1141 = vsel %vm535, %v1124, %v1126
        %v1142 = vsel %vm535, %v528, %v1128
        %v1143 = vsel %vm535, %v1128, %v1130
        %v1144 = vsel %vm535, %v1130, %v1132
        %1161 = vrot.lane.b32.xlu0 %v1033, 110
        %v1162 = vpop.permute.xlu0 %1161
        %1163 = vrot.lane.b32.xlu0 %v1034, 110
        %v1164 = vpop.permute.xlu0 %1163
        %1165 = vrot.lane.b32.xlu0 %v1035, 110
        %v1166 = vpop.permute.xlu0 %1165
        %1167 = vrot.lane.b32.xlu0 %v1036, 110
        %v1168 = vpop.permute.xlu0 %1167
        %1169 = vrot.lane.b32.xlu0 %v1037, 110
        %v1170 = vpop.permute.xlu0 %1169
        %1171 = vrot.lane.b32.xlu0 %v1038, 110
        %v1172 = vpop.permute.xlu0 %1171
        %1173 = vrot.lane.b32.xlu0 %v1039, 110
        %v1174 = vpop.permute.xlu0 %1173
        %1175 = vrot.lane.b32.xlu0 %v1040, 110
        %v1176 = vpop.permute.xlu0 %1175
        %1177 = vrot.lane.b32.xlu0 %v1041, 110
        %v1178 = vpop.permute.xlu0 %1177
        %1179 = vrot.lane.b32.xlu0 %v1042, 110
        %v1180 = vpop.permute.xlu0 %1179
        %1181 = vrot.lane.b32.xlu0 %v1043, 110
        %v1182 = vpop.permute.xlu0 %1181
        %1183 = vrot.lane.b32.xlu0 %v1044, 110
        %v1184 = vpop.permute.xlu0 %1183
        %v1185 = vsel %vm551, %v544, %v1162
        %v1186 = vsel %vm551, %v1162, %v1164
        %v1187 = vsel %vm551, %v1164, %v1166
        %v1188 = vsel %vm551, %v544, %v1168
        %v1189 = vsel %vm551, %v1168, %v1170
        %v1190 = vsel %vm551, %v1170, %v1172
        %v1191 = vsel %vm551, %v544, %v1174
        %v1192 = vsel %vm551, %v1174, %v1176
        %v1193 = vsel %vm551, %v1176, %v1178
        %v1194 = vsel %vm551, %v544, %v1180
        %v1195 = vsel %vm551, %v1180, %v1182
        %v1196 = vsel %vm551, %v1182, %v1184
        %1213 = vrot.lane.b32.xlu0 %v1033, 109
        %v1214 = vpop.permute.xlu0 %1213
        %1215 = vrot.lane.b32.xlu0 %v1034, 109
        %v1216 = vpop.permute.xlu0 %1215
        %1217 = vrot.lane.b32.xlu0 %v1035, 109
        %v1218 = vpop.permute.xlu0 %1217
        %1219 = vrot.lane.b32.xlu0 %v1036, 109
        %v1220 = vpop.permute.xlu0 %1219
        %1221 = vrot.lane.b32.xlu0 %v1037, 109
        %v1222 = vpop.permute.xlu0 %1221
        %1223 = vrot.lane.b32.xlu0 %v1038, 109
        %v1224 = vpop.permute.xlu0 %1223
        %1225 = vrot.lane.b32.xlu0 %v1039, 109
        %v1226 = vpop.permute.xlu0 %1225
        %1227 = vrot.lane.b32.xlu0 %v1040, 109
        %v1228 = vpop.permute.xlu0 %1227
        %1229 = vrot.lane.b32.xlu0 %v1041, 109
        %v1230 = vpop.permute.xlu0 %1229
        %1231 = vrot.lane.b32.xlu0 %v1042, 109
        %v1232 = vpop.permute.xlu0 %1231
        %1233 = vrot.lane.b32.xlu0 %v1043, 109
        %v1234 = vpop.permute.xlu0 %1233
        %1235 = vrot.lane.b32.xlu0 %v1044, 109
        %v1236 = vpop.permute.xlu0 %1235
        %v1237 = vsel %vm565, %v1214, %v1216
        %v1238 = vsel %vm565, %v1216, %v1218
        %v1239 = vsel %vm565, %v1220, %v1222
        %v1240 = vsel %vm565, %v1222, %v1224
        %v1241 = vsel %vm565, %v1226, %v1228
        %v1242 = vsel %vm565, %v1228, %v1230
        %v1243 = vsel %vm565, %v1232, %v1234
        %v1244 = vsel %vm565, %v1234, %v1236
        %1261 = vrot.lane.b32.xlu0 %v1033, 108
        %v1262 = vpop.permute.xlu0 %1261
        %1263 = vrot.lane.b32.xlu0 %v1034, 108
        %v1264 = vpop.permute.xlu0 %1263
        %1265 = vrot.lane.b32.xlu0 %v1035, 108
        %v1266 = vpop.permute.xlu0 %1265
        %1267 = vrot.lane.b32.xlu0 %v1036, 108
        %v1268 = vpop.permute.xlu0 %1267
        %1269 = vrot.lane.b32.xlu0 %v1037, 108
        %v1270 = vpop.permute.xlu0 %1269
        %1271 = vrot.lane.b32.xlu0 %v1038, 108
        %v1272 = vpop.permute.xlu0 %1271
        %1273 = vrot.lane.b32.xlu0 %v1039, 108
        %v1274 = vpop.permute.xlu0 %1273
        %1275 = vrot.lane.b32.xlu0 %v1040, 108
        %v1276 = vpop.permute.xlu0 %1275
        %1277 = vrot.lane.b32.xlu0 %v1041, 108
        %v1278 = vpop.permute.xlu0 %1277
        %1279 = vrot.lane.b32.xlu0 %v1042, 108
        %v1280 = vpop.permute.xlu0 %1279
        %1281 = vrot.lane.b32.xlu0 %v1043, 108
        %v1282 = vpop.permute.xlu0 %1281
        %1283 = vrot.lane.b32.xlu0 %v1044, 108
        %v1284 = vpop.permute.xlu0 %1283
        %v1285 = vsel %vm580, %v1262, %v1264
        %v1286 = vsel %vm580, %v1264, %v1266
        %v1287 = vsel %vm580, %v1266, %v579
        %v1288 = vsel %vm580, %v1268, %v1270
        %v1289 = vsel %vm580, %v1270, %v1272
        %v1290 = vsel %vm580, %v1272, %v579
        %v1291 = vsel %vm580, %v1274, %v1276
        %v1292 = vsel %vm580, %v1276, %v1278
        %v1293 = vsel %vm580, %v1278, %v579
        %v1294 = vsel %vm580, %v1280, %v1282
        %v1295 = vsel %vm580, %v1282, %v1284
        %v1296 = vsel %vm580, %v1284, %v579
        %1313 = vrot.lane.b32.xlu0 %v1033, 92
        %v1314 = vpop.permute.xlu0 %1313
        %1315 = vrot.lane.b32.xlu0 %v1034, 92
        %v1316 = vpop.permute.xlu0 %1315
        %1317 = vrot.lane.b32.xlu0 %v1035, 92
        %v1318 = vpop.permute.xlu0 %1317
        %1319 = vrot.lane.b32.xlu0 %v1036, 92
        %v1320 = vpop.permute.xlu0 %1319
        %1321 = vrot.lane.b32.xlu0 %v1037, 92
        %v1322 = vpop.permute.xlu0 %1321
        %1323 = vrot.lane.b32.xlu0 %v1038, 92
        %v1324 = vpop.permute.xlu0 %1323
        %1325 = vrot.lane.b32.xlu0 %v1039, 92
        %v1326 = vpop.permute.xlu0 %1325
        %1327 = vrot.lane.b32.xlu0 %v1040, 92
        %v1328 = vpop.permute.xlu0 %1327
        %1329 = vrot.lane.b32.xlu0 %v1041, 92
        %v1330 = vpop.permute.xlu0 %1329
        %1331 = vrot.lane.b32.xlu0 %v1042, 92
        %v1332 = vpop.permute.xlu0 %1331
        %1333 = vrot.lane.b32.xlu0 %v1043, 92
        %v1334 = vpop.permute.xlu0 %1333
        %1335 = vrot.lane.b32.xlu0 %v1044, 92
        %v1336 = vpop.permute.xlu0 %1335
        %v1337 = vsel %vm596, %v1314, %v1316
        %v1338 = vsel %vm596, %v1316, %v1318
        %v1339 = vsel %vm596, %v1318, %v595
        %v1340 = vsel %vm596, %v1320, %v1322
        %v1341 = vsel %vm596, %v1322, %v1324
        %v1342 = vsel %vm596, %v1324, %v595
        %v1343 = vsel %vm596, %v1326, %v1328
        %v1344 = vsel %vm596, %v1328, %v1330
        %v1345 = vsel %vm596, %v1330, %v595
        %v1346 = vsel %vm596, %v1332, %v1334
        %v1347 = vsel %vm596, %v1334, %v1336
        %v1348 = vsel %vm596, %v1336, %v595
        %1365 = vrot.lane.b32.xlu0 %v1033, 91
        %v1366 = vpop.permute.xlu0 %1365
        %1367 = vrot.lane.b32.xlu0 %v1034, 91
        %v1368 = vpop.permute.xlu0 %1367
        %1369 = vrot.lane.b32.xlu0 %v1035, 91
        %v1370 = vpop.permute.xlu0 %1369
        %1371 = vrot.lane.b32.xlu0 %v1036, 91
        %v1372 = vpop.permute.xlu0 %1371
        %1373 = vrot.lane.b32.xlu0 %v1037, 91
        %v1374 = vpop.permute.xlu0 %1373
        %1375 = vrot.lane.b32.xlu0 %v1038, 91
        %v1376 = vpop.permute.xlu0 %1375
        %1377 = vrot.lane.b32.xlu0 %v1039, 91
        %v1378 = vpop.permute.xlu0 %1377
        %1379 = vrot.lane.b32.xlu0 %v1040, 91
        %v1380 = vpop.permute.xlu0 %1379
        %1381 = vrot.lane.b32.xlu0 %v1041, 91
        %v1382 = vpop.permute.xlu0 %1381
        %1383 = vrot.lane.b32.xlu0 %v1042, 91
        %v1384 = vpop.permute.xlu0 %1383
        %1385 = vrot.lane.b32.xlu0 %v1043, 91
        %v1386 = vpop.permute.xlu0 %1385
        %1387 = vrot.lane.b32.xlu0 %v1044, 91
        %v1388 = vpop.permute.xlu0 %1387
        %v1389 = vsel %vm612, %v1366, %v1368
        %v1390 = vsel %vm612, %v1368, %v1370
        %v1391 = vsel %vm612, %v1370, %v611
        %v1392 = vsel %vm612, %v1372, %v1374
        %v1393 = vsel %vm612, %v1374, %v1376
        %v1394 = vsel %vm612, %v1376, %v611
        %v1395 = vsel %vm612, %v1378, %v1380
        %v1396 = vsel %vm612, %v1380, %v1382
        %v1397 = vsel %vm612, %v1382, %v611
        %v1398 = vsel %vm612, %v1384, %v1386
        %v1399 = vsel %vm612, %v1386, %v1388
        %v1400 = vsel %vm612, %v1388, %v611
        %1417 = vrot.lane.b32.xlu0 %v1033, 90
        %v1418 = vpop.permute.xlu0 %1417
        %1419 = vrot.lane.b32.xlu0 %v1034, 90
        %v1420 = vpop.permute.xlu0 %1419
        %1421 = vrot.lane.b32.xlu0 %v1035, 90
        %v1422 = vpop.permute.xlu0 %1421
        %1423 = vrot.lane.b32.xlu0 %v1036, 90
        %v1424 = vpop.permute.xlu0 %1423
        %1425 = vrot.lane.b32.xlu0 %v1037, 90
        %v1426 = vpop.permute.xlu0 %1425
        %1427 = vrot.lane.b32.xlu0 %v1038, 90
        %v1428 = vpop.permute.xlu0 %1427
        %1429 = vrot.lane.b32.xlu0 %v1039, 90
        %v1430 = vpop.permute.xlu0 %1429
        %1431 = vrot.lane.b32.xlu0 %v1040, 90
        %v1432 = vpop.permute.xlu0 %1431
        %1433 = vrot.lane.b32.xlu0 %v1041, 90
        %v1434 = vpop.permute.xlu0 %1433
        %1435 = vrot.lane.b32.xlu0 %v1042, 90
        %v1436 = vpop.permute.xlu0 %1435
        %1437 = vrot.lane.b32.xlu0 %v1043, 90
        %v1438 = vpop.permute.xlu0 %1437
        %1439 = vrot.lane.b32.xlu0 %v1044, 90
        %v1440 = vpop.permute.xlu0 %1439
        %v1441 = vsel %vm628, %v1418, %v1420
        %v1442 = vsel %vm628, %v1420, %v1422
        %v1443 = vsel %vm628, %v1422, %v627
        %v1444 = vsel %vm628, %v1424, %v1426
        %v1445 = vsel %vm628, %v1426, %v1428
        %v1446 = vsel %vm628, %v1428, %v627
        %v1447 = vsel %vm628, %v1430, %v1432
        %v1448 = vsel %vm628, %v1432, %v1434
        %v1449 = vsel %vm628, %v1434, %v627
        %v1450 = vsel %vm628, %v1436, %v1438
        %v1451 = vsel %vm628, %v1438, %v1440
        %v1452 = vsel %vm628, %v1440, %v627
        %v1469 = vpack.c.bf16 0.0, 0.0
        %v1470 = vpack.c.bf16 %v1036, %v1033
        %v1471 = vpack.c.bf16 %v1037, %v1034
        %v1472 = vpack.c.bf16 %v1038, %v1035
        %v1473 = vpack.c.bf16 %v1042, %v1039
        %v1474 = vpack.c.bf16 %v1043, %v1040
        %v1475 = vpack.c.bf16 %v1044, %v1041
        %v1476 = vpack.c.bf16 %v1084, %v1081
        %v1477 = vpack.c.bf16 %v1085, %v1082
        %v1478 = vpack.c.bf16 %v1086, %v1083
        %v1479 = vpack.c.bf16 %v1068, %v1062
        %v1480 = vpack.c.bf16 %v1090, %v1087
        %v1481 = vpack.c.bf16 %v1091, %v1088
        %v1482 = vpack.c.bf16 %v1092, %v1089
        %v1483 = vpack.c.bf16 %v1080, %v1074
        %v1484 = vpack.c.bf16 %v1136, %v1133
        %v1485 = vpack.c.bf16 %v1137, %v1134
        %v1486 = vpack.c.bf16 %v1138, %v1135
        %v1487 = vpack.c.bf16 %v1120, %v1114
        %v1488 = vpack.c.bf16 %v1142, %v1139
        %v1489 = vpack.c.bf16 %v1143, %v1140
        %v1490 = vpack.c.bf16 %v1144, %v1141
        %v1491 = vpack.c.bf16 %v1132, %v1126
        %v1492 = vpack.c.bf16 %v1188, %v1185
        %v1493 = vpack.c.bf16 %v1189, %v1186
        %v1494 = vpack.c.bf16 %v1190, %v1187
        %v1495 = vpack.c.bf16 %v1172, %v1166
        %v1496 = vpack.c.bf16 %v1194, %v1191
        %v1497 = vpack.c.bf16 %v1195, %v1192
        %v1498 = vpack.c.bf16 %v1196, %v1193
        %v1499 = vpack.c.bf16 %v1184, %v1178
        %v1500 = vpack.c.bf16 %v1220, %v1214
        %v1501 = vpack.c.bf16 %v1239, %v1237
        %v1502 = vpack.c.bf16 %v1240, %v1238
        %v1503 = vpack.c.bf16 %v1224, %v1218
        %v1504 = vpack.c.bf16 %v1232, %v1226
        %v1505 = vpack.c.bf16 %v1243, %v1241
        %v1506 = vpack.c.bf16 %v1244, %v1242
        %v1507 = vpack.c.bf16 %v1236, %v1230
        %v1508 = vpack.c.bf16 %v1268, %v1262
        %v1509 = vpack.c.bf16 %v1288, %v1285
        %v1510 = vpack.c.bf16 %v1289, %v1286
        %v1511 = vpack.c.bf16 %v1290, %v1287
        %v1512 = vpack.c.bf16 %v1280, %v1274
        %v1513 = vpack.c.bf16 %v1294, %v1291
        %v1514 = vpack.c.bf16 %v1295, %v1292
        %v1515 = vpack.c.bf16 %v1296, %v1293
        %v1516 = vpack.c.bf16 %v1320, %v1314
        %v1517 = vpack.c.bf16 %v1340, %v1337
        %v1518 = vpack.c.bf16 %v1341, %v1338
        %v1519 = vpack.c.bf16 %v1342, %v1339
        %v1520 = vpack.c.bf16 %v1332, %v1326
        %v1521 = vpack.c.bf16 %v1346, %v1343
        %v1522 = vpack.c.bf16 %v1347, %v1344
        %v1523 = vpack.c.bf16 %v1348, %v1345
        %v1524 = vpack.c.bf16 %v1372, %v1366
        %v1525 = vpack.c.bf16 %v1392, %v1389
        %v1526 = vpack.c.bf16 %v1393, %v1390
        %v1527 = vpack.c.bf16 %v1394, %v1391
        %v1528 = vpack.c.bf16 %v1384, %v1378
        %v1529 = vpack.c.bf16 %v1398, %v1395
        %v1530 = vpack.c.bf16 %v1399, %v1396
        %v1531 = vpack.c.bf16 %v1400, %v1397
        %v1532 = vpack.c.bf16 %v1424, %v1418
        %v1533 = vpack.c.bf16 %v1444, %v1441
        %v1534 = vpack.c.bf16 %v1445, %v1442
        %v1535 = vpack.c.bf16 %v1446, %v1443
        %v1536 = vpack.c.bf16 %v1436, %v1430
        %v1537 = vpack.c.bf16 %v1450, %v1447
        %v1538 = vpack.c.bf16 %v1451, %v1448
        %v1539 = vpack.c.bf16 %v1452, %v1449
        %v1540 = vld [vmem:[#allocation7] sm:$0xff]
        %v1541 = vld [vmem:[#allocation7 + $0x8] sm:$0xf]
        %v1542 = vld [vmem:[#allocation7 + $0xc] sm:$0xff]
        %v1543 = vld [vmem:[#allocation7 + $0x14] sm:$0xf]
        %v1544 = vld [vmem:[%s8] sm:$0xff]
        %v1545 = vld [vmem:[%s8 + $0x8] sm:$0xff]
        %1547 = vset.pattern.permute.xlu0 0
        %1548 = vperm.xlu0 %1547, %v1544
        %v1549 = vpop.permute.xlu0 %1548
        %1552 = vset.pattern.permute.xlu0 0
        %1553 = vperm.xlu0 %1552, %v1545
        %v1554 = vpop.permute.xlu0 %1553
        %v1560 = vunpack.c.l.b16 %v1540
        %v1561 = vunpack.c.h.b16 %v1540
        %v1562 = vunpack.c.l.b16 %v1541
        %v1563 = vunpack.c.l.b16 %v1542
        %v1564 = vunpack.c.h.b16 %v1542
        %v1565 = vunpack.c.l.b16 %v1543
        %v1566 = vpack.c.b16 %v1563, %v1560
        %v1567 = vpack.c.b16 %v1564, %v1561
        %v1568 = vpack.c.b16 %v1565, %v1562
        %1642 = vrot.lane.b32.xlu0 %v1469, 19
        %v1643 = vpop.permute.xlu0 %1642
        %1644 = vrot.lane.b32.xlu0 %v1470, 19
        %v1645 = vpop.permute.xlu0 %1644
        %1646 = vrot.lane.b32.xlu0 %v1471, 19
        %v1647 = vpop.permute.xlu0 %1646
        %1648 = vrot.lane.b32.xlu0 %v1472, 19
        %v1649 = vpop.permute.xlu0 %1648
        %1650 = vrot.lane.b32.xlu0 %v1473, 19
        %v1651 = vpop.permute.xlu0 %1650
        %1652 = vrot.lane.b32.xlu0 %v1474, 19
        %v1653 = vpop.permute.xlu0 %1652
        %1654 = vrot.lane.b32.xlu0 %v1475, 19
        %v1655 = vpop.permute.xlu0 %1654
        %1656 = vrot.lane.b32.xlu0 %v1476, 19
        %v1657 = vpop.permute.xlu0 %1656
        %1658 = vrot.lane.b32.xlu0 %v1477, 19
        %v1659 = vpop.permute.xlu0 %1658
        %1660 = vrot.lane.b32.xlu0 %v1478, 19
        %v1661 = vpop.permute.xlu0 %1660
        %1662 = vrot.lane.b32.xlu0 %v1479, 19
        %v1663 = vpop.permute.xlu0 %1662
        %1664 = vrot.lane.b32.xlu0 %v1480, 19
        %v1665 = vpop.permute.xlu0 %1664
        %1666 = vrot.lane.b32.xlu0 %v1481, 19
        %v1667 = vpop.permute.xlu0 %1666
        %1668 = vrot.lane.b32.xlu0 %v1482, 19
        %v1669 = vpop.permute.xlu0 %1668
        %1670 = vrot.lane.b32.xlu0 %v1483, 19
        %v1671 = vpop.permute.xlu0 %1670
        %1672 = vrot.lane.b32.xlu0 %v1484, 19
        %v1673 = vpop.permute.xlu0 %1672
        %1674 = vrot.lane.b32.xlu0 %v1485, 19
        %v1675 = vpop.permute.xlu0 %1674
        %1676 = vrot.lane.b32.xlu0 %v1486, 19
        %v1677 = vpop.permute.xlu0 %1676
        %1678 = vrot.lane.b32.xlu0 %v1487, 19
        %v1679 = vpop.permute.xlu0 %1678
        %1680 = vrot.lane.b32.xlu0 %v1488, 19
        %v1681 = vpop.permute.xlu0 %1680
        %1682 = vrot.lane.b32.xlu0 %v1489, 19
        %v1683 = vpop.permute.xlu0 %1682
        %1684 = vrot.lane.b32.xlu0 %v1490, 19
        %v1685 = vpop.permute.xlu0 %1684
        %1686 = vrot.lane.b32.xlu0 %v1491, 19
        %v1687 = vpop.permute.xlu0 %1686
        %1688 = vrot.lane.b32.xlu0 %v1492, 19
        %v1689 = vpop.permute.xlu0 %1688
        %1690 = vrot.lane.b32.xlu0 %v1493, 19
        %v1691 = vpop.permute.xlu0 %1690
        %1692 = vrot.lane.b32.xlu0 %v1494, 19
        %v1693 = vpop.permute.xlu0 %1692
        %1694 = vrot.lane.b32.xlu0 %v1495, 19
        %v1695 = vpop.permute.xlu0 %1694
        %1696 = vrot.lane.b32.xlu0 %v1496, 19
        %v1697 = vpop.permute.xlu0 %1696
        %1698 = vrot.lane.b32.xlu0 %v1497, 19
        %v1699 = vpop.permute.xlu0 %1698
        %1700 = vrot.lane.b32.xlu0 %v1498, 19
        %v1701 = vpop.permute.xlu0 %1700
        %1702 = vrot.lane.b32.xlu0 %v1499, 19
        %v1703 = vpop.permute.xlu0 %1702
        %1704 = vrot.lane.b32.xlu0 %v1500, 19
        %v1705 = vpop.permute.xlu0 %1704
        %1706 = vrot.lane.b32.xlu0 %v1501, 19
        %v1707 = vpop.permute.xlu0 %1706
        %1708 = vrot.lane.b32.xlu0 %v1502, 19
        %v1709 = vpop.permute.xlu0 %1708
        %1710 = vrot.lane.b32.xlu0 %v1503, 19
        %v1711 = vpop.permute.xlu0 %1710
        %1712 = vrot.lane.b32.xlu0 %v1504, 19
        %v1713 = vpop.permute.xlu0 %1712
        %1714 = vrot.lane.b32.xlu0 %v1505, 19
        %v1715 = vpop.permute.xlu0 %1714
        %1716 = vrot.lane.b32.xlu0 %v1506, 19
        %v1717 = vpop.permute.xlu0 %1716
        %1718 = vrot.lane.b32.xlu0 %v1507, 19
        %v1719 = vpop.permute.xlu0 %1718
        %1720 = vrot.lane.b32.xlu0 %v1508, 19
        %v1721 = vpop.permute.xlu0 %1720
        %1722 = vrot.lane.b32.xlu0 %v1509, 19
        %v1723 = vpop.permute.xlu0 %1722
        %1724 = vrot.lane.b32.xlu0 %v1510, 19
        %v1725 = vpop.permute.xlu0 %1724
        %1726 = vrot.lane.b32.xlu0 %v1511, 19
        %v1727 = vpop.permute.xlu0 %1726
        %1728 = vrot.lane.b32.xlu0 %v1512, 19
        %v1729 = vpop.permute.xlu0 %1728
        %1730 = vrot.lane.b32.xlu0 %v1513, 19
        %v1731 = vpop.permute.xlu0 %1730
        %1732 = vrot.lane.b32.xlu0 %v1514, 19
        %v1733 = vpop.permute.xlu0 %1732
        %1734 = vrot.lane.b32.xlu0 %v1515, 19
        %v1735 = vpop.permute.xlu0 %1734
        %1736 = vrot.lane.b32.xlu0 %v1516, 19
        %v1737 = vpop.permute.xlu0 %1736
        %1738 = vrot.lane.b32.xlu0 %v1517, 19
        %v1739 = vpop.permute.xlu0 %1738
        %1740 = vrot.lane.b32.xlu0 %v1518, 19
        %v1741 = vpop.permute.xlu0 %1740
        %1742 = vrot.lane.b32.xlu0 %v1519, 19
        %v1743 = vpop.permute.xlu0 %1742
        %1744 = vrot.lane.b32.xlu0 %v1520, 19
        %v1745 = vpop.permute.xlu0 %1744
        %1746 = vrot.lane.b32.xlu0 %v1521, 19
        %v1747 = vpop.permute.xlu0 %1746
        %1748 = vrot.lane.b32.xlu0 %v1522, 19
        %v1749 = vpop.permute.xlu0 %1748
        %1750 = vrot.lane.b32.xlu0 %v1523, 19
        %v1751 = vpop.permute.xlu0 %1750
        %1752 = vrot.lane.b32.xlu0 %v1524, 19
        %v1753 = vpop.permute.xlu0 %1752
        %1754 = vrot.lane.b32.xlu0 %v1525, 19
        %v1755 = vpop.permute.xlu0 %1754
        %1756 = vrot.lane.b32.xlu0 %v1526, 19
        %v1757 = vpop.permute.xlu0 %1756
        %1758 = vrot.lane.b32.xlu0 %v1527, 19
        %v1759 = vpop.permute.xlu0 %1758
        %1760 = vrot.lane.b32.xlu0 %v1528, 19
        %v1761 = vpop.permute.xlu0 %1760
        %1762 = vrot.lane.b32.xlu0 %v1529, 19
        %v1763 = vpop.permute.xlu0 %1762
        %1764 = vrot.lane.b32.xlu0 %v1530, 19
        %v1765 = vpop.permute.xlu0 %1764
        %1766 = vrot.lane.b32.xlu0 %v1531, 19
        %v1767 = vpop.permute.xlu0 %1766
        %1768 = vrot.lane.b32.xlu0 %v1532, 19
        %v1769 = vpop.permute.xlu0 %1768
        %1770 = vrot.lane.b32.xlu0 %v1533, 19
        %v1771 = vpop.permute.xlu0 %1770
        %1772 = vrot.lane.b32.xlu0 %v1534, 19
        %v1773 = vpop.permute.xlu0 %1772
        %1774 = vrot.lane.b32.xlu0 %v1535, 19
        %v1775 = vpop.permute.xlu0 %1774
        %1776 = vrot.lane.b32.xlu0 %v1536, 19
        %v1777 = vpop.permute.xlu0 %1776
        %1778 = vrot.lane.b32.xlu0 %v1537, 19
        %v1779 = vpop.permute.xlu0 %1778
        %1780 = vrot.lane.b32.xlu0 %v1538, 19
        %v1781 = vpop.permute.xlu0 %1780
        %1782 = vrot.lane.b32.xlu0 %v1539, 19
        %v1783 = vpop.permute.xlu0 %1782
        %v1784 = vsel %vm792, %v1643, %v1645
        %v1785 = vsel %vm792, %v1645, %v1647
        %v1786 = vsel %vm792, %v1647, %v1649
        %v1787 = vsel %vm792, %v1643, %v1651
        %v1788 = vsel %vm792, %v1651, %v1653
        %v1789 = vsel %vm792, %v1653, %v1655
        %v1790 = vsel %vm792, %v1657, %v1659
        %v1791 = vsel %vm792, %v1659, %v1661
        %v1792 = vsel %vm792, %v1661, %v1663
        %v1793 = vsel %vm792, %v1665, %v1667
        %v1794 = vsel %vm792, %v1667, %v1669
        %v1795 = vsel %vm792, %v1669, %v1671
        %v1796 = vsel %vm792, %v1673, %v1675
        %v1797 = vsel %vm792, %v1675, %v1677
        %v1798 = vsel %vm792, %v1677, %v1679
        %v1799 = vsel %vm792, %v1681, %v1683
        %v1800 = vsel %vm792, %v1683, %v1685
        %v1801 = vsel %vm792, %v1685, %v1687
        %v1802 = vsel %vm792, %v1689, %v1691
        %v1803 = vsel %vm792, %v1691, %v1693
        %v1804 = vsel %vm792, %v1693, %v1695
        %v1805 = vsel %vm792, %v1697, %v1699
        %v1806 = vsel %vm792, %v1699, %v1701
        %v1807 = vsel %vm792, %v1701, %v1703
        %v1808 = vsel %vm792, %v1705, %v1707
        %v1809 = vsel %vm792, %v1707, %v1709
        %v1810 = vsel %vm792, %v1709, %v1711
        %v1811 = vsel %vm792, %v1713, %v1715
        %v1812 = vsel %vm792, %v1715, %v1717
        %v1813 = vsel %vm792, %v1717, %v1719
        %v1814 = vsel %vm792, %v1721, %v1723
        %v1815 = vsel %vm792, %v1723, %v1725
        %v1816 = vsel %vm792, %v1725, %v1727
        %v1817 = vsel %vm792, %v1729, %v1731
        %v1818 = vsel %vm792, %v1731, %v1733
        %v1819 = vsel %vm792, %v1733, %v1735
        %v1820 = vsel %vm792, %v1737, %v1739
        %v1821 = vsel %vm792, %v1739, %v1741
        %v1822 = vsel %vm792, %v1741, %v1743
        %v1823 = vsel %vm792, %v1745, %v1747
        %v1824 = vsel %vm792, %v1747, %v1749
        %v1825 = vsel %vm792, %v1749, %v1751
        %v1826 = vsel %vm792, %v1753, %v1755
        %v1827 = vsel %vm792, %v1755, %v1757
        %v1828 = vsel %vm792, %v1757, %v1759
        %v1829 = vsel %vm792, %v1761, %v1763
        %v1830 = vsel %vm792, %v1763, %v1765
        %v1831 = vsel %vm792, %v1765, %v1767
        %v1832 = vsel %vm792, %v1769, %v1771
        %v1833 = vsel %vm792, %v1771, %v1773
        %v1834 = vsel %vm792, %v1773, %v1775
        %v1835 = vsel %vm792, %v1777, %v1779
        %v1836 = vsel %vm792, %v1779, %v1781
        %v1837 = vsel %vm792, %v1781, %v1783
        %vm1892 = vcmask 261120
        %v1894 = vsel %vm1892, %v1568, 0
        %1896 = vmatprep.subr.bf16.mxu0 %v1785
        %1897 = vmatpush1.bf16.msra.mxu0 %v1784
        %1898 = vmatprep.subr.bf16.mxu0 %v1788
        %1899 = vmatpush1.bf16.msra.mxu0 %v1787
        %1900 = vmatprep.subr.bf16.mxu0 %v1791
        %1901 = vmatpush1.bf16.msra.mxu0 %v1790
        %1902 = vmatprep.subr.bf16.mxu0 %v1794
        %1903 = vmatpush1.bf16.msra.mxu0 %v1793
        %1904 = vmatprep.subr.bf16.mxu0 %v1797
        %1905 = vmatpush1.bf16.msra.mxu0 %v1796
        %1906 = vmatprep.subr.bf16.mxu0 %v1800
        %1907 = vmatpush1.bf16.msra.mxu0 %v1799
        %1908 = vmatprep.subr.bf16.mxu0 %v1803
        %1909 = vmatpush1.bf16.msra.mxu0 %v1802
        %1910 = vmatprep.subr.bf16.mxu0 %v1806
        %1911 = vmatpush1.bf16.msra.mxu0 %v1805
        %1912 = vmatprep.subr.bf16.mxu0 %v1809
        %1913 = vmatpush1.bf16.msra.mxu0 %v1808
        %1914 = vmatprep.subr.bf16.mxu0 %v1812
        %1915 = vmatpush1.bf16.msra.mxu0 %v1811
        %1916 = vmatprep.subr.bf16.mxu0 %v1815
        %1917 = vmatpush1.bf16.msra.mxu0 %v1814
        %1918 = vmatprep.subr.bf16.mxu0 %v1818
        %1919 = vmatpush1.bf16.msra.mxu0 %v1817
        %1920 = vmatprep.subr.bf16.mxu0 %v1821
        %1921 = vmatpush1.bf16.msra.mxu0 %v1820
        %1922 = vmatprep.subr.bf16.mxu0 %v1824
        %1923 = vmatpush1.bf16.msra.mxu0 %v1823
        %1924 = vmatprep.subr.bf16.mxu0 %v1827
        %1925 = vmatpush1.bf16.msra.mxu0 %v1826
        %1926 = vmatprep.subr.bf16.mxu0 %v1830
        %1927 = vmatpush1.bf16.msra.mxu0 %v1829
        %1928 = vmatprep.mubr.bf16.mxu0 %v1567
        %1929 = vmatmul.mubr.bf16.gmra.mrb[0].mxu0 %v1566
        %v1930 = vpop.f32.mrb[0].mxu0
        %v1931 = vadd.f32 %v1549, %v1930
        %v1932 = vpop.f32.mrb[0].mxu0
        %v1933 = vadd.f32 %v1549, %v1932
        %v1934 = vpop.f32.mrb[0].mxu0
        %v1935 = vadd.f32 %v1554, %v1934
        %v1936 = vpop.f32.mrb[0].mxu0
        %v1937 = vadd.f32 %v1554, %v1936
        %1938 = vdwg.mxu0
        %1939 = vmatprep.subr.bf16.mxu0 %v1833
        %1940 = vmatpush1.bf16.msra.mxu0 %v1832
        %1941 = vmatprep.subr.bf16.mxu0 %v1836
        %1942 = vmatpush1.bf16.msra.mxu0 %v1835
        %1943 = vmatprep.subr.bf16.mxu0 0
        %1944 = vmatpush1.bf16.msra.mxu0 0
        %1945 = vmatprep.subr.bf16.mxu0 0
        %1946 = vmatpush1.bf16.msra.mxu0 0
        %1947 = vmatprep.subr.bf16.mxu0 0
        %1948 = vmatpush1.bf16.msra.mxu0 0
        %1949 = vmatprep.subr.bf16.mxu0 0
        %1950 = vmatpush1.bf16.msra.mxu0 0
        %1951 = vmatprep.subr.bf16.mxu0 0
        %1952 = vmatpush1.bf16.msra.mxu0 0
        %1953 = vmatprep.subr.bf16.mxu0 0
        %1954 = vmatpush1.bf16.msra.mxu0 0
        %1955 = vmatprep.subr.bf16.mxu0 0
        %1956 = vmatpush1.bf16.msra.mxu0 0
        %1957 = vmatprep.subr.bf16.mxu0 0
        %1958 = vmatpush1.bf16.msra.mxu0 0
        %1959 = vmatprep.subr.bf16.mxu0 0
        %1960 = vmatpush1.bf16.msra.mxu0 0
        %1961 = vmatprep.subr.bf16.mxu0 0
        %1962 = vmatpush1.bf16.msra.mxu0 0
        %1963 = vmatprep.subr.bf16.mxu0 0
        %1964 = vmatpush1.bf16.msra.mxu0 0
        %1965 = vmatprep.subr.bf16.mxu0 0
        %1966 = vmatpush1.bf16.msra.mxu0 0
        %1967 = vmatprep.subr.bf16.mxu0 0
        %1968 = vmatpush1.bf16.msra.mxu0 0
        %1969 = vmatprep.subr.bf16.mxu0 0
        %1970 = vmatpush1.bf16.msra.mxu0 0
        %1971 = vmatprep.mubr.bf16.mxu0 0
        %1972 = vmatmul.mubr.bf16.gmra.mrb[0].mxu0 %v1894
        %v1973 = vpop.f32.mrb[0].mxu0
        %v1974 = vadd.f32 %v1931, %v1973
        %v1975 = vpop.f32.mrb[0].mxu0
        %v1976 = vadd.f32 %v1933, %v1975
        %v1977 = vpop.f32.mrb[0].mxu0
        %v1978 = vadd.f32 %v1935, %v1977
        %v1979 = vpop.f32.mrb[0].mxu0
        %v1980 = vadd.f32 %v1937, %v1979
        %1981 = vdwg.mxu0
        %1982 = vmatprep.subr.bf16.mxu0 0
        %1983 = vmatpush1.bf16.msra.mxu0 %v1786
        %1984 = vmatprep.subr.bf16.mxu0 0
        %1985 = vmatpush1.bf16.msra.mxu0 %v1789
        %1986 = vmatprep.subr.bf16.mxu0 0
        %1987 = vmatpush1.bf16.msra.mxu0 %v1792
        %1988 = vmatprep.subr.bf16.mxu0 0
        %1989 = vmatpush1.bf16.msra.mxu0 %v1795
        %1990 = vmatprep.subr.bf16.mxu0 0
        %1991 = vmatpush1.bf16.msra.mxu0 %v1798
        %1992 = vmatprep.subr.bf16.mxu0 0
        %1993 = vmatpush1.bf16.msra.mxu0 %v1801
        %1994 = vmatprep.subr.bf16.mxu0 0
        %1995 = vmatpush1.bf16.msra.mxu0 %v1804
        %1996 = vmatprep.subr.bf16.mxu0 0
        %1997 = vmatpush1.bf16.msra.mxu0 %v1807
        %1998 = vmatprep.subr.bf16.mxu0 0
        %1999 = vmatpush1.bf16.msra.mxu0 %v1810
        %2000 = vmatprep.subr.bf16.mxu0 0
        %2001 = vmatpush1.bf16.msra.mxu0 %v1813
        %2002 = vmatprep.subr.bf16.mxu0 0
        %2003 = vmatpush1.bf16.msra.mxu0 %v1816
        %2004 = vmatprep.subr.bf16.mxu0 0
        %2005 = vmatpush1.bf16.msra.mxu0 %v1819
        %2006 = vmatprep.subr.bf16.mxu0 0
        %2007 = vmatpush1.bf16.msra.mxu0 %v1822
        %2008 = vmatprep.subr.bf16.mxu0 0
        %2009 = vmatpush1.bf16.msra.mxu0 %v1825
        %2010 = vmatprep.subr.bf16.mxu0 0
        %2011 = vmatpush1.bf16.msra.mxu0 %v1828
        %2012 = vmatprep.subr.bf16.mxu0 0
        %2013 = vmatpush1.bf16.msra.mxu0 %v1831
        %2014 = vmatprep.mubr.bf16.mxu0 %v1567
        %2015 = vmatmul.mubr.bf16.gmra.mrb[0].mxu0 %v1566
        %v2016 = vpop.f32.mrb[0].mxu0
        %v2017 = vadd.f32 %v1549, %v2016
        %v2018 = vpop.f32.mrb[0].mxu0
        %v2019 = vpop.f32.mrb[0].mxu0
        %v2020 = vadd.f32 %v1554, %v2019
        %v2021 = vpop.f32.mrb[0].mxu0
        %2022 = vdwg.mxu0
        %2023 = vmatprep.subr.bf16.mxu0 0
        %2024 = vmatpush1.bf16.msra.mxu0 %v1834
        %2025 = vmatprep.subr.bf16.mxu0 0
        %2026 = vmatpush1.bf16.msra.mxu0 %v1837
        %2027 = vmatprep.subr.bf16.mxu0 0
        %2028 = vmatpush1.bf16.msra.mxu0 0
        %2029 = vmatprep.subr.bf16.mxu0 0
        %2030 = vmatpush1.bf16.msra.mxu0 0
        %2031 = vmatprep.subr.bf16.mxu0 0
        %2032 = vmatpush1.bf16.msra.mxu0 0
        %2033 = vmatprep.subr.bf16.mxu0 0
        %2034 = vmatpush1.bf16.msra.mxu0 0
        %2035 = vmatprep.subr.bf16.mxu0 0
        %2036 = vmatpush1.bf16.msra.mxu0 0
        %2037 = vmatprep.subr.bf16.mxu0 0
        %2038 = vmatpush1.bf16.msra.mxu0 0
        %2039 = vmatprep.subr.bf16.mxu0 0
        %2040 = vmatpush1.bf16.msra.mxu0 0
        %2041 = vmatprep.subr.bf16.mxu0 0
        %2042 = vmatpush1.bf16.msra.mxu0 0
        %2043 = vmatprep.subr.bf16.mxu0 0
        %2044 = vmatpush1.bf16.msra.mxu0 0
        %2045 = vmatprep.subr.bf16.mxu0 0
        %2046 = vmatpush1.bf16.msra.mxu0 0
        %2047 = vmatprep.subr.bf16.mxu0 0
        %2048 = vmatpush1.bf16.msra.mxu0 0
        %2049 = vmatprep.subr.bf16.mxu0 0
        %2050 = vmatpush1.bf16.msra.mxu0 0
        %2051 = vmatprep.subr.bf16.mxu0 0
        %2052 = vmatpush1.bf16.msra.mxu0 0
        %2053 = vmatprep.subr.bf16.mxu0 0
        %2054 = vmatpush1.bf16.msra.mxu0 0
        %2055 = vmatprep.mubr.bf16.mxu0 0
        %2056 = vmatmul.mubr.bf16.gmra.mrb[0].mxu0 %v1894
        %v2057 = vpop.f32.mrb[0].mxu0
        %v2058 = vadd.f32 %v2017, %v2057
        %v2059 = vpop.f32.mrb[0].mxu0
        %v2060 = vpop.f32.mrb[0].mxu0
        %v2061 = vadd.f32 %v2020, %v2060
        %v2062 = vpop.f32.mrb[0].mxu0
        %2063 = vdwg.mxu0
        %v2064 = vadd.f32 %v1974, 1.0
        %v2065 = vadd.f32 %v1976, 1.0
        %v2066 = vadd.f32 %v2058, 1.0
        %v2067 = vmul.f32 %v504, %v2064
        %v2068 = vmul.f32 %v505, %v2065
        %v2069 = vmul.f32 %v506, %v2066
        %v2070 = vadd.f32 %v2067, %v1978
        %v2071 = vadd.f32 %v2068, %v1980
        %v2072 = vadd.f32 %v2069, %v2061
        %v2073 = vmul.f32 %v2070, %v1009
        %v2074 = vmul.f32 %v2071, %v1013
        %v2075 = vmul.f32 %v2072, %v1017
        %v2076 = vld [vmem:[%s11] sm:$0x3]
        %v2077 = vpack.c.bf16 %v2073, %v2073
        %v2078 = vpack.c.bf16 %v2074, %v2074
        %v2079 = vpack.c.bf16 %v2075, %v2075
        %vm2080 = vcmask 64512
        %v2082 = vsel %vm2080, %v2076, 0
        %v2085 = vsel %vm833, %v2077, 0
        %v2088 = vsel %vm833, %v2078, 0
        %v2091 = vsel %vm833, %v2079, 0
        %2093 = vmatprep.subr.bf16.mxu0 %v2088
        %2094 = vmatpush1.bf16.msra.mxu0 %v2085
        %2095 = vmatprep.subr.bf16.mxu0 0
        %2096 = vmatpush1.bf16.msra.mxu0 0
        %2097 = vmatprep.subr.bf16.mxu0 0
        %2098 = vmatpush1.bf16.msra.mxu0 0
        %2099 = vmatprep.subr.bf16.mxu0 0
        %2100 = vmatpush1.bf16.msra.mxu0 0
        %2101 = vmatprep.subr.bf16.mxu0 0
        %2102 = vmatpush1.bf16.msra.mxu0 0
        %2103 = vmatprep.subr.bf16.mxu0 0
        %2104 = vmatpush1.bf16.msra.mxu0 0
        %2105 = vmatprep.subr.bf16.mxu0 0
        %2106 = vmatpush1.bf16.msra.mxu0 0
        %2107 = vmatprep.subr.bf16.mxu0 0
        %2108 = vmatpush1.bf16.msra.mxu0 0
        %2109 = vmatprep.subr.bf16.mxu0 0
        %2110 = vmatpush1.bf16.msra.mxu0 0
        %2111 = vmatprep.subr.bf16.mxu0 0
        %2112 = vmatpush1.bf16.msra.mxu0 0
        %2113 = vmatprep.subr.bf16.mxu0 0
        %2114 = vmatpush1.bf16.msra.mxu0 0
        %2115 = vmatprep.subr.bf16.mxu0 0
        %2116 = vmatpush1.bf16.msra.mxu0 0
        %2117 = vmatprep.subr.bf16.mxu0 0
        %2118 = vmatpush1.bf16.msra.mxu0 0
        %2119 = vmatprep.subr.bf16.mxu0 0
        %2120 = vmatpush1.bf16.msra.mxu0 0
        %2121 = vmatprep.subr.bf16.mxu0 0
        %2122 = vmatpush1.bf16.msra.mxu0 0
        %2123 = vmatprep.subr.bf16.mxu0 0
        %2124 = vmatpush1.bf16.msra.mxu0 0
        %2125 = vmatprep.mubr.bf16.mxu0 0
        %2126 = vmatmul.mubr.bf16.gmra.mrb[0].mxu0 %v2082
        %v2127 = vpop.f32.mrb[0].mxu0
        %v2128 = vadd.f32 0.0, %v2127
        %v2129 = vpop.f32.mrb[0].mxu0
        %v2130 = vadd.f32 0.0, %v2129
        %v2131 = vpop.f32.mrb[0].mxu0
        %v2132 = vpop.f32.mrb[0].mxu0
        %2133 = vdwg.mxu0
        %2134 = vmatprep.subr.bf16.mxu0 0
        %2135 = vmatpush1.bf16.msra.mxu0 %v2091
        %2136 = vmatprep.subr.bf16.mxu0 0
        %2137 = vmatpush1.bf16.msra.mxu0 0
        %2138 = vmatprep.subr.bf16.mxu0 0
        %2139 = vmatpush1.bf16.msra.mxu0 0
        %2140 = vmatprep.subr.bf16.mxu0 0
        %2141 = vmatpush1.bf16.msra.mxu0 0
        %2142 = vmatprep.subr.bf16.mxu0 0
        %2143 = vmatpush1.bf16.msra.mxu0 0
        %2144 = vmatprep.subr.bf16.mxu0 0
        %2145 = vmatpush1.bf16.msra.mxu0 0
        %2146 = vmatprep.subr.bf16.mxu0 0
        %2147 = vmatpush1.bf16.msra.mxu0 0
        %2148 = vmatprep.subr.bf16.mxu0 0
        %2149 = vmatpush1.bf16.msra.mxu0 0
        %2150 = vmatprep.subr.bf16.mxu0 0
        %2151 = vmatpush1.bf16.msra.mxu0 0
        %2152 = vmatprep.subr.bf16.mxu0 0
        %2153 = vmatpush1.bf16.msra.mxu0 0
        %2154 = vmatprep.subr.bf16.mxu0 0
        %2155 = vmatpush1.bf16.msra.mxu0 0
        %2156 = vmatprep.subr.bf16.mxu0 0
        %2157 = vmatpush1.bf16.msra.mxu0 0
        %2158 = vmatprep.subr.bf16.mxu0 0
        %2159 = vmatpush1.bf16.msra.mxu0 0
        %2160 = vmatprep.subr.bf16.mxu0 0
        %2161 = vmatpush1.bf16.msra.mxu0 0
        %2162 = vmatprep.subr.bf16.mxu0 0
        %2163 = vmatpush1.bf16.msra.mxu0 0
        %2164 = vmatprep.subr.bf16.mxu0 0
        %2165 = vmatpush1.bf16.msra.mxu0 0
        %2166 = vmatprep.mubr.bf16.mxu0 0
        %2167 = vmatmul.mubr.bf16.gmra.mrb[0].mxu0 %v2082
        %v2168 = vpop.f32.mrb[0].mxu0
        %v2169 = vadd.f32 0.0, %v2168
        %v2170 = vpop.f32.mrb[0].mxu0
        %v2171 = vpop.f32.mrb[0].mxu0
        %v2172 = vpop.f32.mrb[0].mxu0
        %2173 = vdwg.mxu0
        %v2176 = vcombine.low %v2128, %v2130
        %2178 = vst [vmem:[%s463] sm:$0xff] %v2176
        %2179 = vst [vmem:[%s463 + $0x8] sm:$0xf] %v2169
        %2192 = vrot.lane.b32.xlu0 %v1021, 127
        %v2193 = vpop.permute.xlu0 %2192
        %2194 = vrot.lane.b32.xlu0 %v1022, 127
        %v2195 = vpop.permute.xlu0 %2194
        %2196 = vrot.lane.b32.xlu0 %v1023, 127
        %v2197 = vpop.permute.xlu0 %2196
        %2198 = vrot.lane.b32.xlu0 %v1024, 127
        %v2199 = vpop.permute.xlu0 %2198
        %2200 = vrot.lane.b32.xlu0 %v1025, 127
        %v2201 = vpop.permute.xlu0 %2200
        %2202 = vrot.lane.b32.xlu0 %v1026, 127
        %v2203 = vpop.permute.xlu0 %2202
        %2204 = vrot.lane.b32.xlu0 %v1027, 127
        %v2205 = vpop.permute.xlu0 %2204
        %2206 = vrot.lane.b32.xlu0 %v1028, 127
        %v2207 = vpop.permute.xlu0 %2206
        %2208 = vrot.lane.b32.xlu0 %v1029, 127
        %v2209 = vpop.permute.xlu0 %2208
        %2210 = vrot.lane.b32.xlu0 %v1030, 127
        %v2211 = vpop.permute.xlu0 %2210
        %2212 = vrot.lane.b32.xlu0 %v1031, 127
        %v2213 = vpop.permute.xlu0 %2212
        %2214 = vrot.lane.b32.xlu0 %v1032, 127
        %v2215 = vpop.permute.xlu0 %2214
        %v2216 = vsel %vm519, %v512, %v2193
        %v2217 = vsel %vm519, %v2193, %v2195
        %v2218 = vsel %vm519, %v2195, %v2197
        %v2219 = vsel %vm519, %v512, %v2199
        %v2220 = vsel %vm519, %v2199, %v2201
        %v2221 = vsel %vm519, %v2201, %v2203
        %v2222 = vsel %vm519, %v512, %v2205
        %v2223 = vsel %vm519, %v2205, %v2207
        %v2224 = vsel %vm519, %v2207, %v2209
        %v2225 = vsel %vm519, %v512, %v2211
        %v2226 = vsel %vm519, %v2211, %v2213
        %v2227 = vsel %vm519, %v2213, %v2215
        %2244 = vrot.lane.b32.xlu0 %v1021, 126
        %v2245 = vpop.permute.xlu0 %2244
        %2246 = vrot.lane.b32.xlu0 %v1022, 126
        %v2247 = vpop.permute.xlu0 %2246
        %2248 = vrot.lane.b32.xlu0 %v1023, 126
        %v2249 = vpop.permute.xlu0 %2248
        %2250 = vrot.lane.b32.xlu0 %v1024, 126
        %v2251 = vpop.permute.xlu0 %2250
        %2252 = vrot.lane.b32.xlu0 %v1025, 126
        %v2253 = vpop.permute.xlu0 %2252
        %2254 = vrot.lane.b32.xlu0 %v1026, 126
        %v2255 = vpop.permute.xlu0 %2254
        %2256 = vrot.lane.b32.xlu0 %v1027, 126
        %v2257 = vpop.permute.xlu0 %2256
        %2258 = vrot.lane.b32.xlu0 %v1028, 126
        %v2259 = vpop.permute.xlu0 %2258
        %2260 = vrot.lane.b32.xlu0 %v1029, 126
        %v2261 = vpop.permute.xlu0 %2260
        %2262 = vrot.lane.b32.xlu0 %v1030, 126
        %v2263 = vpop.permute.xlu0 %2262
        %2264 = vrot.lane.b32.xlu0 %v1031, 126
        %v2265 = vpop.permute.xlu0 %2264
        %2266 = vrot.lane.b32.xlu0 %v1032, 126
        %v2267 = vpop.permute.xlu0 %2266
        %v2268 = vsel %vm535, %v528, %v2245
        %v2269 = vsel %vm535, %v2245, %v2247
        %v2270 = vsel %vm535, %v2247, %v2249
        %v2271 = vsel %vm535, %v528, %v2251
        %v2272 = vsel %vm535, %v2251, %v2253
        %v2273 = vsel %vm535, %v2253, %v2255
        %v2274 = vsel %vm535, %v528, %v2257
        %v2275 = vsel %vm535, %v2257, %v2259
        %v2276 = vsel %vm535, %v2259, %v2261
        %v2277 = vsel %vm535, %v528, %v2263
        %v2278 = vsel %vm535, %v2263, %v2265
        %v2279 = vsel %vm535, %v2265, %v2267
        %2296 = vrot.lane.b32.xlu0 %v1021, 110
        %v2297 = vpop.permute.xlu0 %2296
        %2298 = vrot.lane.b32.xlu0 %v1022, 110
        %v2299 = vpop.permute.xlu0 %2298
        %2300 = vrot.lane.b32.xlu0 %v1023, 110
        %v2301 = vpop.permute.xlu0 %2300
        %2302 = vrot.lane.b32.xlu0 %v1024, 110
        %v2303 = vpop.permute.xlu0 %2302
        %2304 = vrot.lane.b32.xlu0 %v1025, 110
        %v2305 = vpop.permute.xlu0 %2304
        %2306 = vrot.lane.b32.xlu0 %v1026, 110
        %v2307 = vpop.permute.xlu0 %2306
        %2308 = vrot.lane.b32.xlu0 %v1027, 110
        %v2309 = vpop.permute.xlu0 %2308
        %2310 = vrot.lane.b32.xlu0 %v1028, 110
        %v2311 = vpop.permute.xlu0 %2310
        %2312 = vrot.lane.b32.xlu0 %v1029, 110
        %v2313 = vpop.permute.xlu0 %2312
        %2314 = vrot.lane.b32.xlu0 %v1030, 110
        %v2315 = vpop.permute.xlu0 %2314
        %2316 = vrot.lane.b32.xlu0 %v1031, 110
        %v2317 = vpop.permute.xlu0 %2316
        %2318 = vrot.lane.b32.xlu0 %v1032, 110
        %v2319 = vpop.permute.xlu0 %2318
        %v2320 = vsel %vm551, %v544, %v2297
        %v2321 = vsel %vm551, %v2297, %v2299
        %v2322 = vsel %vm551, %v2299, %v2301
        %v2323 = vsel %vm551, %v544, %v2303
        %v2324 = vsel %vm551, %v2303, %v2305
        %v2325 = vsel %vm551, %v2305, %v2307
        %v2326 = vsel %vm551, %v544, %v2309
        %v2327 = vsel %vm551, %v2309, %v2311
        %v2328 = vsel %vm551, %v2311, %v2313
        %v2329 = vsel %vm551, %v544, %v2315
        %v2330 = vsel %vm551, %v2315, %v2317
        %v2331 = vsel %vm551, %v2317, %v2319
        %2348 = vrot.lane.b32.xlu0 %v1021, 109
        %v2349 = vpop.permute.xlu0 %2348
        %2350 = vrot.lane.b32.xlu0 %v1022, 109
        %v2351 = vpop.permute.xlu0 %2350
        %2352 = vrot.lane.b32.xlu0 %v1023, 109
        %v2353 = vpop.permute.xlu0 %2352
        %2354 = vrot.lane.b32.xlu0 %v1024, 109
        %v2355 = vpop.permute.xlu0 %2354
        %2356 = vrot.lane.b32.xlu0 %v1025, 109
        %v2357 = vpop.permute.xlu0 %2356
        %2358 = vrot.lane.b32.xlu0 %v1026, 109
        %v2359 = vpop.permute.xlu0 %2358
        %2360 = vrot.lane.b32.xlu0 %v1027, 109
        %v2361 = vpop.permute.xlu0 %2360
        %2362 = vrot.lane.b32.xlu0 %v1028, 109
        %v2363 = vpop.permute.xlu0 %2362
        %2364 = vrot.lane.b32.xlu0 %v1029, 109
        %v2365 = vpop.permute.xlu0 %2364
        %2366 = vrot.lane.b32.xlu0 %v1030, 109
        %v2367 = vpop.permute.xlu0 %2366
        %2368 = vrot.lane.b32.xlu0 %v1031, 109
        %v2369 = vpop.permute.xlu0 %2368
        %2370 = vrot.lane.b32.xlu0 %v1032, 109
        %v2371 = vpop.permute.xlu0 %2370
        %v2372 = vsel %vm565, %v2349, %v2351
        %v2373 = vsel %vm565, %v2351, %v2353
        %v2374 = vsel %vm565, %v2355, %v2357
        %v2375 = vsel %vm565, %v2357, %v2359
        %v2376 = vsel %vm565, %v2361, %v2363
        %v2377 = vsel %vm565, %v2363, %v2365
        %v2378 = vsel %vm565, %v2367, %v2369
        %v2379 = vsel %vm565, %v2369, %v2371
        %2396 = vrot.lane.b32.xlu0 %v1021, 108
        %v2397 = vpop.permute.xlu0 %2396
        %2398 = vrot.lane.b32.xlu0 %v1022, 108
        %v2399 = vpop.permute.xlu0 %2398
        %2400 = vrot.lane.b32.xlu0 %v1023, 108
        %v2401 = vpop.permute.xlu0 %2400
        %2402 = vrot.lane.b32.xlu0 %v1024, 108
        %v2403 = vpop.permute.xlu0 %2402
        %2404 = vrot.lane.b32.xlu0 %v1025, 108
        %v2405 = vpop.permute.xlu0 %2404
        %2406 = vrot.lane.b32.xlu0 %v1026, 108
        %v2407 = vpop.permute.xlu0 %2406
        %2408 = vrot.lane.b32.xlu0 %v1027, 108
        %v2409 = vpop.permute.xlu0 %2408
        %2410 = vrot.lane.b32.xlu0 %v1028, 108
        %v2411 = vpop.permute.xlu0 %2410
        %2412 = vrot.lane.b32.xlu0 %v1029, 108
        %v2413 = vpop.permute.xlu0 %2412
        %2414 = vrot.lane.b32.xlu0 %v1030, 108
        %v2415 = vpop.permute.xlu0 %2414
        %2416 = vrot.lane.b32.xlu0 %v1031, 108
        %v2417 = vpop.permute.xlu0 %2416
        %2418 = vrot.lane.b32.xlu0 %v1032, 108
        %v2419 = vpop.permute.xlu0 %2418
        %v2420 = vsel %vm580, %v2397, %v2399
        %v2421 = vsel %vm580, %v2399, %v2401
        %v2422 = vsel %vm580, %v2401, %v579
        %v2423 = vsel %vm580, %v2403, %v2405
        %v2424 = vsel %vm580, %v2405, %v2407
        %v2425 = vsel %vm580, %v2407, %v579
        %v2426 = vsel %vm580, %v2409, %v2411
        %v2427 = vsel %vm580, %v2411, %v2413
        %v2428 = vsel %vm580, %v2413, %v579
        %v2429 = vsel %vm580, %v2415, %v2417
        %v2430 = vsel %vm580, %v2417, %v2419
        %v2431 = vsel %vm580, %v2419, %v579
        %2448 = vrot.lane.b32.xlu0 %v1021, 92
        %v2449 = vpop.permute.xlu0 %2448
        %2450 = vrot.lane.b32.xlu0 %v1022, 92
        %v2451 = vpop.permute.xlu0 %2450
        %2452 = vrot.lane.b32.xlu0 %v1023, 92
        %v2453 = vpop.permute.xlu0 %2452
        %2454 = vrot.lane.b32.xlu0 %v1024, 92
        %v2455 = vpop.permute.xlu0 %2454
        %2456 = vrot.lane.b32.xlu0 %v1025, 92
        %v2457 = vpop.permute.xlu0 %2456
        %2458 = vrot.lane.b32.xlu0 %v1026, 92
        %v2459 = vpop.permute.xlu0 %2458
        %2460 = vrot.lane.b32.xlu0 %v1027, 92
        %v2461 = vpop.permute.xlu0 %2460
        %2462 = vrot.lane.b32.xlu0 %v1028, 92
        %v2463 = vpop.permute.xlu0 %2462
        %2464 = vrot.lane.b32.xlu0 %v1029, 92
        %v2465 = vpop.permute.xlu0 %2464
        %2466 = vrot.lane.b32.xlu0 %v1030, 92
        %v2467 = vpop.permute.xlu0 %2466
        %2468 = vrot.lane.b32.xlu0 %v1031, 92
        %v2469 = vpop.permute.xlu0 %2468
        %2470 = vrot.lane.b32.xlu0 %v1032, 92
        %v2471 = vpop.permute.xlu0 %2470
        %v2472 = vsel %vm596, %v2449, %v2451
        %v2473 = vsel %vm596, %v2451, %v2453
        %v2474 = vsel %vm596, %v2453, %v595
        %v2475 = vsel %vm596, %v2455, %v2457
        %v2476 = vsel %vm596, %v2457, %v2459
        %v2477 = vsel %vm596, %v2459, %v595
        %v2478 = vsel %vm596, %v2461, %v2463
        %v2479 = vsel %vm596, %v2463, %v2465
        %v2480 = vsel %vm596, %v2465, %v595
        %v2481 = vsel %vm596, %v2467, %v2469
        %v2482 = vsel %vm596, %v2469, %v2471
        %v2483 = vsel %vm596, %v2471, %v595
        %2500 = vrot.lane.b32.xlu0 %v1021, 91
        %v2501 = vpop.permute.xlu0 %2500
        %2502 = vrot.lane.b32.xlu0 %v1022, 91
        %v2503 = vpop.permute.xlu0 %2502
        %2504 = vrot.lane.b32.xlu0 %v1023, 91
        %v2505 = vpop.permute.xlu0 %2504
        %2506 = vrot.lane.b32.xlu0 %v1024, 91
        %v2507 = vpop.permute.xlu0 %2506
        %2508 = vrot.lane.b32.xlu0 %v1025, 91
        %v2509 = vpop.permute.xlu0 %2508
        %2510 = vrot.lane.b32.xlu0 %v1026, 91
        %v2511 = vpop.permute.xlu0 %2510
        %2512 = vrot.lane.b32.xlu0 %v1027, 91
        %v2513 = vpop.permute.xlu0 %2512
        %2514 = vrot.lane.b32.xlu0 %v1028, 91
        %v2515 = vpop.permute.xlu0 %2514
        %2516 = vrot.lane.b32.xlu0 %v1029, 91
        %v2517 = vpop.permute.xlu0 %2516
        %2518 = vrot.lane.b32.xlu0 %v1030, 91
        %v2519 = vpop.permute.xlu0 %2518
        %2520 = vrot.lane.b32.xlu0 %v1031, 91
        %v2521 = vpop.permute.xlu0 %2520
        %2522 = vrot.lane.b32.xlu0 %v1032, 91
        %v2523 = vpop.permute.xlu0 %2522
        %v2524 = vsel %vm612, %v2501, %v2503
        %v2525 = vsel %vm612, %v2503, %v2505
        %v2526 = vsel %vm612, %v2505, %v611
        %v2527 = vsel %vm612, %v2507, %v2509
        %v2528 = vsel %vm612, %v2509, %v2511
        %v2529 = vsel %vm612, %v2511, %v611
        %v2530 = vsel %vm612, %v2513, %v2515
        %v2531 = vsel %vm612, %v2515, %v2517
        %v2532 = vsel %vm612, %v2517, %v611
        %v2533 = vsel %vm612, %v2519, %v2521
        %v2534 = vsel %vm612, %v2521, %v2523
        %v2535 = vsel %vm612, %v2523, %v611
        %2552 = vrot.lane.b32.xlu0 %v1021, 90
        %v2553 = vpop.permute.xlu0 %2552
        %2554 = vrot.lane.b32.xlu0 %v1022, 90
        %v2555 = vpop.permute.xlu0 %2554
        %2556 = vrot.lane.b32.xlu0 %v1023, 90
        %v2557 = vpop.permute.xlu0 %2556
        %2558 = vrot.lane.b32.xlu0 %v1024, 90
        %v2559 = vpop.permute.xlu0 %2558
        %2560 = vrot.lane.b32.xlu0 %v1025, 90
        %v2561 = vpop.permute.xlu0 %2560
        %2562 = vrot.lane.b32.xlu0 %v1026, 90
        %v2563 = vpop.permute.xlu0 %2562
        %2564 = vrot.lane.b32.xlu0 %v1027, 90
        %v2565 = vpop.permute.xlu0 %2564
        %2566 = vrot.lane.b32.xlu0 %v1028, 90
        %v2567 = vpop.permute.xlu0 %2566
        %2568 = vrot.lane.b32.xlu0 %v1029, 90
        %v2569 = vpop.permute.xlu0 %2568
        %2570 = vrot.lane.b32.xlu0 %v1030, 90
        %v2571 = vpop.permute.xlu0 %2570
        %2572 = vrot.lane.b32.xlu0 %v1031, 90
        %v2573 = vpop.permute.xlu0 %2572
        %2574 = vrot.lane.b32.xlu0 %v1032, 90
        %v2575 = vpop.permute.xlu0 %2574
        %v2576 = vsel %vm628, %v2553, %v2555
        %v2577 = vsel %vm628, %v2555, %v2557
        %v2578 = vsel %vm628, %v2557, %v627
        %v2579 = vsel %vm628, %v2559, %v2561
        %v2580 = vsel %vm628, %v2561, %v2563
        %v2581 = vsel %vm628, %v2563, %v627
        %v2582 = vsel %vm628, %v2565, %v2567
        %v2583 = vsel %vm628, %v2567, %v2569
        %v2584 = vsel %vm628, %v2569, %v627
        %v2585 = vsel %vm628, %v2571, %v2573
        %v2586 = vsel %vm628, %v2573, %v2575
        %v2587 = vsel %vm628, %v2575, %v627
        %v2604 = vpack.c.bf16 %v1024, %v1021
        %v2605 = vpack.c.bf16 %v1025, %v1022
        %v2606 = vpack.c.bf16 %v1026, %v1023
        %v2607 = vpack.c.bf16 %v1030, %v1027
        %v2608 = vpack.c.bf16 %v1031, %v1028
        %v2609 = vpack.c.bf16 %v1032, %v1029
        %v2610 = vpack.c.bf16 %v2219, %v2216
        %v2611 = vpack.c.bf16 %v2220, %v2217
        %v2612 = vpack.c.bf16 %v2221, %v2218
        %v2613 = vpack.c.bf16 %v2203, %v2197
        %v2614 = vpack.c.bf16 %v2225, %v2222
        %v2615 = vpack.c.bf16 %v2226, %v2223
        %v2616 = vpack.c.bf16 %v2227, %v2224
        %v2617 = vpack.c.bf16 %v2215, %v2209
        %v2618 = vpack.c.bf16 %v2271, %v2268
        %v2619 = vpack.c.bf16 %v2272, %v2269
        %v2620 = vpack.c.bf16 %v2273, %v2270
        %v2621 = vpack.c.bf16 %v2255, %v2249
        %v2622 = vpack.c.bf16 %v2277, %v2274
        %v2623 = vpack.c.bf16 %v2278, %v2275
        %v2624 = vpack.c.bf16 %v2279, %v2276
        %v2625 = vpack.c.bf16 %v2267, %v2261
        %v2626 = vpack.c.bf16 %v2323, %v2320
        %v2627 = vpack.c.bf16 %v2324, %v2321
        %v2628 = vpack.c.bf16 %v2325, %v2322
        %v2629 = vpack.c.bf16 %v2307, %v2301
        %v2630 = vpack.c.bf16 %v2329, %v2326
        %v2631 = vpack.c.bf16 %v2330, %v2327
        %v2632 = vpack.c.bf16 %v2331, %v2328
        %v2633 = vpack.c.bf16 %v2319, %v2313
        %v2634 = vpack.c.bf16 %v2355, %v2349
        %v2635 = vpack.c.bf16 %v2374, %v2372
        %v2636 = vpack.c.bf16 %v2375, %v2373
        %v2637 = vpack.c.bf16 %v2359, %v2353
        %v2638 = vpack.c.bf16 %v2367, %v2361
        %v2639 = vpack.c.bf16 %v2378, %v2376
        %v2640 = vpack.c.bf16 %v2379, %v2377
        %v2641 = vpack.c.bf16 %v2371, %v2365
        %v2642 = vpack.c.bf16 %v2403, %v2397
        %v2643 = vpack.c.bf16 %v2423, %v2420
        %v2644 = vpack.c.bf16 %v2424, %v2421
        %v2645 = vpack.c.bf16 %v2425, %v2422
        %v2646 = vpack.c.bf16 %v2415, %v2409
        %v2647 = vpack.c.bf16 %v2429, %v2426
        %v2648 = vpack.c.bf16 %v2430, %v2427
        %v2649 = vpack.c.bf16 %v2431, %v2428
        %v2650 = vpack.c.bf16 %v2455, %v2449
        %v2651 = vpack.c.bf16 %v2475, %v2472
        %v2652 = vpack.c.bf16 %v2476, %v2473
        %v2653 = vpack.c.bf16 %v2477, %v2474
        %v2654 = vpack.c.bf16 %v2467, %v2461
        %v2655 = vpack.c.bf16 %v2481, %v2478
        %v2656 = vpack.c.bf16 %v2482, %v2479
        %v2657 = vpack.c.bf16 %v2483, %v2480
        %v2658 = vpack.c.bf16 %v2507, %v2501
        %v2659 = vpack.c.bf16 %v2527, %v2524
        %v2660 = vpack.c.bf16 %v2528, %v2525
        %v2661 = vpack.c.bf16 %v2529, %v2526
        %v2662 = vpack.c.bf16 %v2519, %v2513
        %v2663 = vpack.c.bf16 %v2533, %v2530
        %v2664 = vpack.c.bf16 %v2534, %v2531
        %v2665 = vpack.c.bf16 %v2535, %v2532
        %v2666 = vpack.c.bf16 %v2559, %v2553
        %v2667 = vpack.c.bf16 %v2579, %v2576
        %v2668 = vpack.c.bf16 %v2580, %v2577
        %v2669 = vpack.c.bf16 %v2581, %v2578
        %v2670 = vpack.c.bf16 %v2571, %v2565
        %v2671 = vpack.c.bf16 %v2585, %v2582
        %v2672 = vpack.c.bf16 %v2586, %v2583
        %v2673 = vpack.c.bf16 %v2587, %v2584
        %v2674 = vld [vmem:[%s5] sm:$0xff]
        %v2675 = vld [vmem:[%s5 + $0x8] sm:$0xf]
        %v2676 = vld [vmem:[%s5 + $0xc] sm:$0xff]
        %v2677 = vld [vmem:[%s5 + $0x14] sm:$0xf]
        %v2678 = vld [vmem:[%s6] sm:$0xff]
        %v2679 = vld [vmem:[%s6 + $0x8] sm:$0xff]
        %2681 = vset.pattern.permute.xlu0 0
        %2682 = vperm.xlu0 %2681, %v2678
        %v2683 = vpop.permute.xlu0 %2682
        %2686 = vset.pattern.permute.xlu0 0
        %2687 = vperm.xlu0 %2686, %v2679
        %v2688 = vpop.permute.xlu0 %2687
        %v2694 = vunpack.c.l.b16 %v2674
        %v2695 = vunpack.c.h.b16 %v2674
        %v2696 = vunpack.c.l.b16 %v2675
        %v2697 = vunpack.c.l.b16 %v2676
        %v2698 = vunpack.c.h.b16 %v2676
        %v2699 = vunpack.c.l.b16 %v2677
        %v2700 = vpack.c.b16 %v2697, %v2694
        %v2701 = vpack.c.b16 %v2698, %v2695
        %v2702 = vpack.c.b16 %v2699, %v2696
        %2775 = vrot.lane.b32.xlu0 %v2604, 19
        %v2776 = vpop.permute.xlu0 %2775
        %2777 = vrot.lane.b32.xlu0 %v2605, 19
        %v2778 = vpop.permute.xlu0 %2777
        %2779 = vrot.lane.b32.xlu0 %v2606, 19
        %v2780 = vpop.permute.xlu0 %2779
        %2781 = vrot.lane.b32.xlu0 %v2607, 19
        %v2782 = vpop.permute.xlu0 %2781
        %2783 = vrot.lane.b32.xlu0 %v2608, 19
        %v2784 = vpop.permute.xlu0 %2783
        %2785 = vrot.lane.b32.xlu0 %v2609, 19
        %v2786 = vpop.permute.xlu0 %2785
        %2787 = vrot.lane.b32.xlu0 %v2610, 19
        %v2788 = vpop.permute.xlu0 %2787
        %2789 = vrot.lane.b32.xlu0 %v2611, 19
        %v2790 = vpop.permute.xlu0 %2789
        %2791 = vrot.lane.b32.xlu0 %v2612, 19
        %v2792 = vpop.permute.xlu0 %2791
        %2793 = vrot.lane.b32.xlu0 %v2613, 19
        %v2794 = vpop.permute.xlu0 %2793
        %2795 = vrot.lane.b32.xlu0 %v2614, 19
        %v2796 = vpop.permute.xlu0 %2795
        %2797 = vrot.lane.b32.xlu0 %v2615, 19
        %v2798 = vpop.permute.xlu0 %2797
        %2799 = vrot.lane.b32.xlu0 %v2616, 19
        %v2800 = vpop.permute.xlu0 %2799
        %2801 = vrot.lane.b32.xlu0 %v2617, 19
        %v2802 = vpop.permute.xlu0 %2801
        %2803 = vrot.lane.b32.xlu0 %v2618, 19
        %v2804 = vpop.permute.xlu0 %2803
        %2805 = vrot.lane.b32.xlu0 %v2619, 19
        %v2806 = vpop.permute.xlu0 %2805
        %2807 = vrot.lane.b32.xlu0 %v2620, 19
        %v2808 = vpop.permute.xlu0 %2807
        %2809 = vrot.lane.b32.xlu0 %v2621, 19
        %v2810 = vpop.permute.xlu0 %2809
        %2811 = vrot.lane.b32.xlu0 %v2622, 19
        %v2812 = vpop.permute.xlu0 %2811
        %2813 = vrot.lane.b32.xlu0 %v2623, 19
        %v2814 = vpop.permute.xlu0 %2813
        %2815 = vrot.lane.b32.xlu0 %v2624, 19
        %v2816 = vpop.permute.xlu0 %2815
        %2817 = vrot.lane.b32.xlu0 %v2625, 19
        %v2818 = vpop.permute.xlu0 %2817
        %2819 = vrot.lane.b32.xlu0 %v2626, 19
        %v2820 = vpop.permute.xlu0 %2819
        %2821 = vrot.lane.b32.xlu0 %v2627, 19
        %v2822 = vpop.permute.xlu0 %2821
        %2823 = vrot.lane.b32.xlu0 %v2628, 19
        %v2824 = vpop.permute.xlu0 %2823
        %2825 = vrot.lane.b32.xlu0 %v2629, 19
        %v2826 = vpop.permute.xlu0 %2825
        %2827 = vrot.lane.b32.xlu0 %v2630, 19
        %v2828 = vpop.permute.xlu0 %2827
        %2829 = vrot.lane.b32.xlu0 %v2631, 19
        %v2830 = vpop.permute.xlu0 %2829
        %2831 = vrot.lane.b32.xlu0 %v2632, 19
        %v2832 = vpop.permute.xlu0 %2831
        %2833 = vrot.lane.b32.xlu0 %v2633, 19
        %v2834 = vpop.permute.xlu0 %2833
        %2835 = vrot.lane.b32.xlu0 %v2634, 19
        %v2836 = vpop.permute.xlu0 %2835
        %2837 = vrot.lane.b32.xlu0 %v2635, 19
        %v2838 = vpop.permute.xlu0 %2837
        %2839 = vrot.lane.b32.xlu0 %v2636, 19
        %v2840 = vpop.permute.xlu0 %2839
        %2841 = vrot.lane.b32.xlu0 %v2637, 19
        %v2842 = vpop.permute.xlu0 %2841
        %2843 = vrot.lane.b32.xlu0 %v2638, 19
        %v2844 = vpop.permute.xlu0 %2843
        %2845 = vrot.lane.b32.xlu0 %v2639, 19
        %v2846 = vpop.permute.xlu0 %2845
        %2847 = vrot.lane.b32.xlu0 %v2640, 19
        %v2848 = vpop.permute.xlu0 %2847
        %2849 = vrot.lane.b32.xlu0 %v2641, 19
        %v2850 = vpop.permute.xlu0 %2849
        %2851 = vrot.lane.b32.xlu0 %v2642, 19
        %v2852 = vpop.permute.xlu0 %2851
        %2853 = vrot.lane.b32.xlu0 %v2643, 19
        %v2854 = vpop.permute.xlu0 %2853
        %2855 = vrot.lane.b32.xlu0 %v2644, 19
        %v2856 = vpop.permute.xlu0 %2855
        %2857 = vrot.lane.b32.xlu0 %v2645, 19
        %v2858 = vpop.permute.xlu0 %2857
        %2859 = vrot.lane.b32.xlu0 %v2646, 19
        %v2860 = vpop.permute.xlu0 %2859
        %2861 = vrot.lane.b32.xlu0 %v2647, 19
        %v2862 = vpop.permute.xlu0 %2861
        %2863 = vrot.lane.b32.xlu0 %v2648, 19
        %v2864 = vpop.permute.xlu0 %2863
        %2865 = vrot.lane.b32.xlu0 %v2649, 19
        %v2866 = vpop.permute.xlu0 %2865
        %2867 = vrot.lane.b32.xlu0 %v2650, 19
        %v2868 = vpop.permute.xlu0 %2867
        %2869 = vrot.lane.b32.xlu0 %v2651, 19
        %v2870 = vpop.permute.xlu0 %2869
        %2871 = vrot.lane.b32.xlu0 %v2652, 19
        %v2872 = vpop.permute.xlu0 %2871
        %2873 = vrot.lane.b32.xlu0 %v2653, 19
        %v2874 = vpop.permute.xlu0 %2873
        %2875 = vrot.lane.b32.xlu0 %v2654, 19
        %v2876 = vpop.permute.xlu0 %2875
        %2877 = vrot.lane.b32.xlu0 %v2655, 19
        %v2878 = vpop.permute.xlu0 %2877
        %2879 = vrot.lane.b32.xlu0 %v2656, 19
        %v2880 = vpop.permute.xlu0 %2879
        %2881 = vrot.lane.b32.xlu0 %v2657, 19
        %v2882 = vpop.permute.xlu0 %2881
        %2883 = vrot.lane.b32.xlu0 %v2658, 19
        %v2884 = vpop.permute.xlu0 %2883
        %2885 = vrot.lane.b32.xlu0 %v2659, 19
        %v2886 = vpop.permute.xlu0 %2885
        %2887 = vrot.lane.b32.xlu0 %v2660, 19
        %v2888 = vpop.permute.xlu0 %2887
        %2889 = vrot.lane.b32.xlu0 %v2661, 19
        %v2890 = vpop.permute.xlu0 %2889
        %2891 = vrot.lane.b32.xlu0 %v2662, 19
        %v2892 = vpop.permute.xlu0 %2891
        %2893 = vrot.lane.b32.xlu0 %v2663, 19
        %v2894 = vpop.permute.xlu0 %2893
        %2895 = vrot.lane.b32.xlu0 %v2664, 19
        %v2896 = vpop.permute.xlu0 %2895
        %2897 = vrot.lane.b32.xlu0 %v2665, 19
        %v2898 = vpop.permute.xlu0 %2897
        %2899 = vrot.lane.b32.xlu0 %v2666, 19
        %v2900 = vpop.permute.xlu0 %2899
        %2901 = vrot.lane.b32.xlu0 %v2667, 19
        %v2902 = vpop.permute.xlu0 %2901
        %2903 = vrot.lane.b32.xlu0 %v2668, 19
        %v2904 = vpop.permute.xlu0 %2903
        %2905 = vrot.lane.b32.xlu0 %v2669, 19
        %v2906 = vpop.permute.xlu0 %2905
        %2907 = vrot.lane.b32.xlu0 %v2670, 19
        %v2908 = vpop.permute.xlu0 %2907
        %2909 = vrot.lane.b32.xlu0 %v2671, 19
        %v2910 = vpop.permute.xlu0 %2909
        %2911 = vrot.lane.b32.xlu0 %v2672, 19
        %v2912 = vpop.permute.xlu0 %2911
        %2913 = vrot.lane.b32.xlu0 %v2673, 19
        %v2914 = vpop.permute.xlu0 %2913
        %v2915 = vsel %vm792, %v1643, %v2776
        %v2916 = vsel %vm792, %v2776, %v2778
        %v2917 = vsel %vm792, %v2778, %v2780
        %v2918 = vsel %vm792, %v1643, %v2782
        %v2919 = vsel %vm792, %v2782, %v2784
        %v2920 = vsel %vm792, %v2784, %v2786
        %v2921 = vsel %vm792, %v2788, %v2790
        %v2922 = vsel %vm792, %v2790, %v2792
        %v2923 = vsel %vm792, %v2792, %v2794
        %v2924 = vsel %vm792, %v2796, %v2798
        %v2925 = vsel %vm792, %v2798, %v2800
        %v2926 = vsel %vm792, %v2800, %v2802
        %v2927 = vsel %vm792, %v2804, %v2806
        %v2928 = vsel %vm792, %v2806, %v2808
        %v2929 = vsel %vm792, %v2808, %v2810
        %v2930 = vsel %vm792, %v2812, %v2814
        %v2931 = vsel %vm792, %v2814, %v2816
        %v2932 = vsel %vm792, %v2816, %v2818
        %v2933 = vsel %vm792, %v2820, %v2822
        %v2934 = vsel %vm792, %v2822, %v2824
        %v2935 = vsel %vm792, %v2824, %v2826
        %v2936 = vsel %vm792, %v2828, %v2830
        %v2937 = vsel %vm792, %v2830, %v2832
        %v2938 = vsel %vm792, %v2832, %v2834
        %v2939 = vsel %vm792, %v2836, %v2838
        %v2940 = vsel %vm792, %v2838, %v2840
        %v2941 = vsel %vm792, %v2840, %v2842
        %v2942 = vsel %vm792, %v2844, %v2846
        %v2943 = vsel %vm792, %v2846, %v2848
        %v2944 = vsel %vm792, %v2848, %v2850
        %v2945 = vsel %vm792, %v2852, %v2854
        %v2946 = vsel %vm792, %v2854, %v2856
        %v2947 = vsel %vm792, %v2856, %v2858
        %v2948 = vsel %vm792, %v2860, %v2862
        %v2949 = vsel %vm792, %v2862, %v2864
        %v2950 = vsel %vm792, %v2864, %v2866
        %v2951 = vsel %vm792, %v2868, %v2870
        %v2952 = vsel %vm792, %v2870, %v2872
        %v2953 = vsel %vm792, %v2872, %v2874
        %v2954 = vsel %vm792, %v2876, %v2878
        %v2955 = vsel %vm792, %v2878, %v2880
        %v2956 = vsel %vm792, %v2880, %v2882
        %v2957 = vsel %vm792, %v2884, %v2886
        %v2958 = vsel %vm792, %v2886, %v2888
        %v2959 = vsel %vm792, %v2888, %v2890
        %v2960 = vsel %vm792, %v2892, %v2894
        %v2961 = vsel %vm792, %v2894, %v2896
        %v2962 = vsel %vm792, %v2896, %v2898
        %v2963 = vsel %vm792, %v2900, %v2902
        %v2964 = vsel %vm792, %v2902, %v2904
        %v2965 = vsel %vm792, %v2904, %v2906
        %v2966 = vsel %vm792, %v2908, %v2910
        %v2967 = vsel %vm792, %v2910, %v2912
        %v2968 = vsel %vm792, %v2912, %v2914
        %v3024 = vsel %vm1892, %v2702, 0
        %3026 = vmatprep.subr.bf16.mxu0 %v2916
        %3027 = vmatpush1.bf16.msra.mxu0 %v2915
        %3028 = vmatprep.subr.bf16.mxu0 %v2919
        %3029 = vmatpush1.bf16.msra.mxu0 %v2918
        %3030 = vmatprep.subr.bf16.mxu0 %v2922
        %3031 = vmatpush1.bf16.msra.mxu0 %v2921
        %3032 = vmatprep.subr.bf16.mxu0 %v2925
        %3033 = vmatpush1.bf16.msra.mxu0 %v2924
        %3034 = vmatprep.subr.bf16.mxu0 %v2928
        %3035 = vmatpush1.bf16.msra.mxu0 %v2927
        %3036 = vmatprep.subr.bf16.mxu0 %v2931
        %3037 = vmatpush1.bf16.msra.mxu0 %v2930
        %3038 = vmatprep.subr.bf16.mxu0 %v2934
        %3039 = vmatpush1.bf16.msra.mxu0 %v2933
        %3040 = vmatprep.subr.bf16.mxu0 %v2937
        %3041 = vmatpush1.bf16.msra.mxu0 %v2936
        %3042 = vmatprep.subr.bf16.mxu0 %v2940
        %3043 = vmatpush1.bf16.msra.mxu0 %v2939
        %3044 = vmatprep.subr.bf16.mxu0 %v2943
        %3045 = vmatpush1.bf16.msra.mxu0 %v2942
        %3046 = vmatprep.subr.bf16.mxu0 %v2946
        %3047 = vmatpush1.bf16.msra.mxu0 %v2945
        %3048 = vmatprep.subr.bf16.mxu0 %v2949
        %3049 = vmatpush1.bf16.msra.mxu0 %v2948
        %3050 = vmatprep.subr.bf16.mxu0 %v2952
        %3051 = vmatpush1.bf16.msra.mxu0 %v2951
        %3052 = vmatprep.subr.bf16.mxu0 %v2955
        %3053 = vmatpush1.bf16.msra.mxu0 %v2954
        %3054 = vmatprep.subr.bf16.mxu0 %v2958
        %3055 = vmatpush1.bf16.msra.mxu0 %v2957
        %3056 = vmatprep.subr.bf16.mxu0 %v2961
        %3057 = vmatpush1.bf16.msra.mxu0 %v2960
        %3058 = vmatprep.mubr.bf16.mxu0 %v2701
        %3059 = vmatmul.mubr.bf16.gmra.mrb[0].mxu0 %v2700
        %v3060 = vpop.f32.mrb[0].mxu0
        %v3061 = vadd.f32 %v2683, %v3060
        %v3062 = vpop.f32.mrb[0].mxu0
        %v3063 = vadd.f32 %v2683, %v3062
        %v3064 = vpop.f32.mrb[0].mxu0
        %v3065 = vadd.f32 %v2688, %v3064
        %v3066 = vpop.f32.mrb[0].mxu0
        %v3067 = vadd.f32 %v2688, %v3066
        %3068 = vdwg.mxu0
        %3069 = vmatprep.subr.bf16.mxu0 %v2964
        %3070 = vmatpush1.bf16.msra.mxu0 %v2963
        %3071 = vmatprep.subr.bf16.mxu0 %v2967
        %3072 = vmatpush1.bf16.msra.mxu0 %v2966
        %3073 = vmatprep.subr.bf16.mxu0 0
        %3074 = vmatpush1.bf16.msra.mxu0 0
        %3075 = vmatprep.subr.bf16.mxu0 0
        %3076 = vmatpush1.bf16.msra.mxu0 0
        %3077 = vmatprep.subr.bf16.mxu0 0
        %3078 = vmatpush1.bf16.msra.mxu0 0
        %3079 = vmatprep.subr.bf16.mxu0 0
        %3080 = vmatpush1.bf16.msra.mxu0 0
        %3081 = vmatprep.subr.bf16.mxu0 0
        %3082 = vmatpush1.bf16.msra.mxu0 0
        %3083 = vmatprep.subr.bf16.mxu0 0
        %3084 = vmatpush1.bf16.msra.mxu0 0
        %3085 = vmatprep.subr.bf16.mxu0 0
        %3086 = vmatpush1.bf16.msra.mxu0 0
        %3087 = vmatprep.subr.bf16.mxu0 0
        %3088 = vmatpush1.bf16.msra.mxu0 0
        %3089 = vmatprep.subr.bf16.mxu0 0
        %3090 = vmatpush1.bf16.msra.mxu0 0
        %3091 = vmatprep.subr.bf16.mxu0 0
        %3092 = vmatpush1.bf16.msra.mxu0 0
        %3093 = vmatprep.subr.bf16.mxu0 0
        %3094 = vmatpush1.bf16.msra.mxu0 0
        %3095 = vmatprep.subr.bf16.mxu0 0
        %3096 = vmatpush1.bf16.msra.mxu0 0
        %3097 = vmatprep.subr.bf16.mxu0 0
        %3098 = vmatpush1.bf16.msra.mxu0 0
        %3099 = vmatprep.subr.bf16.mxu0 0
        %3100 = vmatpush1.bf16.msra.mxu0 0
        %3101 = vmatprep.mubr.bf16.mxu0 0
        %3102 = vmatmul.mubr.bf16.gmra.mrb[0].mxu0 %v3024
        %v3103 = vpop.f32.mrb[0].mxu0
        %v3104 = vadd.f32 %v3061, %v3103
        %v3105 = vpop.f32.mrb[0].mxu0
        %v3106 = vadd.f32 %v3063, %v3105
        %v3107 = vpop.f32.mrb[0].mxu0
        %v3108 = vadd.f32 %v3065, %v3107
        %v3109 = vpop.f32.mrb[0].mxu0
        %v3110 = vadd.f32 %v3067, %v3109
        %3111 = vdwg.mxu0
        %3112 = vmatprep.subr.bf16.mxu0 0
        %3113 = vmatpush1.bf16.msra.mxu0 %v2917
        %3114 = vmatprep.subr.bf16.mxu0 0
        %3115 = vmatpush1.bf16.msra.mxu0 %v2920
        %3116 = vmatprep.subr.bf16.mxu0 0
        %3117 = vmatpush1.bf16.msra.mxu0 %v2923
        %3118 = vmatprep.subr.bf16.mxu0 0
        %3119 = vmatpush1.bf16.msra.mxu0 %v2926
        %3120 = vmatprep.subr.bf16.mxu0 0
        %3121 = vmatpush1.bf16.msra.mxu0 %v2929
        %3122 = vmatprep.subr.bf16.mxu0 0
        %3123 = vmatpush1.bf16.msra.mxu0 %v2932
        %3124 = vmatprep.subr.bf16.mxu0 0
        %3125 = vmatpush1.bf16.msra.mxu0 %v2935
        %3126 = vmatprep.subr.bf16.mxu0 0
        %3127 = vmatpush1.bf16.msra.mxu0 %v2938
        %3128 = vmatprep.subr.bf16.mxu0 0
        %3129 = vmatpush1.bf16.msra.mxu0 %v2941
        %3130 = vmatprep.subr.bf16.mxu0 0
        %3131 = vmatpush1.bf16.msra.mxu0 %v2944
        %3132 = vmatprep.subr.bf16.mxu0 0
        %3133 = vmatpush1.bf16.msra.mxu0 %v2947
        %3134 = vmatprep.subr.bf16.mxu0 0
        %3135 = vmatpush1.bf16.msra.mxu0 %v2950
        %3136 = vmatprep.subr.bf16.mxu0 0
        %3137 = vmatpush1.bf16.msra.mxu0 %v2953
        %3138 = vmatprep.subr.bf16.mxu0 0
        %3139 = vmatpush1.bf16.msra.mxu0 %v2956
        %3140 = vmatprep.subr.bf16.mxu0 0
        %3141 = vmatpush1.bf16.msra.mxu0 %v2959
        %3142 = vmatprep.subr.bf16.mxu0 0
        %3143 = vmatpush1.bf16.msra.mxu0 %v2962
        %3144 = vmatprep.mubr.bf16.mxu0 %v2701
        %3145 = vmatmul.mubr.bf16.gmra.mrb[0].mxu0 %v2700
        %v3146 = vpop.f32.mrb[0].mxu0
        %v3147 = vadd.f32 %v2683, %v3146
        %v3148 = vpop.f32.mrb[0].mxu0
        %v3149 = vpop.f32.mrb[0].mxu0
        %v3150 = vadd.f32 %v2688, %v3149
        %v3151 = vpop.f32.mrb[0].mxu0
        %3152 = vdwg.mxu0
        %3153 = vmatprep.subr.bf16.mxu0 0
        %3154 = vmatpush1.bf16.msra.mxu0 %v2965
        %3155 = vmatprep.subr.bf16.mxu0 0
        %3156 = vmatpush1.bf16.msra.mxu0 %v2968
        %3157 = vmatprep.subr.bf16.mxu0 0
        %3158 = vmatpush1.bf16.msra.mxu0 0
        %3159 = vmatprep.subr.bf16.mxu0 0
        %3160 = vmatpush1.bf16.msra.mxu0 0
        %3161 = vmatprep.subr.bf16.mxu0 0
        %3162 = vmatpush1.bf16.msra.mxu0 0
        %3163 = vmatprep.subr.bf16.mxu0 0
        %3164 = vmatpush1.bf16.msra.mxu0 0
        %3165 = vmatprep.subr.bf16.mxu0 0
        %3166 = vmatpush1.bf16.msra.mxu0 0
        %3167 = vmatprep.subr.bf16.mxu0 0
        %3168 = vmatpush1.bf16.msra.mxu0 0
        %3169 = vmatprep.subr.bf16.mxu0 0
        %3170 = vmatpush1.bf16.msra.mxu0 0
        %3171 = vmatprep.subr.bf16.mxu0 0
        %3172 = vmatpush1.bf16.msra.mxu0 0
        %3173 = vmatprep.subr.bf16.mxu0 0
        %3174 = vmatpush1.bf16.msra.mxu0 0
        %3175 = vmatprep.subr.bf16.mxu0 0
        %3176 = vmatpush1.bf16.msra.mxu0 0
        %3177 = vmatprep.subr.bf16.mxu0 0
        %3178 = vmatpush1.bf16.msra.mxu0 0
        %3179 = vmatprep.subr.bf16.mxu0 0
        %3180 = vmatpush1.bf16.msra.mxu0 0
        %3181 = vmatprep.subr.bf16.mxu0 0
        %3182 = vmatpush1.bf16.msra.mxu0 0
        %3183 = vmatprep.subr.bf16.mxu0 0
        %3184 = vmatpush1.bf16.msra.mxu0 0
        %3185 = vmatprep.mubr.bf16.mxu0 0
        %3186 = vmatmul.mubr.bf16.gmra.mrb[0].mxu0 %v3024
        %v3187 = vpop.f32.mrb[0].mxu0
        %v3188 = vadd.f32 %v3147, %v3187
        %v3189 = vpop.f32.mrb[0].mxu0
        %v3190 = vpop.f32.mrb[0].mxu0
        %v3191 = vadd.f32 %v3150, %v3190
        %v3192 = vpop.f32.mrb[0].mxu0
        %3193 = vdwg.mxu0
        %v3194 = vadd.f32 %v3104, 1.0
        %v3195 = vadd.f32 %v3106, 1.0
        %v3196 = vadd.f32 %v3188, 1.0
        %v3197 = vmul.f32 %v504, %v3194
        %v3198 = vmul.f32 %v505, %v3195
        %v3199 = vmul.f32 %v506, %v3196
        %v3200 = vadd.f32 %v3197, %v3108
        %v3201 = vadd.f32 %v3198, %v3110
        %v3202 = vadd.f32 %v3199, %v3191
        %vm3203 = vcmp.ge.f32.partialorder %v3200, 0.0
        %vm3204 = vcmp.ge.f32.partialorder %v3201, 0.0
        %vm3205 = vcmp.ge.f32.partialorder %v3202, 0.0
        %v3206 = vmul.f32 %v3200, 0.2
        %v3207 = vmul.f32 %v3201, 0.2
        %v3208 = vmul.f32 %v3202, 0.2
        %v3209 = vsel %vm3203, %v3200, %v3206
        %v3210 = vsel %vm3204, %v3201, %v3207
        %v3211 = vsel %vm3205, %v3202, %v3208
        %v3212 = vmul.f32 %v3209, %v1009
        %v3213 = vmul.f32 %v3210, %v1013
        %v3214 = vmul.f32 %v3211, %v1017
        %v3215 = vld [vmem:[%s463] sm:$0xff]
        %v3216 = vld [vmem:[%s463 + $0x8] sm:$0xf]
        %3220 = vrot.lane.b32.xlu0 %v3212, 127
        %v3221 = vpop.permute.xlu0 %3220
        %3222 = vrot.lane.b32.xlu0 %v3213, 127
        %v3223 = vpop.permute.xlu0 %3222
        %3224 = vrot.lane.b32.xlu0 %v3214, 127
        %v3225 = vpop.permute.xlu0 %3224
        %v3226 = vsel %vm519, %v512, %v3221
        %v3227 = vsel %vm519, %v3221, %v3223
        %v3228 = vsel %vm519, %v3223, %v3225
        %3233 = vrot.lane.b32.xlu0 %v3212, 126
        %v3234 = vpop.permute.xlu0 %3233
        %3235 = vrot.lane.b32.xlu0 %v3213, 126
        %v3236 = vpop.permute.xlu0 %3235
        %3237 = vrot.lane.b32.xlu0 %v3214, 126
        %v3238 = vpop.permute.xlu0 %3237
        %v3239 = vsel %vm535, %v528, %v3234
        %v3240 = vsel %vm535, %v3234, %v3236
        %v3241 = vsel %vm535, %v3236, %v3238
        %3246 = vrot.lane.b32.xlu0 %v3212, 110
        %v3247 = vpop.permute.xlu0 %3246
        %3248 = vrot.lane.b32.xlu0 %v3213, 110
        %v3249 = vpop.permute.xlu0 %3248
        %3250 = vrot.lane.b32.xlu0 %v3214, 110
        %v3251 = vpop.permute.xlu0 %3250
        %v3252 = vsel %vm551, %v544, %v3247
        %v3253 = vsel %vm551, %v3247, %v3249
        %v3254 = vsel %vm551, %v3249, %v3251
        %3259 = vrot.lane.b32.xlu0 %v3212, 109
        %v3260 = vpop.permute.xlu0 %3259
        %3261 = vrot.lane.b32.xlu0 %v3213, 109
        %v3262 = vpop.permute.xlu0 %3261
        %3263 = vrot.lane.b32.xlu0 %v3214, 109
        %v3264 = vpop.permute.xlu0 %3263
        %v3265 = vsel %vm565, %v3260, %v3262
        %v3266 = vsel %vm565, %v3262, %v3264
        %3271 = vrot.lane.b32.xlu0 %v3212, 108
        %v3272 = vpop.permute.xlu0 %3271
        %3273 = vrot.lane.b32.xlu0 %v3213, 108
        %v3274 = vpop.permute.xlu0 %3273
        %3275 = vrot.lane.b32.xlu0 %v3214, 108
        %v3276 = vpop.permute.xlu0 %3275
        %v3277 = vsel %vm580, %v3272, %v3274
        %v3278 = vsel %vm580, %v3274, %v3276
        %v3279 = vsel %vm580, %v3276, %v579
        %3284 = vrot.lane.b32.xlu0 %v3212, 92
        %v3285 = vpop.permute.xlu0 %3284
        %3286 = vrot.lane.b32.xlu0 %v3213, 92
        %v3287 = vpop.permute.xlu0 %3286
        %3288 = vrot.lane.b32.xlu0 %v3214, 92
        %v3289 = vpop.permute.xlu0 %3288
        %v3290 = vsel %vm596, %v3285, %v3287
        %v3291 = vsel %vm596, %v3287, %v3289
        %v3292 = vsel %vm596, %v3289, %v595
        %3297 = vrot.lane.b32.xlu0 %v3212, 91
        %v3298 = vpop.permute.xlu0 %3297
        %3299 = vrot.lane.b32.xlu0 %v3213, 91
        %v3300 = vpop.permute.xlu0 %3299
        %3301 = vrot.lane.b32.xlu0 %v3214, 91
        %v3302 = vpop.permute.xlu0 %3301
        %v3303 = vsel %vm612, %v3298, %v3300
        %v3304 = vsel %vm612, %v3300, %v3302
        %v3305 = vsel %vm612, %v3302, %v611
        %3310 = vrot.lane.b32.xlu0 %v3212, 90
        %v3311 = vpop.permute.xlu0 %3310
        %3312 = vrot.lane.b32.xlu0 %v3213, 90
        %v3313 = vpop.permute.xlu0 %3312
        %3314 = vrot.lane.b32.xlu0 %v3214, 90
        %v3315 = vpop.permute.xlu0 %3314
        %v3316 = vsel %vm628, %v3311, %v3313
        %v3317 = vsel %vm628, %v3313, %v3315
        %v3318 = vsel %vm628, %v3315, %v627
        %v3323 = vpack.c.bf16 %v3226, 0.0
        %v3324 = vpack.c.bf16 %v3227, %v3212
        %v3325 = vpack.c.bf16 %v3228, %v3213
        %v3326 = vpack.c.bf16 %v3225, %v3214
        %v3327 = vpack.c.bf16 %v3252, %v3239
        %v3328 = vpack.c.bf16 %v3253, %v3240
        %v3329 = vpack.c.bf16 %v3254, %v3241
        %v3330 = vpack.c.bf16 %v3251, %v3238
        %v3331 = vpack.c.bf16 %v3272, %v3260
        %v3332 = vpack.c.bf16 %v3277, %v3265
        %v3333 = vpack.c.bf16 %v3278, %v3266
        %v3334 = vpack.c.bf16 %v3279, %v3264
        %v3335 = vpack.c.bf16 %v3298, %v3285
        %v3336 = vpack.c.bf16 %v3303, %v3290
        %v3337 = vpack.c.bf16 %v3304, %v3291
        %v3338 = vpack.c.bf16 %v3305, %v3292
        %v3339 = vpack.c.bf16 %v3311, %v3311
        %v3340 = vpack.c.bf16 %v3316, %v3316
        %v3341 = vpack.c.bf16 %v3317, %v3317
        %v3342 = vpack.c.bf16 %v3318, %v3318
        %v3343 = vld [vmem:[%s9] sm:$0x3]
        %v3344 = vld [vmem:[%s10] sm:$0xf]
        %3346 = vset.pattern.permute.xlu0 0
        %3347 = vperm.xlu0 %3346, %v3344
        %v3348 = vpop.permute.xlu0 %3347
        %3370 = vrot.lane.b32.xlu0 %v3323, 19
        %v3371 = vpop.permute.xlu0 %3370
        %3372 = vrot.lane.b32.xlu0 %v3324, 19
        %v3373 = vpop.permute.xlu0 %3372
        %3374 = vrot.lane.b32.xlu0 %v3325, 19
        %v3375 = vpop.permute.xlu0 %3374
        %3376 = vrot.lane.b32.xlu0 %v3326, 19
        %v3377 = vpop.permute.xlu0 %3376
        %3378 = vrot.lane.b32.xlu0 %v3327, 19
        %v3379 = vpop.permute.xlu0 %3378
        %3380 = vrot.lane.b32.xlu0 %v3328, 19
        %v3381 = vpop.permute.xlu0 %3380
        %3382 = vrot.lane.b32.xlu0 %v3329, 19
        %v3383 = vpop.permute.xlu0 %3382
        %3384 = vrot.lane.b32.xlu0 %v3330, 19
        %v3385 = vpop.permute.xlu0 %3384
        %3386 = vrot.lane.b32.xlu0 %v3331, 19
        %v3387 = vpop.permute.xlu0 %3386
        %3388 = vrot.lane.b32.xlu0 %v3332, 19
        %v3389 = vpop.permute.xlu0 %3388
        %3390 = vrot.lane.b32.xlu0 %v3333, 19
        %v3391 = vpop.permute.xlu0 %3390
        %3392 = vrot.lane.b32.xlu0 %v3334, 19
        %v3393 = vpop.permute.xlu0 %3392
        %3394 = vrot.lane.b32.xlu0 %v3335, 19
        %v3395 = vpop.permute.xlu0 %3394
        %3396 = vrot.lane.b32.xlu0 %v3336, 19
        %v3397 = vpop.permute.xlu0 %3396
        %3398 = vrot.lane.b32.xlu0 %v3337, 19
        %v3399 = vpop.permute.xlu0 %3398
        %3400 = vrot.lane.b32.xlu0 %v3338, 19
        %v3401 = vpop.permute.xlu0 %3400
        %3402 = vrot.lane.b32.xlu0 %v3339, 19
        %v3403 = vpop.permute.xlu0 %3402
        %3404 = vrot.lane.b32.xlu0 %v3340, 19
        %v3405 = vpop.permute.xlu0 %3404
        %3406 = vrot.lane.b32.xlu0 %v3341, 19
        %v3407 = vpop.permute.xlu0 %3406
        %3408 = vrot.lane.b32.xlu0 %v3342, 19
        %v3409 = vpop.permute.xlu0 %3408
        %v3410 = vsel %vm792, %v3371, %v3373
        %v3411 = vsel %vm792, %v3373, %v3375
        %v3412 = vsel %vm792, %v3375, %v3377
        %v3413 = vsel %vm792, %v3379, %v3381
        %v3414 = vsel %vm792, %v3381, %v3383
        %v3415 = vsel %vm792, %v3383, %v3385
        %v3416 = vsel %vm792, %v3387, %v3389
        %v3417 = vsel %vm792, %v3389, %v3391
        %v3418 = vsel %vm792, %v3391, %v3393
        %v3419 = vsel %vm792, %v3395, %v3397
        %v3420 = vsel %vm792, %v3397, %v3399
        %v3421 = vsel %vm792, %v3399, %v3401
        %v3422 = vsel %vm792, %v3403, %v3405
        %v3423 = vsel %vm792, %v3405, %v3407
        %v3424 = vsel %vm792, %v3407, %v3409
        %v3438 = vsel %vm820, %v3343, 0
        %v3441 = vsel %vm833, %v3422, 0
        %v3444 = vsel %vm833, %v3423, 0
        %v3447 = vsel %vm833, %v3424, 0
        %3449 = vmatprep.subr.bf16.mxu0 %v3411
        %3450 = vmatpush1.bf16.msra.mxu0 %v3410
        %3451 = vmatprep.subr.bf16.mxu0 %v3414
        %3452 = vmatpush1.bf16.msra.mxu0 %v3413
        %3453 = vmatprep.subr.bf16.mxu0 %v3417
        %3454 = vmatpush1.bf16.msra.mxu0 %v3416
        %3455 = vmatprep.subr.bf16.mxu0 %v3420
        %3456 = vmatpush1.bf16.msra.mxu0 %v3419
        %3457 = vmatprep.subr.bf16.mxu0 %v3444
        %3458 = vmatpush1.bf16.msra.mxu0 %v3441
        %3459 = vmatprep.subr.bf16.mxu0 0
        %3460 = vmatpush1.bf16.msra.mxu0 0
        %3461 = vmatprep.subr.bf16.mxu0 0
        %3462 = vmatpush1.bf16.msra.mxu0 0
        %3463 = vmatprep.subr.bf16.mxu0 0
        %3464 = vmatpush1.bf16.msra.mxu0 0
        %3465 = vmatprep.subr.bf16.mxu0 0
        %3466 = vmatpush1.bf16.msra.mxu0 0
        %3467 = vmatprep.subr.bf16.mxu0 0
        %3468 = vmatpush1.bf16.msra.mxu0 0
        %3469 = vmatprep.subr.bf16.mxu0 0
        %3470 = vmatpush1.bf16.msra.mxu0 0
        %3471 = vmatprep.subr.bf16.mxu0 0
        %3472 = vmatpush1.bf16.msra.mxu0 0
        %3473 = vmatprep.subr.bf16.mxu0 0
        %3474 = vmatpush1.bf16.msra.mxu0 0
        %3475 = vmatprep.subr.bf16.mxu0 0
        %3476 = vmatpush1.bf16.msra.mxu0 0
        %3477 = vmatprep.subr.bf16.mxu0 0
        %3478 = vmatpush1.bf16.msra.mxu0 0
        %3479 = vmatprep.subr.bf16.mxu0 0
        %3480 = vmatpush1.bf16.msra.mxu0 0
        %3481 = vmatprep.mubr.bf16.mxu0 0
        %3482 = vmatmul.mubr.bf16.gmra.mrb[0].mxu0 %v3438
        %v3483 = vpop.f32.mrb[0].mxu0
        %v3484 = vadd.f32 %v3348, %v3483
        %v3485 = vpop.f32.mrb[0].mxu0
        %v3486 = vadd.f32 %v3348, %v3485
        %v3487 = vpop.f32.mrb[0].mxu0
        %v3488 = vpop.f32.mrb[0].mxu0
        %3489 = vdwg.mxu0
        %3490 = vmatprep.subr.bf16.mxu0 0
        %3491 = vmatpush1.bf16.msra.mxu0 %v3412
        %3492 = vmatprep.subr.bf16.mxu0 0
        %3493 = vmatpush1.bf16.msra.mxu0 %v3415
        %3494 = vmatprep.subr.bf16.mxu0 0
        %3495 = vmatpush1.bf16.msra.mxu0 %v3418
        %3496 = vmatprep.subr.bf16.mxu0 0
        %3497 = vmatpush1.bf16.msra.mxu0 %v3421
        %3498 = vmatprep.subr.bf16.mxu0 0
        %3499 = vmatpush1.bf16.msra.mxu0 %v3447
        %3500 = vmatprep.subr.bf16.mxu0 0
        %3501 = vmatpush1.bf16.msra.mxu0 0
        %3502 = vmatprep.subr.bf16.mxu0 0
        %3503 = vmatpush1.bf16.msra.mxu0 0
        %3504 = vmatprep.subr.bf16.mxu0 0
        %3505 = vmatpush1.bf16.msra.mxu0 0
        %3506 = vmatprep.subr.bf16.mxu0 0
        %3507 = vmatpush1.bf16.msra.mxu0 0
        %3508 = vmatprep.subr.bf16.mxu0 0
        %3509 = vmatpush1.bf16.msra.mxu0 0
        %3510 = vmatprep.subr.bf16.mxu0 0
        %3511 = vmatpush1.bf16.msra.mxu0 0
        %3512 = vmatprep.subr.bf16.mxu0 0
        %3513 = vmatpush1.bf16.msra.mxu0 0
        %3514 = vmatprep.subr.bf16.mxu0 0
        %3515 = vmatpush1.bf16.msra.mxu0 0
        %3516 = vmatprep.subr.bf16.mxu0 0
        %3517 = vmatpush1.bf16.msra.mxu0 0
        %3518 = vmatprep.subr.bf16.mxu0 0
        %3519 = vmatpush1.bf16.msra.mxu0 0
        %3520 = vmatprep.subr.bf16.mxu0 0
        %3521 = vmatpush1.bf16.msra.mxu0 0
        %3522 = vmatprep.mubr.bf16.mxu0 0
        %3523 = vmatmul.mubr.bf16.gmra.mrb[0].mxu0 %v3438
        %v3524 = vpop.f32.mrb[0].mxu0
        %v3525 = vadd.f32 %v3348, %v3524
        %v3526 = vpop.f32.mrb[0].mxu0
        %v3527 = vpop.f32.mrb[0].mxu0
        %v3528 = vpop.f32.mrb[0].mxu0
        %3529 = vdwg.mxu0
        %v3532 = vcombine.low %v3484, %v3486
        %v3534 = vadd.f32 %v3215, %v3532
        %v3535 = vadd.f32 %v3216, %v3525
        %3536 = vst [vmem:[%s463] sm:$0xff] %v3534
        %3537 = vst [vmem:[%s463 + $0x8] sm:$0xf] %v3535
        %s3538 = sand.u32 %s298, 1
        %s3539 = scalar_lea.sflag [#allocation4], %s3538
        %s3540 = sand.u32 %s298, 1
        %s3541 = smul.addr %s3540, 12
        %s3542 = scalar_lea.vmem [#allocation8], %s3541
        // Predicated region
        $region81: #{tpu_custom_call.1} parent=67 // pred_check
          %p3543 = pneg %p308
        $region82: #{tpu_custom_call.1} parent=67 // pred_check_branch
          %3545 = sbr.rel (%p3543) target = $region84
        $region83: #{tpu_custom_call.1} parent=67 // pred_region
          %s3547 = ssub.s32 192, 192
          %3548 = vsyncadd %s3539, %s3547
          %s3549 = smul.addr %s28, 3
          %s3550 = smul.addr %s3549, 64
          %s3551 = scalar_lea.hbm %s12, %s3550
          %s3553 = sshll.u32 %s3542, 4
          %s3554 = int_to_ptr.vmem [resolvable:$true] %s3553
          %3556 = dma.vmem_to_hbm [thread:$0]  %s3554, 192, %s3551, %s3539
        $region84: #{tpu_custom_call.1} parent=67 // pred_fallthru
          _
      $region68: #{tpu_custom_call.1} parent=5 // pred_fallthru
        _
      %p3557 = scmp.le.s32.totalorder 2, %s23
      // Predicated region
      $region85: #{tpu_custom_call.1} parent=5 // pred_check
        %p3558 = pneg %p3557
      $region86: #{tpu_custom_call.1} parent=5 // pred_check_branch
        %3560 = sbr.rel (%p3558) target = $region88
      $region87: #{tpu_custom_call.1} parent=5 // pred_region
        %s3561 = ssub.s32 %s23, 2
        // Predicated region
        $region89: #{tpu_custom_call.1} parent=87 // pred_check
          %p3562 = pneg %p314
        $region90: #{tpu_custom_call.1} parent=87 // pred_check_branch
          %3564 = sbr.rel (%p3562) target = $region92
        $region91: #{tpu_custom_call.1} parent=87 // pred_region
          %s3565 = sand.u32 %s299, 1
          %s3566 = scalar_lea.sflag [#allocation4], %s3565
          %s3567 = sand.u32 %s299, 1
          %s3568 = smul.addr %s3567, 12
          %s3569 = scalar_lea.vmem [#allocation8], %s3568
          %3570 = dma.done %s3566, 192
        $region92: #{tpu_custom_call.1} parent=87 // pred_fallthru
          _
      $region88: #{tpu_custom_call.1} parent=5 // pred_fallthru
        _
    $region6: #{tpu_custom_call.1} parent=1 // loop_footer
      %s27 = sadd.s32 1, %s23
    $region7: #{tpu_custom_call.1} parent=1 // loop_footer_branch
      %22 = sbr.rel target = $region3
    $region8: #{tpu_custom_call.1} parent=1 // loop_exit
      _
    %3571 = vsyncpa [#allocation3], 1
    %s3572 = scalar_lea.sflag [#allocation3], 1
    %3573 = vsyncpa %s3572, 1
    %3574 = vsyncpa [#allocation6], 1
    %3575 = vsyncpa [#allocation4], 1
    %s3576 = scalar_lea.sflag [#allocation4], 1
    %3577 = vsyncpa %s3576, 1

</llo_original>
